<compile_context>
chip_gen: v7x
topology: tpu7x:2x2x1
jax: 0.10.0
libtpu: 0.0.40
codegen_flags: <defaults>
</compile_context>

<pallas_src>
import functools

import jax
import jax.numpy as jnp
from jax.experimental import pallas as pl
from jax.experimental.pallas import tpu as pltpu


_LANE = 128                      # lane width: output channels padded to this
_TILE_P_MAX = 1024               # patch-row tile (multiple of 8 and 16)
_TILE_K_MAX = 2048               # contraction tile (multiple of 128)
_VMEM_LIMIT_BYTES = 64 * 1024 * 1024
_NEG_SLOPE = 0.2
_BN_EPS = 1e-5
_ACT_DTYPE = jnp.bfloat16        # storage dtype of intermediate activations


def _round_up(x, m):
    return (x + m - 1) // m * m


def _leaky_relu(y):
    return jnp.where(y >= 0.0, y, _NEG_SLOPE * y)


def _compiler_params(semantics):
    return pltpu.CompilerParams(dimension_semantics=semantics,
                                vmem_limit_bytes=_VMEM_LIMIT_BYTES)


# ---------------------------------------------------------------------------
# Pallas kernels
# ---------------------------------------------------------------------------

def _mm_bias_lrelu_kernel(p_ref, w_ref, b_ref, o_ref, acc_ref):
    """Tiled matmul (bf16 x bf16 -> f32 acc) + bias + LeakyReLU(0.2)."""
    k = pl.program_id(1)

    @pl.when(k == 0)
    def _():
        acc_ref[...] = jnp.zeros_like(acc_ref)

    acc_ref[...] += jnp.dot(p_ref[...], w_ref[...],
                            preferred_element_type=jnp.float32)

    @pl.when(k == pl.num_programs(1) - 1)
    def _():
        y = acc_ref[...] + b_ref[...]
        o_ref[...] = _leaky_relu(y).astype(o_ref.dtype)


def _mm_stats_kernel(p_ref, w_ref, y_ref, stats_ref, acc_ref):
    """Tiled matmul; emits pre-norm y (bf16) and per-tile channel sum /
    sum-of-squares in f32 (row 0 = sum, row 1 = sum-sq of the 8-row block)."""
    k = pl.program_id(1)

    @pl.when(k == 0)
    def _():
        acc_ref[...] = jnp.zeros_like(acc_ref)

    acc_ref[...] += jnp.dot(p_ref[...], w_ref[...],
                            preferred_element_type=jnp.float32)

    @pl.when(k == pl.num_programs(1) - 1)
    def _():
        y = acc_ref[...]
        y_ref[...] = y.astype(y_ref.dtype)
        s = jnp.sum(y, axis=0, keepdims=True)          # (1, Cp)
        sq = jnp.sum(y * y, axis=0, keepdims=True)     # (1, Cp)
        row = jax.lax.broadcasted_iota(jnp.int32, stats_ref.shape, 0)
        stats_ref[...] = jnp.where(
            row == 0, jnp.broadcast_to(s, stats_ref.shape),
            jnp.where(row == 1, jnp.broadcast_to(sq, stats_ref.shape), 0.0))


def _mm_plain_kernel(p_ref, w_ref, o_ref, acc_ref):
    """Tiled matmul only (final 1-channel projection, no bias / activation)."""
    k = pl.program_id(1)

    @pl.when(k == 0)
    def _():
        acc_ref[...] = jnp.zeros_like(acc_ref)

    acc_ref[...] += jnp.dot(p_ref[...], w_ref[...],
                            preferred_element_type=jnp.float32)

    @pl.when(k == pl.num_programs(1) - 1)
    def _():
        o_ref[...] = acc_ref[...]


def _bn_lrelu_kernel(y_ref, scale_ref, shift_ref, o_ref):
    """Per-channel affine (precomputed BN scale/shift) + LeakyReLU(0.2)."""
    y = y_ref[...].astype(jnp.float32) * scale_ref[...] + shift_ref[...]
    o_ref[...] = _leaky_relu(y).astype(o_ref.dtype)


# ---------------------------------------------------------------------------
# pallas_call wrappers
# ---------------------------------------------------------------------------

def _conv_matmul(patches, wmat, tile_k, mode, bias_row=None):
    """patches: (P, K) bf16 (unpadded rows/cols); wmat: (Kp, Cp) bf16 padded.

    Returns y (Pp, Cp) (bf16 for fused/epilogue layers, f32 for 'plain'),
    plus stats (n_ptiles*8, Cp) f32 when mode == 'stats'.
    """
    P, K = patches.shape
    Kp, Cp = wmat.shape
    assert Kp % tile_k == 0

    tile_p = min(_TILE_P_MAX, _round_up(P, 8))
    Pp = _round_up(P, tile_p)

    patches = jnp.pad(patches, ((0, Pp - P), (0, Kp - K)))
    n_pt = Pp // tile_p
    n_kt = Kp // tile_k
    grid = (n_pt, n_kt)

    p_spec = pl.BlockSpec((tile_p, tile_k), lambda i, k: (i, k))
    w_spec = pl.BlockSpec((tile_k, Cp), lambda i, k: (k, 0))
    row_spec = pl.BlockSpec((1, Cp), lambda i, k: (0, 0))
    y_spec = pl.BlockSpec((tile_p, Cp), lambda i, k: (i, 0))
    scratch = [pltpu.VMEM((tile_p, Cp), jnp.float32)]
    cparams = _compiler_params(("parallel", "arbitrary"))

    if mode == "bias_lrelu":
        return pl.pallas_call(
            _mm_bias_lrelu_kernel,
            out_shape=jax.ShapeDtypeStruct((Pp, Cp), _ACT_DTYPE),
            grid_spec=pltpu.PrefetchScalarGridSpec(
                num_scalar_prefetch=0, grid=grid,
                in_specs=[p_spec, w_spec, row_spec],
                out_specs=y_spec, scratch_shapes=scratch),
            compiler_params=cparams,
        )(patches, wmat, bias_row)

    if mode == "stats":
        stats_spec = pl.BlockSpec((8, Cp), lambda i, k: (i, 0))
        return pl.pallas_call(
            _mm_stats_kernel,
            out_shape=(jax.ShapeDtypeStruct((Pp, Cp), _ACT_DTYPE),
                       jax.ShapeDtypeStruct((n_pt * 8, Cp), jnp.float32)),
            grid_spec=pltpu.PrefetchScalarGridSpec(
                num_scalar_prefetch=0, grid=grid,
                in_specs=[p_spec, w_spec],
                out_specs=(y_spec, stats_spec), scratch_shapes=scratch),
            compiler_params=cparams,
        )(patches, wmat)

    # mode == "plain" (final logits stay f32)
    return pl.pallas_call(
        _mm_plain_kernel,
        out_shape=jax.ShapeDtypeStruct((Pp, Cp), jnp.float32),
        grid_spec=pltpu.PrefetchScalarGridSpec(
            num_scalar_prefetch=0, grid=grid,
            in_specs=[p_spec, w_spec],
            out_specs=y_spec, scratch_shapes=scratch),
        compiler_params=cparams,
    )(patches, wmat)


def _bn_lrelu_apply(y, scale_row, shift_row):
    """Tiled normalize + affine + LeakyReLU over y (Pp, Cp) bf16 -> bf16."""
    Pp, Cp = y.shape
    tile_p = min(_TILE_P_MAX, Pp)
    assert Pp % tile_p == 0
    return pl.pallas_call(
        _bn_lrelu_kernel,
        out_shape=jax.ShapeDtypeStruct((Pp, Cp), _ACT_DTYPE),
        grid_spec=pltpu.PrefetchScalarGridSpec(
            num_scalar_prefetch=0, grid=(Pp // tile_p,),
            in_specs=[pl.BlockSpec((tile_p, Cp), lambda i: (i, 0)),
                      pl.BlockSpec((1, Cp), lambda i: (0, 0)),
                      pl.BlockSpec((1, Cp), lambda i: (0, 0))],
            out_specs=pl.BlockSpec((tile_p, Cp), lambda i: (i, 0))),
        compiler_params=_compiler_params(("parallel",)),
    )(y, scale_row, shift_row)


# ---------------------------------------------------------------------------
# im2col / weight flattening (JAX glue) and layer driver
# ---------------------------------------------------------------------------

def _im2col(x_nhwc, kh, kw, stride, pad):
    """(N, H, W, C) -> (N*Ho*Wo, kh*kw*C) with patch-element order (kh, kw, c)."""
    n, h, w, c = x_nhwc.shape
    xp = jnp.pad(x_nhwc, ((0, 0), (pad, pad), (pad, pad), (0, 0)))
    ho = (h + 2 * pad - kh) // stride + 1
    wo = (w + 2 * pad - kw) // stride + 1
    pieces = []
    for i in range(kh):
        for j in range(kw):
            pieces.append(xp[:, i:i + (ho - 1) * stride + 1:stride,
                              j:j + (wo - 1) * stride + 1:stride, :])
    patches = jnp.stack(pieces, axis=3).reshape(n, ho, wo, kh * kw * c)
    return patches.reshape(n * ho * wo, kh * kw * c), (n, ho, wo)


def _flatten_pad_weight(w_oihw, kp, cp):
    """(Cout, Cin, kh, kw) -> (kp, cp) bf16, matching im2col (kh, kw, cin) order."""
    cout, cin, kh, kw = w_oihw.shape
    wmat = jnp.transpose(w_oihw, (2, 3, 1, 0)).reshape(kh * kw * cin, cout)
    wmat = jnp.pad(wmat, ((0, kp - kh * kw * cin), (0, cp - cout)))
    return wmat.astype(jnp.bfloat16)


def _pad_row(row, cp):
    return jnp.pad(row, ((0, 0), (0, cp - row.shape[1]))).astype(jnp.float32)


def _conv_layer(x_nhwc, cfg, wts):
    w = wts["w"]
    cout, cin, kh, kw = w.shape
    stride, pad = cfg["stride"], cfg["pad"]

    # bf16 MXU operands (halves patch DMA/VMEM bytes); epilogue math stays f32.
    patches, (n, ho, wo) = _im2col(x_nhwc.astype(jnp.bfloat16), kh, kw, stride, pad)
    P, K = patches.shape

    cp = _round_up(cout, _LANE)                 # lane-dense padded output channels
    k128 = _round_up(K, _LANE)
    tile_k = min(_TILE_K_MAX, k128)
    kp = _round_up(k128, tile_k)
    wmat = _flatten_pad_weight(w, kp, cp)

    if cfg["kind"] == "bias_lrelu":
        y = _conv_matmul(patches, wmat, tile_k, "bias_lrelu",
                         bias_row=_pad_row(wts["b"], cp))
    elif cfg["kind"] == "bn_lrelu":
        # Pass 1: matmul + per-tile channel sum / sumsq (padded rows are zero,
        # so they contribute nothing to the statistics).
        y_raw, stats = _conv_matmul(patches, wmat, tile_k, "stats")
        st = stats.reshape(stats.shape[0] // 8, 8, cp)
        sums = jnp.sum(st[:, 0, :], axis=0)
        sumsq = jnp.sum(st[:, 1, :], axis=0)
        pf = float(P)                            # true row count (un-padded)
        mean = sums / pf
        var = jnp.maximum(sumsq / pf - mean * mean, 0.0)   # biased batch var
        inv = jax.lax.rsqrt(var + _BN_EPS)
        gamma = _pad_row(wts["gamma"], cp)
        beta = _pad_row(wts["beta"], cp)
        scale = gamma * inv[None, :]
        shift = beta - mean[None, :] * scale
        # Pass 2: cheap tiled normalize + affine + LeakyReLU (bf16 in/out).
        y = _bn_lrelu_apply(y_raw, scale, shift)
    else:  # "plain" (final 1-channel projection, no bias)
        y = _conv_matmul(patches, wmat, tile_k, "plain")

    return y[:P, :cout].reshape(n, ho, wo, cout)


# ---------------------------------------------------------------------------
# NLayerDiscriminator (norm_layer = BatchNorm2d => use_bias=False except conv0)
# ---------------------------------------------------------------------------

def init_params(key, input_nc, ndf, n_layers):
    kw = 4
    padw = 2
    configs, weights = [], []

    k0, key = jax.random.split(key)
    configs.append(dict(kind="bias_lrelu", stride=2, pad=padw))
    weights.append(dict(
        w=jax.random.normal(k0, (ndf, input_nc, kw, kw), jnp.float32) * 0.02,
        b=jnp.zeros((1, ndf), jnp.float32)))

    nf_mult = 1
    for n in range(1, n_layers):
        nf_mult_prev, nf_mult = nf_mult, min(2 ** n, 8)
        kk, key = jax.random.split(key)
        cin, cout = ndf * nf_mult_prev, ndf * nf_mult
        configs.append(dict(kind="bn_lrelu", stride=2, pad=padw))
        weights.append(dict(
            w=jax.random.normal(kk, (cout, cin, kw, kw), jnp.float32) * 0.02,
            gamma=jnp.ones((1, cout), jnp.float32),
            beta=jnp.zeros((1, cout), jnp.float32)))

    nf_mult_prev, nf_mult = nf_mult, min(2 ** n_layers, 8)
    kk, key = jax.random.split(key)
    cin, cout = ndf * nf_mult_prev, ndf * nf_mult
    configs.append(dict(kind="bn_lrelu", stride=1, pad=padw))
    weights.append(dict(
        w=jax.random.normal(kk, (cout, cin, kw, kw), jnp.float32) * 0.02,
        gamma=jnp.ones((1, cout), jnp.float32),
        beta=jnp.zeros((1, cout), jnp.float32)))

    kk, key = jax.random.split(key)
    configs.append(dict(kind="plain", stride=1, pad=padw))
    weights.append(dict(
        w=jax.random.normal(kk, (1, ndf * nf_mult, kw, kw), jnp.float32) * 0.02))

    return configs, weights


def nlayer_discriminator_forward(x_nchw, weights, configs):
    """x_nchw: (N, C, H, W) f32 -> (N, 1, Ho, Wo) f32 PatchGAN map."""
    x = jnp.transpose(x_nchw, (0, 2, 3, 1))      # NCHW -> NHWC
    for cfg, wts in zip(configs, weights):
        x = _conv_layer(x, cfg, wts)
    return jnp.transpose(x, (0, 3, 1, 2))        # NHWC -> NCHW


if __name__ == "__main__":
    # Small, module-consistent shapes: batch=2, input_nc=4, 16x16 images, ndf=16
    INPUT_NC, NDF, N_LAYERS = 4, 16, 3
    key = jax.random.PRNGKey(0)
    k_params, k_x = jax.random.split(key)

    configs, weights = init_params(k_params, INPUT_NC, NDF, N_LAYERS)
    x = jax.random.normal(k_x, (2, INPUT_NC, 16, 16), jnp.float32)  # NCHW

    fwd = jax.jit(functools.partial(nlayer_discriminator_forward, configs=configs))
    out = jax.block_until_ready(fwd(x, weights))

    # Expected PatchGAN output map for 16x16 input with padw=2: (2, 1, 5, 5)
    assert out.shape == (2, 1, 5, 5), out.shape
    assert out.dtype == jnp.float32, out.dtype
    assert jnp.all(jnp.isfinite(out)), "non-finite output"
    print("KERNEL_OK")
</pallas_src>

<mosaic_0001>
module attributes {stable_mosaic.version = 11 : i64} {
  func.func @_mm_bias_lrelu_kernel(%arg0: i32, %arg1: i32, %arg2: memref<168x128xbf16, #tpu.memory_space<vmem>>, %arg3: memref<128x128xbf16, #tpu.memory_space<vmem>>, %arg4: memref<1x128xf32, #tpu.memory_space<vmem>>, %arg5: memref<168x128xbf16, #tpu.memory_space<vmem>>, %arg6: memref<168x128xf32, #tpu.memory_space<vmem>>) attributes {dimension_semantics = [#tpu.dimension_semantics<parallel>, #tpu.dimension_semantics<arbitrary>], iteration_bounds = array<i64: 1, 1>, scalar_prefetch = 0 : i64, scratch_operands = 1 : i64, tpu.core_type = #tpu.core_type<tc>, window_params = [{transform_indices = @transform_0, window_bounds = array<i64: 168, 128>}, {transform_indices = @transform_1, window_bounds = array<i64: 128, 128>}, {pipeline_mode = #tpu.pipeline_mode<synchronous>, transform_indices = @transform_2, window_bounds = array<i64: 1, 128>}, {transform_indices = @transform_3, window_bounds = array<i64: 168, 128>}]} {
    %c0_i32 = arith.constant 0 : i32
    %0 = arith.cmpi eq, %arg1, %c0_i32 : i32
    %1 = arith.extui %0 : i1 to i32
    %c0_i32_0 = arith.constant 0 : i32
    %2 = arith.cmpi ne, %1, %c0_i32_0 : i32
    scf.if %2 {
      %cst_10 = arith.constant 0.000000e+00 : f32
      %12 = vector.broadcast %cst_10 : f32 to vector<168x128xf32>
      %c0_11 = arith.constant 0 : index
      %c0_12 = arith.constant 0 : index
      %13 = vector.load %arg6[%c0_11, %c0_12] : memref<168x128xf32, #tpu.memory_space<vmem>>, vector<168x128xf32>
      tpu.vector_store %arg6[%c0_11, %c0_12], %12 {strides = array<i32>} : memref<168x128xf32, #tpu.memory_space<vmem>>, vector<168x128xf32>,
    } else {
    }
    %c0 = arith.constant 0 : index
    %c0_1 = arith.constant 0 : index
    %3 = vector.load %arg6[%c0, %c0_1] : memref<168x128xf32, #tpu.memory_space<vmem>>, vector<168x128xf32>
    %c0_2 = arith.constant 0 : index
    %c0_3 = arith.constant 0 : index
    %4 = vector.load %arg2[%c0_2, %c0_3] : memref<168x128xbf16, #tpu.memory_space<vmem>>, vector<168x128xbf16>
    %c0_4 = arith.constant 0 : index
    %c0_5 = arith.constant 0 : index
    %5 = vector.load %arg3[%c0_4, %c0_5] : memref<128x128xbf16, #tpu.memory_space<vmem>>, vector<128x128xbf16>
    %cst = arith.constant dense<0.000000e+00> : vector<168x128xf32>
    %6 = tpu.matmul %4, %5, %cst {dimension_numbers = #tpu.dot_dimension_numbers<[1], [0], [0], [1], [0, 0, 1, 1], [], []>} : vector<168x128xbf16>, vector<128x128xbf16>, vector<168x128xf32> -> vector<168x128xf32>
    %7 = arith.addf %3, %6 : vector<168x128xf32>
    %c0_6 = arith.constant 0 : index
    %c0_7 = arith.constant 0 : index
    %8 = vector.load %arg6[%c0_6, %c0_7] : memref<168x128xf32, #tpu.memory_space<vmem>>, vector<168x128xf32>
    tpu.vector_store %arg6[%c0_6, %c0_7], %7 {strides = array<i32>} : memref<168x128xf32, #tpu.memory_space<vmem>>, vector<168x128xf32>,
    %c0_i32_8 = arith.constant 0 : i32
    %9 = arith.cmpi eq, %arg1, %c0_i32_8 : i32
    %10 = arith.extui %9 : i1 to i32
    %c0_i32_9 = arith.constant 0 : i32
    %11 = arith.cmpi ne, %10, %c0_i32_9 : i32
    scf.if %11 {
      %c0_10 = arith.constant 0 : index
      %c0_11 = arith.constant 0 : index
      %12 = vector.load %arg6[%c0_10, %c0_11] : memref<168x128xf32, #tpu.memory_space<vmem>>, vector<168x128xf32>
      %c0_12 = arith.constant 0 : index
      %c0_13 = arith.constant 0 : index
      %13 = vector.load %arg4[%c0_12, %c0_13] : memref<1x128xf32, #tpu.memory_space<vmem>>, vector<1x128xf32>
      %14 = vector.broadcast %13 : vector<1x128xf32> to vector<168x128xf32>
      %15 = arith.addf %12, %14 : vector<168x128xf32>
      %cst_14 = arith.constant 0.000000e+00 : f32
      %16 = vector.broadcast %cst_14 : f32 to vector<168x128xf32>
      %17 = arith.cmpf oge, %15, %16 : vector<168x128xf32>
      %cst_15 = arith.constant 2.000000e-01 : f32
      %18 = vector.broadcast %cst_15 : f32 to vector<168x128xf32>
      %19 = arith.mulf %18, %15 : vector<168x128xf32>
      %20 = arith.select %17, %15, %19 : vector<168x128xi1>, vector<168x128xf32>
      %21 = arith.truncf %20 : vector<168x128xf32> to vector<168x128xbf16>
      %c0_16 = arith.constant 0 : index
      %c0_17 = arith.constant 0 : index
      %22 = vector.load %arg5[%c0_16, %c0_17] : memref<168x128xbf16, #tpu.memory_space<vmem>>, vector<168x128xbf16>
      tpu.vector_store %arg5[%c0_16, %c0_17], %21 {strides = array<i32>} : memref<168x128xbf16, #tpu.memory_space<vmem>>, vector<168x128xbf16>,
    } else {
    }
    return
  }
  func.func @transform_0(%arg0: i32, %arg1: i32) -> (i32, i32) {
    %c0_i32 = arith.constant 0 : i32
    return %arg0, %arg1 : i32, i32
  }
  func.func @transform_1(%arg0: i32, %arg1: i32) -> (i32, i32) {
    %c0_i32 = arith.constant 0 : i32
    %c0_i32_0 = arith.constant 0 : i32
    return %arg1, %c0_i32 : i32, i32
  }
  func.func @transform_2(%arg0: i32, %arg1: i32) -> (i32, i32) {
    %c0_i32 = arith.constant 0 : i32
    %c0_i32_0 = arith.constant 0 : i32
    %c0_i32_1 = arith.constant 0 : i32
    return %c0_i32, %c0_i32_0 : i32, i32
  }
  func.func @transform_3(%arg0: i32, %arg1: i32) -> (i32, i32) {
    %c0_i32 = arith.constant 0 : i32
    %c0_i32_0 = arith.constant 0 : i32
    return %arg0, %c0_i32 : i32, i32
  }
}

module attributes {stable_mosaic.version = 11 : i64} {
  func.func @_mm_stats_kernel(%arg0: i32, %arg1: i32, %arg2: memref<56x256xbf16, #tpu.memory_space<vmem>>, %arg3: memref<256x128xbf16, #tpu.memory_space<vmem>>, %arg4: memref<56x128xbf16, #tpu.memory_space<vmem>>, %arg5: memref<8x128xf32, #tpu.memory_space<vmem>>, %arg6: memref<56x128xf32, #tpu.memory_space<vmem>>) attributes {dimension_semantics = [#tpu.dimension_semantics<parallel>, #tpu.dimension_semantics<arbitrary>], iteration_bounds = array<i64: 1, 1>, scalar_prefetch = 0 : i64, scratch_operands = 1 : i64, tpu.core_type = #tpu.core_type<tc>, window_params = [{transform_indices = @transform_0, window_bounds = array<i64: 56, 256>}, {transform_indices = @transform_1, window_bounds = array<i64: 256, 128>}, {transform_indices = @transform_2, window_bounds = array<i64: 56, 128>}, {transform_indices = @transform_3, window_bounds = array<i64: 8, 128>}]} {
    %c0_i32 = arith.constant 0 : i32
    %0 = arith.cmpi eq, %arg1, %c0_i32 : i32
    %1 = arith.extui %0 : i1 to i32
    %c0_i32_0 = arith.constant 0 : i32
    %2 = arith.cmpi ne, %1, %c0_i32_0 : i32
    scf.if %2 {
      %cst_10 = arith.constant 0.000000e+00 : f32
      %12 = vector.broadcast %cst_10 : f32 to vector<56x128xf32>
      %c0_11 = arith.constant 0 : index
      %c0_12 = arith.constant 0 : index
      %13 = vector.load %arg6[%c0_11, %c0_12] : memref<56x128xf32, #tpu.memory_space<vmem>>, vector<56x128xf32>
      tpu.vector_store %arg6[%c0_11, %c0_12], %12 {strides = array<i32>} : memref<56x128xf32, #tpu.memory_space<vmem>>, vector<56x128xf32>,
    } else {
    }
    %c0 = arith.constant 0 : index
    %c0_1 = arith.constant 0 : index
    %3 = vector.load %arg6[%c0, %c0_1] : memref<56x128xf32, #tpu.memory_space<vmem>>, vector<56x128xf32>
    %c0_2 = arith.constant 0 : index
    %c0_3 = arith.constant 0 : index
    %4 = vector.load %arg2[%c0_2, %c0_3] : memref<56x256xbf16, #tpu.memory_space<vmem>>, vector<56x256xbf16>
    %c0_4 = arith.constant 0 : index
    %c0_5 = arith.constant 0 : index
    %5 = vector.load %arg3[%c0_4, %c0_5] : memref<256x128xbf16, #tpu.memory_space<vmem>>, vector<256x128xbf16>
    %cst = arith.constant dense<0.000000e+00> : vector<56x128xf32>
    %6 = tpu.matmul %4, %5, %cst {dimension_numbers = #tpu.dot_dimension_numbers<[1], [0], [0], [1], [0, 0, 1, 1], [], []>} : vector<56x256xbf16>, vector<256x128xbf16>, vector<56x128xf32> -> vector<56x128xf32>
    %7 = arith.addf %3, %6 : vector<56x128xf32>
    %c0_6 = arith.constant 0 : index
    %c0_7 = arith.constant 0 : index
    %8 = vector.load %arg6[%c0_6, %c0_7] : memref<56x128xf32, #tpu.memory_space<vmem>>, vector<56x128xf32>
    tpu.vector_store %arg6[%c0_6, %c0_7], %7 {strides = array<i32>} : memref<56x128xf32, #tpu.memory_space<vmem>>, vector<56x128xf32>,
    %c0_i32_8 = arith.constant 0 : i32
    %9 = arith.cmpi eq, %arg1, %c0_i32_8 : i32
    %10 = arith.extui %9 : i1 to i32
    %c0_i32_9 = arith.constant 0 : i32
    %11 = arith.cmpi ne, %10, %c0_i32_9 : i32
    scf.if %11 {
      %c0_10 = arith.constant 0 : index
      %c0_11 = arith.constant 0 : index
      %12 = vector.load %arg6[%c0_10, %c0_11] : memref<56x128xf32, #tpu.memory_space<vmem>>, vector<56x128xf32>
      %13 = arith.truncf %12 : vector<56x128xf32> to vector<56x128xbf16>
      %c0_12 = arith.constant 0 : index
      %c0_13 = arith.constant 0 : index
      %14 = vector.load %arg4[%c0_12, %c0_13] : memref<56x128xbf16, #tpu.memory_space<vmem>>, vector<56x128xbf16>
      tpu.vector_store %arg4[%c0_12, %c0_13], %13 {strides = array<i32>} : memref<56x128xbf16, #tpu.memory_space<vmem>>, vector<56x128xbf16>,
      %cst_14 = arith.constant dense<0.000000e+00> : vector<128xf32>
      %15 = vector.multi_reduction <add>, %12, %cst_14 [0] : vector<56x128xf32> to vector<128xf32>
      %16 = vector.shape_cast %15 : vector<128xf32> to vector<1x128xf32>
      %17 = arith.mulf %12, %12 : vector<56x128xf32>
      %cst_15 = arith.constant dense<0.000000e+00> : vector<128xf32>
      %18 = vector.multi_reduction <add>, %17, %cst_15 [0] : vector<56x128xf32> to vector<128xf32>
      %19 = vector.shape_cast %18 : vector<128xf32> to vector<1x128xf32>
      %20 = tpu.iota {dimensions = array<i32: 0>} : vector<8x128xi32>
      %c0_i32_16 = arith.constant 0 : i32
      %21 = vector.broadcast %c0_i32_16 : i32 to vector<8x128xi32>
      %22 = arith.cmpi eq, %20, %21 : vector<8x128xi32>
      %23 = vector.shape_cast %16 : vector<1x128xf32> to vector<1x128xf32>
      %24 = vector.broadcast %23 : vector<1x128xf32> to vector<8x128xf32>
      %c1_i32 = arith.constant 1 : i32
      %25 = vector.broadcast %c1_i32 : i32 to vector<8x128xi32>
      %26 = arith.cmpi eq, %20, %25 : vector<8x128xi32>
      %27 = vector.shape_cast %19 : vector<1x128xf32> to vector<1x128xf32>
      %28 = vector.broadcast %27 : vector<1x128xf32> to vector<8x128xf32>
      %cst_17 = arith.constant 0.000000e+00 : f32
      %29 = vector.broadcast %cst_17 : f32 to vector<8x128xf32>
      %30 = arith.select %26, %28, %29 : vector<8x128xi1>, vector<8x128xf32>
      %31 = arith.select %22, %24, %30 : vector<8x128xi1>, vector<8x128xf32>
      %c0_18 = arith.constant 0 : index
      %c0_19 = arith.constant 0 : index
      %32 = vector.load %arg5[%c0_18, %c0_19] : memref<8x128xf32, #tpu.memory_space<vmem>>, vector<8x128xf32>
      tpu.vector_store %arg5[%c0_18, %c0_19], %31 {strides = array<i32>} : memref<8x128xf32, #tpu.memory_space<vmem>>, vector<8x128xf32>,
    } else {
    }
    return
  }
  func.func @transform_0(%arg0: i32, %arg1: i32) -> (i32, i32) {
    %c0_i32 = arith.constant 0 : i32
    return %arg0, %arg1 : i32, i32
  }
  func.func @transform_1(%arg0: i32, %arg1: i32) -> (i32, i32) {
    %c0_i32 = arith.constant 0 : i32
    %c0_i32_0 = arith.constant 0 : i32
    return %arg1, %c0_i32 : i32, i32
  }
  func.func @transform_2(%arg0: i32, %arg1: i32) -> (i32, i32) {
    %c0_i32 = arith.constant 0 : i32
    %c0_i32_0 = arith.constant 0 : i32
    return %arg0, %c0_i32 : i32, i32
  }
  func.func @transform_3(%arg0: i32, %arg1: i32) -> (i32, i32) {
    %c0_i32 = arith.constant 0 : i32
    %c0_i32_0 = arith.constant 0 : i32
    return %arg0, %c0_i32 : i32, i32
  }
}

module attributes {stable_mosaic.version = 11 : i64} {
  func.func @_bn_lrelu_kernel(%arg0: i32, %arg1: memref<56x128xbf16, #tpu.memory_space<vmem>>, %arg2: memref<1x128xf32, #tpu.memory_space<vmem>>, %arg3: memref<1x128xf32, #tpu.memory_space<vmem>>, %arg4: memref<56x128xbf16, #tpu.memory_space<vmem>>) attributes {dimension_semantics = [#tpu.dimension_semantics<parallel>], iteration_bounds = array<i64: 1>, scalar_prefetch = 0 : i64, scratch_operands = 0 : i64, tpu.core_type = #tpu.core_type<tc>, window_params = [{transform_indices = @transform_0, window_bounds = array<i64: 56, 128>}, {pipeline_mode = #tpu.pipeline_mode<synchronous>, transform_indices = @transform_1, window_bounds = array<i64: 1, 128>}, {pipeline_mode = #tpu.pipeline_mode<synchronous>, transform_indices = @transform_2, window_bounds = array<i64: 1, 128>}, {transform_indices = @transform_3, window_bounds = array<i64: 56, 128>}]} {
    %c0 = arith.constant 0 : index
    %c0_0 = arith.constant 0 : index
    %0 = vector.load %arg1[%c0, %c0_0] : memref<56x128xbf16, #tpu.memory_space<vmem>>, vector<56x128xbf16>
    %1 = arith.extf %0 : vector<56x128xbf16> to vector<56x128xf32>
    %c0_1 = arith.constant 0 : index
    %c0_2 = arith.constant 0 : index
    %2 = vector.load %arg2[%c0_1, %c0_2] : memref<1x128xf32, #tpu.memory_space<vmem>>, vector<1x128xf32>
    %3 = vector.broadcast %2 : vector<1x128xf32> to vector<56x128xf32>
    %4 = arith.mulf %1, %3 : vector<56x128xf32>
    %c0_3 = arith.constant 0 : index
    %c0_4 = arith.constant 0 : index
    %5 = vector.load %arg3[%c0_3, %c0_4] : memref<1x128xf32, #tpu.memory_space<vmem>>, vector<1x128xf32>
    %6 = vector.broadcast %5 : vector<1x128xf32> to vector<56x128xf32>
    %7 = arith.addf %4, %6 : vector<56x128xf32>
    %cst = arith.constant 0.000000e+00 : f32
    %8 = vector.broadcast %cst : f32 to vector<56x128xf32>
    %9 = arith.cmpf oge, %7, %8 : vector<56x128xf32>
    %cst_5 = arith.constant 2.000000e-01 : f32
    %10 = vector.broadcast %cst_5 : f32 to vector<56x128xf32>
    %11 = arith.mulf %10, %7 : vector<56x128xf32>
    %12 = arith.select %9, %7, %11 : vector<56x128xi1>, vector<56x128xf32>
    %13 = arith.truncf %12 : vector<56x128xf32> to vector<56x128xbf16>
    %c0_6 = arith.constant 0 : index
    %c0_7 = arith.constant 0 : index
    %14 = vector.load %arg4[%c0_6, %c0_7] : memref<56x128xbf16, #tpu.memory_space<vmem>>, vector<56x128xbf16>
    tpu.vector_store %arg4[%c0_6, %c0_7], %13 {strides = array<i32>} : memref<56x128xbf16, #tpu.memory_space<vmem>>, vector<56x128xbf16>,
    return
  }
  func.func @transform_0(%arg0: i32) -> (i32, i32) {
    %c0_i32 = arith.constant 0 : i32
    %c0_i32_0 = arith.constant 0 : i32
    return %arg0, %c0_i32 : i32, i32
  }
  func.func @transform_1(%arg0: i32) -> (i32, i32) {
    %c0_i32 = arith.constant 0 : i32
    %c0_i32_0 = arith.constant 0 : i32
    %c0_i32_1 = arith.constant 0 : i32
    return %c0_i32, %c0_i32_0 : i32, i32
  }
  func.func @transform_2(%arg0: i32) -> (i32, i32) {
    %c0_i32 = arith.constant 0 : i32
    %c0_i32_0 = arith.constant 0 : i32
    %c0_i32_1 = arith.constant 0 : i32
    return %c0_i32, %c0_i32_0 : i32, i32
  }
  func.func @transform_3(%arg0: i32) -> (i32, i32) {
    %c0_i32 = arith.constant 0 : i32
    %c0_i32_0 = arith.constant 0 : i32
    return %arg0, %c0_i32 : i32, i32
  }
}

module attributes {stable_mosaic.version = 11 : i64} {
  func.func @_mm_stats_kernel(%arg0: i32, %arg1: i32, %arg2: memref<24x512xbf16, #tpu.memory_space<vmem>>, %arg3: memref<512x128xbf16, #tpu.memory_space<vmem>>, %arg4: memref<24x128xbf16, #tpu.memory_space<vmem>>, %arg5: memref<8x128xf32, #tpu.memory_space<vmem>>, %arg6: memref<24x128xf32, #tpu.memory_space<vmem>>) attributes {dimension_semantics = [#tpu.dimension_semantics<parallel>, #tpu.dimension_semantics<arbitrary>], iteration_bounds = array<i64: 1, 1>, scalar_prefetch = 0 : i64, scratch_operands = 1 : i64, tpu.core_type = #tpu.core_type<tc>, window_params = [{transform_indices = @transform_0, window_bounds = array<i64: 24, 512>}, {transform_indices = @transform_1, window_bounds = array<i64: 512, 128>}, {transform_indices = @transform_2, window_bounds = array<i64: 24, 128>}, {transform_indices = @transform_3, window_bounds = array<i64: 8, 128>}]} {
    %c0_i32 = arith.constant 0 : i32
    %0 = arith.cmpi eq, %arg1, %c0_i32 : i32
    %1 = arith.extui %0 : i1 to i32
    %c0_i32_0 = arith.constant 0 : i32
    %2 = arith.cmpi ne, %1, %c0_i32_0 : i32
    scf.if %2 {
      %cst_10 = arith.constant 0.000000e+00 : f32
      %12 = vector.broadcast %cst_10 : f32 to vector<24x128xf32>
      %c0_11 = arith.constant 0 : index
      %c0_12 = arith.constant 0 : index
      %13 = vector.load %arg6[%c0_11, %c0_12] : memref<24x128xf32, #tpu.memory_space<vmem>>, vector<24x128xf32>
      tpu.vector_store %arg6[%c0_11, %c0_12], %12 {strides = array<i32>} : memref<24x128xf32, #tpu.memory_space<vmem>>, vector<24x128xf32>,
    } else {
    }
    %c0 = arith.constant 0 : index
    %c0_1 = arith.constant 0 : index
    %3 = vector.load %arg6[%c0, %c0_1] : memref<24x128xf32, #tpu.memory_space<vmem>>, vector<24x128xf32>
    %c0_2 = arith.constant 0 : index
    %c0_3 = arith.constant 0 : index
    %4 = vector.load %arg2[%c0_2, %c0_3] : memref<24x512xbf16, #tpu.memory_space<vmem>>, vector<24x512xbf16>
    %c0_4 = arith.constant 0 : index
    %c0_5 = arith.constant 0 : index
    %5 = vector.load %arg3[%c0_4, %c0_5] : memref<512x128xbf16, #tpu.memory_space<vmem>>, vector<512x128xbf16>
    %cst = arith.constant dense<0.000000e+00> : vector<24x128xf32>
    %6 = tpu.matmul %4, %5, %cst {dimension_numbers = #tpu.dot_dimension_numbers<[1], [0], [0], [1], [0, 0, 1, 1], [], []>} : vector<24x512xbf16>, vector<512x128xbf16>, vector<24x128xf32> -> vector<24x128xf32>
    %7 = arith.addf %3, %6 : vector<24x128xf32>
    %c0_6 = arith.constant 0 : index
    %c0_7 = arith.constant 0 : index
    %8 = vector.load %arg6[%c0_6, %c0_7] : memref<24x128xf32, #tpu.memory_space<vmem>>, vector<24x128xf32>
    tpu.vector_store %arg6[%c0_6, %c0_7], %7 {strides = array<i32>} : memref<24x128xf32, #tpu.memory_space<vmem>>, vector<24x128xf32>,
    %c0_i32_8 = arith.constant 0 : i32
    %9 = arith.cmpi eq, %arg1, %c0_i32_8 : i32
    %10 = arith.extui %9 : i1 to i32
    %c0_i32_9 = arith.constant 0 : i32
    %11 = arith.cmpi ne, %10, %c0_i32_9 : i32
    scf.if %11 {
      %c0_10 = arith.constant 0 : index
      %c0_11 = arith.constant 0 : index
      %12 = vector.load %arg6[%c0_10, %c0_11] : memref<24x128xf32, #tpu.memory_space<vmem>>, vector<24x128xf32>
      %13 = arith.truncf %12 : vector<24x128xf32> to vector<24x128xbf16>
      %c0_12 = arith.constant 0 : index
      %c0_13 = arith.constant 0 : index
      %14 = vector.load %arg4[%c0_12, %c0_13] : memref<24x128xbf16, #tpu.memory_space<vmem>>, vector<24x128xbf16>
      tpu.vector_store %arg4[%c0_12, %c0_13], %13 {strides = array<i32>} : memref<24x128xbf16, #tpu.memory_space<vmem>>, vector<24x128xbf16>,
      %cst_14 = arith.constant dense<0.000000e+00> : vector<128xf32>
      %15 = vector.multi_reduction <add>, %12, %cst_14 [0] : vector<24x128xf32> to vector<128xf32>
      %16 = vector.shape_cast %15 : vector<128xf32> to vector<1x128xf32>
      %17 = arith.mulf %12, %12 : vector<24x128xf32>
      %cst_15 = arith.constant dense<0.000000e+00> : vector<128xf32>
      %18 = vector.multi_reduction <add>, %17, %cst_15 [0] : vector<24x128xf32> to vector<128xf32>
      %19 = vector.shape_cast %18 : vector<128xf32> to vector<1x128xf32>
      %20 = tpu.iota {dimensions = array<i32: 0>} : vector<8x128xi32>
      %c0_i32_16 = arith.constant 0 : i32
      %21 = vector.broadcast %c0_i32_16 : i32 to vector<8x128xi32>
      %22 = arith.cmpi eq, %20, %21 : vector<8x128xi32>
      %23 = vector.shape_cast %16 : vector<1x128xf32> to vector<1x128xf32>
      %24 = vector.broadcast %23 : vector<1x128xf32> to vector<8x128xf32>
      %c1_i32 = arith.constant 1 : i32
      %25 = vector.broadcast %c1_i32 : i32 to vector<8x128xi32>
      %26 = arith.cmpi eq, %20, %25 : vector<8x128xi32>
      %27 = vector.shape_cast %19 : vector<1x128xf32> to vector<1x128xf32>
      %28 = vector.broadcast %27 : vector<1x128xf32> to vector<8x128xf32>
      %cst_17 = arith.constant 0.000000e+00 : f32
      %29 = vector.broadcast %cst_17 : f32 to vector<8x128xf32>
      %30 = arith.select %26, %28, %29 : vector<8x128xi1>, vector<8x128xf32>
      %31 = arith.select %22, %24, %30 : vector<8x128xi1>, vector<8x128xf32>
      %c0_18 = arith.constant 0 : index
      %c0_19 = arith.constant 0 : index
      %32 = vector.load %arg5[%c0_18, %c0_19] : memref<8x128xf32, #tpu.memory_space<vmem>>, vector<8x128xf32>
      tpu.vector_store %arg5[%c0_18, %c0_19], %31 {strides = array<i32>} : memref<8x128xf32, #tpu.memory_space<vmem>>, vector<8x128xf32>,
    } else {
    }
    return
  }
  func.func @transform_0(%arg0: i32, %arg1: i32) -> (i32, i32) {
    %c0_i32 = arith.constant 0 : i32
    return %arg0, %arg1 : i32, i32
  }
  func.func @transform_1(%arg0: i32, %arg1: i32) -> (i32, i32) {
    %c0_i32 = arith.constant 0 : i32
    %c0_i32_0 = arith.constant 0 : i32
    return %arg1, %c0_i32 : i32, i32
  }
  func.func @transform_2(%arg0: i32, %arg1: i32) -> (i32, i32) {
    %c0_i32 = arith.constant 0 : i32
    %c0_i32_0 = arith.constant 0 : i32
    return %arg0, %c0_i32 : i32, i32
  }
  func.func @transform_3(%arg0: i32, %arg1: i32) -> (i32, i32) {
    %c0_i32 = arith.constant 0 : i32
    %c0_i32_0 = arith.constant 0 : i32
    return %arg0, %c0_i32 : i32, i32
  }
}

module attributes {stable_mosaic.version = 11 : i64} {
  func.func @_bn_lrelu_kernel(%arg0: i32, %arg1: memref<24x128xbf16, #tpu.memory_space<vmem>>, %arg2: memref<1x128xf32, #tpu.memory_space<vmem>>, %arg3: memref<1x128xf32, #tpu.memory_space<vmem>>, %arg4: memref<24x128xbf16, #tpu.memory_space<vmem>>) attributes {dimension_semantics = [#tpu.dimension_semantics<parallel>], iteration_bounds = array<i64: 1>, scalar_prefetch = 0 : i64, scratch_operands = 0 : i64, tpu.core_type = #tpu.core_type<tc>, window_params = [{transform_indices = @transform_0, window_bounds = array<i64: 24, 128>}, {pipeline_mode = #tpu.pipeline_mode<synchronous>, transform_indices = @transform_1, window_bounds = array<i64: 1, 128>}, {pipeline_mode = #tpu.pipeline_mode<synchronous>, transform_indices = @transform_2, window_bounds = array<i64: 1, 128>}, {transform_indices = @transform_3, window_bounds = array<i64: 24, 128>}]} {
    %c0 = arith.constant 0 : index
    %c0_0 = arith.constant 0 : index
    %0 = vector.load %arg1[%c0, %c0_0] : memref<24x128xbf16, #tpu.memory_space<vmem>>, vector<24x128xbf16>
    %1 = arith.extf %0 : vector<24x128xbf16> to vector<24x128xf32>
    %c0_1 = arith.constant 0 : index
    %c0_2 = arith.constant 0 : index
    %2 = vector.load %arg2[%c0_1, %c0_2] : memref<1x128xf32, #tpu.memory_space<vmem>>, vector<1x128xf32>
    %3 = vector.broadcast %2 : vector<1x128xf32> to vector<24x128xf32>
    %4 = arith.mulf %1, %3 : vector<24x128xf32>
    %c0_3 = arith.constant 0 : index
    %c0_4 = arith.constant 0 : index
    %5 = vector.load %arg3[%c0_3, %c0_4] : memref<1x128xf32, #tpu.memory_space<vmem>>, vector<1x128xf32>
    %6 = vector.broadcast %5 : vector<1x128xf32> to vector<24x128xf32>
    %7 = arith.addf %4, %6 : vector<24x128xf32>
    %cst = arith.constant 0.000000e+00 : f32
    %8 = vector.broadcast %cst : f32 to vector<24x128xf32>
    %9 = arith.cmpf oge, %7, %8 : vector<24x128xf32>
    %cst_5 = arith.constant 2.000000e-01 : f32
    %10 = vector.broadcast %cst_5 : f32 to vector<24x128xf32>
    %11 = arith.mulf %10, %7 : vector<24x128xf32>
    %12 = arith.select %9, %7, %11 : vector<24x128xi1>, vector<24x128xf32>
    %13 = arith.truncf %12 : vector<24x128xf32> to vector<24x128xbf16>
    %c0_6 = arith.constant 0 : index
    %c0_7 = arith.constant 0 : index
    %14 = vector.load %arg4[%c0_6, %c0_7] : memref<24x128xbf16, #tpu.memory_space<vmem>>, vector<24x128xbf16>
    tpu.vector_store %arg4[%c0_6, %c0_7], %13 {strides = array<i32>} : memref<24x128xbf16, #tpu.memory_space<vmem>>, vector<24x128xbf16>,
    return
  }
  func.func @transform_0(%arg0: i32) -> (i32, i32) {
    %c0_i32 = arith.constant 0 : i32
    %c0_i32_0 = arith.constant 0 : i32
    return %arg0, %c0_i32 : i32, i32
  }
  func.func @transform_1(%arg0: i32) -> (i32, i32) {
    %c0_i32 = arith.constant 0 : i32
    %c0_i32_0 = arith.constant 0 : i32
    %c0_i32_1 = arith.constant 0 : i32
    return %c0_i32, %c0_i32_0 : i32, i32
  }
  func.func @transform_2(%arg0: i32) -> (i32, i32) {
    %c0_i32 = arith.constant 0 : i32
    %c0_i32_0 = arith.constant 0 : i32
    %c0_i32_1 = arith.constant 0 : i32
    return %c0_i32, %c0_i32_0 : i32, i32
  }
  func.func @transform_3(%arg0: i32) -> (i32, i32) {
    %c0_i32 = arith.constant 0 : i32
    %c0_i32_0 = arith.constant 0 : i32
    return %arg0, %c0_i32 : i32, i32
  }
}

module attributes {stable_mosaic.version = 11 : i64} {
  func.func @_mm_stats_kernel(%arg0: i32, %arg1: i32, %arg2: memref<32x1024xbf16, #tpu.memory_space<vmem>>, %arg3: memref<1024x128xbf16, #tpu.memory_space<vmem>>, %arg4: memref<32x128xbf16, #tpu.memory_space<vmem>>, %arg5: memref<8x128xf32, #tpu.memory_space<vmem>>, %arg6: memref<32x128xf32, #tpu.memory_space<vmem>>) attributes {dimension_semantics = [#tpu.dimension_semantics<parallel>, #tpu.dimension_semantics<arbitrary>], iteration_bounds = array<i64: 1, 1>, scalar_prefetch = 0 : i64, scratch_operands = 1 : i64, tpu.core_type = #tpu.core_type<tc>, window_params = [{transform_indices = @transform_0, window_bounds = array<i64: 32, 1024>}, {transform_indices = @transform_1, window_bounds = array<i64: 1024, 128>}, {transform_indices = @transform_2, window_bounds = array<i64: 32, 128>}, {transform_indices = @transform_3, window_bounds = array<i64: 8, 128>}]} {
    %c0_i32 = arith.constant 0 : i32
    %0 = arith.cmpi eq, %arg1, %c0_i32 : i32
    %1 = arith.extui %0 : i1 to i32
    %c0_i32_0 = arith.constant 0 : i32
    %2 = arith.cmpi ne, %1, %c0_i32_0 : i32
    scf.if %2 {
      %cst_10 = arith.constant 0.000000e+00 : f32
      %12 = vector.broadcast %cst_10 : f32 to vector<32x128xf32>
      %c0_11 = arith.constant 0 : index
      %c0_12 = arith.constant 0 : index
      %13 = vector.load %arg6[%c0_11, %c0_12] : memref<32x128xf32, #tpu.memory_space<vmem>>, vector<32x128xf32>
      tpu.vector_store %arg6[%c0_11, %c0_12], %12 {strides = array<i32>} : memref<32x128xf32, #tpu.memory_space<vmem>>, vector<32x128xf32>,
    } else {
    }
    %c0 = arith.constant 0 : index
    %c0_1 = arith.constant 0 : index
    %3 = vector.load %arg6[%c0, %c0_1] : memref<32x128xf32, #tpu.memory_space<vmem>>, vector<32x128xf32>
    %c0_2 = arith.constant 0 : index
    %c0_3 = arith.constant 0 : index
    %4 = vector.load %arg2[%c0_2, %c0_3] : memref<32x1024xbf16, #tpu.memory_space<vmem>>, vector<32x1024xbf16>
    %c0_4 = arith.constant 0 : index
    %c0_5 = arith.constant 0 : index
    %5 = vector.load %arg3[%c0_4, %c0_5] : memref<1024x128xbf16, #tpu.memory_space<vmem>>, vector<1024x128xbf16>
    %cst = arith.constant dense<0.000000e+00> : vector<32x128xf32>
    %6 = tpu.matmul %4, %5, %cst {dimension_numbers = #tpu.dot_dimension_numbers<[1], [0], [0], [1], [0, 0, 1, 1], [], []>} : vector<32x1024xbf16>, vector<1024x128xbf16>, vector<32x128xf32> -> vector<32x128xf32>
    %7 = arith.addf %3, %6 : vector<32x128xf32>
    %c0_6 = arith.constant 0 : index
    %c0_7 = arith.constant 0 : index
    %8 = vector.load %arg6[%c0_6, %c0_7] : memref<32x128xf32, #tpu.memory_space<vmem>>, vector<32x128xf32>
    tpu.vector_store %arg6[%c0_6, %c0_7], %7 {strides = array<i32>} : memref<32x128xf32, #tpu.memory_space<vmem>>, vector<32x128xf32>,
    %c0_i32_8 = arith.constant 0 : i32
    %9 = arith.cmpi eq, %arg1, %c0_i32_8 : i32
    %10 = arith.extui %9 : i1 to i32
    %c0_i32_9 = arith.constant 0 : i32
    %11 = arith.cmpi ne, %10, %c0_i32_9 : i32
    scf.if %11 {
      %c0_10 = arith.constant 0 : index
      %c0_11 = arith.constant 0 : index
      %12 = vector.load %arg6[%c0_10, %c0_11] : memref<32x128xf32, #tpu.memory_space<vmem>>, vector<32x128xf32>
      %13 = arith.truncf %12 : vector<32x128xf32> to vector<32x128xbf16>
      %c0_12 = arith.constant 0 : index
      %c0_13 = arith.constant 0 : index
      %14 = vector.load %arg4[%c0_12, %c0_13] : memref<32x128xbf16, #tpu.memory_space<vmem>>, vector<32x128xbf16>
      tpu.vector_store %arg4[%c0_12, %c0_13], %13 {strides = array<i32>} : memref<32x128xbf16, #tpu.memory_space<vmem>>, vector<32x128xbf16>,
      %cst_14 = arith.constant dense<0.000000e+00> : vector<128xf32>
      %15 = vector.multi_reduction <add>, %12, %cst_14 [0] : vector<32x128xf32> to vector<128xf32>
      %16 = vector.shape_cast %15 : vector<128xf32> to vector<1x128xf32>
      %17 = arith.mulf %12, %12 : vector<32x128xf32>
      %cst_15 = arith.constant dense<0.000000e+00> : vector<128xf32>
      %18 = vector.multi_reduction <add>, %17, %cst_15 [0] : vector<32x128xf32> to vector<128xf32>
      %19 = vector.shape_cast %18 : vector<128xf32> to vector<1x128xf32>
      %20 = tpu.iota {dimensions = array<i32: 0>} : vector<8x128xi32>
      %c0_i32_16 = arith.constant 0 : i32
      %21 = vector.broadcast %c0_i32_16 : i32 to vector<8x128xi32>
      %22 = arith.cmpi eq, %20, %21 : vector<8x128xi32>
      %23 = vector.shape_cast %16 : vector<1x128xf32> to vector<1x128xf32>
      %24 = vector.broadcast %23 : vector<1x128xf32> to vector<8x128xf32>
      %c1_i32 = arith.constant 1 : i32
      %25 = vector.broadcast %c1_i32 : i32 to vector<8x128xi32>
      %26 = arith.cmpi eq, %20, %25 : vector<8x128xi32>
      %27 = vector.shape_cast %19 : vector<1x128xf32> to vector<1x128xf32>
      %28 = vector.broadcast %27 : vector<1x128xf32> to vector<8x128xf32>
      %cst_17 = arith.constant 0.000000e+00 : f32
      %29 = vector.broadcast %cst_17 : f32 to vector<8x128xf32>
      %30 = arith.select %26, %28, %29 : vector<8x128xi1>, vector<8x128xf32>
      %31 = arith.select %22, %24, %30 : vector<8x128xi1>, vector<8x128xf32>
      %c0_18 = arith.constant 0 : index
      %c0_19 = arith.constant 0 : index
      %32 = vector.load %arg5[%c0_18, %c0_19] : memref<8x128xf32, #tpu.memory_space<vmem>>, vector<8x128xf32>
      tpu.vector_store %arg5[%c0_18, %c0_19], %31 {strides = array<i32>} : memref<8x128xf32, #tpu.memory_space<vmem>>, vector<8x128xf32>,
    } else {
    }
    return
  }
  func.func @transform_0(%arg0: i32, %arg1: i32) -> (i32, i32) {
    %c0_i32 = arith.constant 0 : i32
    return %arg0, %arg1 : i32, i32
  }
  func.func @transform_1(%arg0: i32, %arg1: i32) -> (i32, i32) {
    %c0_i32 = arith.constant 0 : i32
    %c0_i32_0 = arith.constant 0 : i32
    return %arg1, %c0_i32 : i32, i32
  }
  func.func @transform_2(%arg0: i32, %arg1: i32) -> (i32, i32) {
    %c0_i32 = arith.constant 0 : i32
    %c0_i32_0 = arith.constant 0 : i32
    return %arg0, %c0_i32 : i32, i32
  }
  func.func @transform_3(%arg0: i32, %arg1: i32) -> (i32, i32) {
    %c0_i32 = arith.constant 0 : i32
    %c0_i32_0 = arith.constant 0 : i32
    return %arg0, %c0_i32 : i32, i32
  }
}

module attributes {stable_mosaic.version = 11 : i64} {
  func.func @_bn_lrelu_kernel(%arg0: i32, %arg1: memref<32x128xbf16, #tpu.memory_space<vmem>>, %arg2: memref<1x128xf32, #tpu.memory_space<vmem>>, %arg3: memref<1x128xf32, #tpu.memory_space<vmem>>, %arg4: memref<32x128xbf16, #tpu.memory_space<vmem>>) attributes {dimension_semantics = [#tpu.dimension_semantics<parallel>], iteration_bounds = array<i64: 1>, scalar_prefetch = 0 : i64, scratch_operands = 0 : i64, tpu.core_type = #tpu.core_type<tc>, window_params = [{transform_indices = @transform_0, window_bounds = array<i64: 32, 128>}, {pipeline_mode = #tpu.pipeline_mode<synchronous>, transform_indices = @transform_1, window_bounds = array<i64: 1, 128>}, {pipeline_mode = #tpu.pipeline_mode<synchronous>, transform_indices = @transform_2, window_bounds = array<i64: 1, 128>}, {transform_indices = @transform_3, window_bounds = array<i64: 32, 128>}]} {
    %c0 = arith.constant 0 : index
    %c0_0 = arith.constant 0 : index
    %0 = vector.load %arg1[%c0, %c0_0] : memref<32x128xbf16, #tpu.memory_space<vmem>>, vector<32x128xbf16>
    %1 = arith.extf %0 : vector<32x128xbf16> to vector<32x128xf32>
    %c0_1 = arith.constant 0 : index
    %c0_2 = arith.constant 0 : index
    %2 = vector.load %arg2[%c0_1, %c0_2] : memref<1x128xf32, #tpu.memory_space<vmem>>, vector<1x128xf32>
    %3 = vector.broadcast %2 : vector<1x128xf32> to vector<32x128xf32>
    %4 = arith.mulf %1, %3 : vector<32x128xf32>
    %c0_3 = arith.constant 0 : index
    %c0_4 = arith.constant 0 : index
    %5 = vector.load %arg3[%c0_3, %c0_4] : memref<1x128xf32, #tpu.memory_space<vmem>>, vector<1x128xf32>
    %6 = vector.broadcast %5 : vector<1x128xf32> to vector<32x128xf32>
    %7 = arith.addf %4, %6 : vector<32x128xf32>
    %cst = arith.constant 0.000000e+00 : f32
    %8 = vector.broadcast %cst : f32 to vector<32x128xf32>
    %9 = arith.cmpf oge, %7, %8 : vector<32x128xf32>
    %cst_5 = arith.constant 2.000000e-01 : f32
    %10 = vector.broadcast %cst_5 : f32 to vector<32x128xf32>
    %11 = arith.mulf %10, %7 : vector<32x128xf32>
    %12 = arith.select %9, %7, %11 : vector<32x128xi1>, vector<32x128xf32>
    %13 = arith.truncf %12 : vector<32x128xf32> to vector<32x128xbf16>
    %c0_6 = arith.constant 0 : index
    %c0_7 = arith.constant 0 : index
    %14 = vector.load %arg4[%c0_6, %c0_7] : memref<32x128xbf16, #tpu.memory_space<vmem>>, vector<32x128xbf16>
    tpu.vector_store %arg4[%c0_6, %c0_7], %13 {strides = array<i32>} : memref<32x128xbf16, #tpu.memory_space<vmem>>, vector<32x128xbf16>,
    return
  }
  func.func @transform_0(%arg0: i32) -> (i32, i32) {
    %c0_i32 = arith.constant 0 : i32
    %c0_i32_0 = arith.constant 0 : i32
    return %arg0, %c0_i32 : i32, i32
  }
  func.func @transform_1(%arg0: i32) -> (i32, i32) {
    %c0_i32 = arith.constant 0 : i32
    %c0_i32_0 = arith.constant 0 : i32
    %c0_i32_1 = arith.constant 0 : i32
    return %c0_i32, %c0_i32_0 : i32, i32
  }
  func.func @transform_2(%arg0: i32) -> (i32, i32) {
    %c0_i32 = arith.constant 0 : i32
    %c0_i32_0 = arith.constant 0 : i32
    %c0_i32_1 = arith.constant 0 : i32
    return %c0_i32, %c0_i32_0 : i32, i32
  }
  func.func @transform_3(%arg0: i32) -> (i32, i32) {
    %c0_i32 = arith.constant 0 : i32
    %c0_i32_0 = arith.constant 0 : i32
    return %arg0, %c0_i32 : i32, i32
  }
}

module attributes {stable_mosaic.version = 11 : i64} {
  func.func @_mm_plain_kernel(%arg0: i32, %arg1: i32, %arg2: memref<56x2048xbf16, #tpu.memory_space<vmem>>, %arg3: memref<2048x128xbf16, #tpu.memory_space<vmem>>, %arg4: memref<56x128xf32, #tpu.memory_space<vmem>>, %arg5: memref<56x128xf32, #tpu.memory_space<vmem>>) attributes {dimension_semantics = [#tpu.dimension_semantics<parallel>, #tpu.dimension_semantics<arbitrary>], iteration_bounds = array<i64: 1, 1>, scalar_prefetch = 0 : i64, scratch_operands = 1 : i64, tpu.core_type = #tpu.core_type<tc>, window_params = [{transform_indices = @transform_0, window_bounds = array<i64: 56, 2048>}, {transform_indices = @transform_1, window_bounds = array<i64: 2048, 128>}, {transform_indices = @transform_2, window_bounds = array<i64: 56, 128>}]} {
    %c0_i32 = arith.constant 0 : i32
    %0 = arith.cmpi eq, %arg1, %c0_i32 : i32
    %1 = arith.extui %0 : i1 to i32
    %c0_i32_0 = arith.constant 0 : i32
    %2 = arith.cmpi ne, %1, %c0_i32_0 : i32
    scf.if %2 {
      %cst_10 = arith.constant 0.000000e+00 : f32
      %12 = vector.broadcast %cst_10 : f32 to vector<56x128xf32>
      %c0_11 = arith.constant 0 : index
      %c0_12 = arith.constant 0 : index
      %13 = vector.load %arg5[%c0_11, %c0_12] : memref<56x128xf32, #tpu.memory_space<vmem>>, vector<56x128xf32>
      tpu.vector_store %arg5[%c0_11, %c0_12], %12 {strides = array<i32>} : memref<56x128xf32, #tpu.memory_space<vmem>>, vector<56x128xf32>,
    } else {
    }
    %c0 = arith.constant 0 : index
    %c0_1 = arith.constant 0 : index
    %3 = vector.load %arg5[%c0, %c0_1] : memref<56x128xf32, #tpu.memory_space<vmem>>, vector<56x128xf32>
    %c0_2 = arith.constant 0 : index
    %c0_3 = arith.constant 0 : index
    %4 = vector.load %arg2[%c0_2, %c0_3] : memref<56x2048xbf16, #tpu.memory_space<vmem>>, vector<56x2048xbf16>
    %c0_4 = arith.constant 0 : index
    %c0_5 = arith.constant 0 : index
    %5 = vector.load %arg3[%c0_4, %c0_5] : memref<2048x128xbf16, #tpu.memory_space<vmem>>, vector<2048x128xbf16>
    %cst = arith.constant dense<0.000000e+00> : vector<56x128xf32>
    %6 = tpu.matmul %4, %5, %cst {dimension_numbers = #tpu.dot_dimension_numbers<[1], [0], [0], [1], [0, 0, 1, 1], [], []>} : vector<56x2048xbf16>, vector<2048x128xbf16>, vector<56x128xf32> -> vector<56x128xf32>
    %7 = arith.addf %3, %6 : vector<56x128xf32>
    %c0_6 = arith.constant 0 : index
    %c0_7 = arith.constant 0 : index
    %8 = vector.load %arg5[%c0_6, %c0_7] : memref<56x128xf32, #tpu.memory_space<vmem>>, vector<56x128xf32>
    tpu.vector_store %arg5[%c0_6, %c0_7], %7 {strides = array<i32>} : memref<56x128xf32, #tpu.memory_space<vmem>>, vector<56x128xf32>,
    %c0_i32_8 = arith.constant 0 : i32
    %9 = arith.cmpi eq, %arg1, %c0_i32_8 : i32
    %10 = arith.extui %9 : i1 to i32
    %c0_i32_9 = arith.constant 0 : i32
    %11 = arith.cmpi ne, %10, %c0_i32_9 : i32
    scf.if %11 {
      %c0_10 = arith.constant 0 : index
      %c0_11 = arith.constant 0 : index
      %12 = vector.load %arg5[%c0_10, %c0_11] : memref<56x128xf32, #tpu.memory_space<vmem>>, vector<56x128xf32>
      %c0_12 = arith.constant 0 : index
      %c0_13 = arith.constant 0 : index
      %13 = vector.load %arg4[%c0_12, %c0_13] : memref<56x128xf32, #tpu.memory_space<vmem>>, vector<56x128xf32>
      tpu.vector_store %arg4[%c0_12, %c0_13], %12 {strides = array<i32>} : memref<56x128xf32, #tpu.memory_space<vmem>>, vector<56x128xf32>,
    } else {
    }
    return
  }
  func.func @transform_0(%arg0: i32, %arg1: i32) -> (i32, i32) {
    %c0_i32 = arith.constant 0 : i32
    return %arg0, %arg1 : i32, i32
  }
  func.func @transform_1(%arg0: i32, %arg1: i32) -> (i32, i32) {
    %c0_i32 = arith.constant 0 : i32
    %c0_i32_0 = arith.constant 0 : i32
    return %arg1, %c0_i32 : i32, i32
  }
  func.func @transform_2(%arg0: i32, %arg1: i32) -> (i32, i32) {
    %c0_i32 = arith.constant 0 : i32
    %c0_i32_0 = arith.constant 0 : i32
    return %arg0, %c0_i32 : i32, i32
  }
}

</mosaic_0001>

<llo_original>
// kernel: nlayer_discriminator_forward.8
$region0: #{nlayer_discriminator_forward.8}
  #allocation0 [shape = 'u32[]', space=smem, size = 0x4, offset = 0x4, fixed_abs, tag = 'smem constant byte address 0x4 - core index']
  #allocation1 [shape = 'u32[144,128]{1,0:T(1,128)}', space=vmem, size = 0x12000, scoped, tag = 'internal scratch']
  #allocation2 [shape = 'f32[168,128]{1,0:T(8,128)}', space=vmem, size = 0x15000, scoped, tag = 'scratch operand']
  %s0 = inlined_call_operand.hbm [shape: bf16[168,128], index: 0, kind: input, shape index: {}]
  %s1 = inlined_call_operand.hbm [shape: bf16[128,128], index: 1, kind: input, shape index: {}]
  %s2 = inlined_call_operand.hbm [shape: f32[1,128], index: 2, kind: input, shape index: {}]
  %s3 = inlined_call_operand.hbm [shape: bf16[168,128], index: 3, kind: output, shape index: {}]
  %s4 = sld [smem:[#allocation0]]
  $region42: #{nlayer_discriminator_forward.8} parent=0
    _
  %s6 = ssub.s32 1, %s4
  %s7 = scalar_select 0, %s6, %s4
  $region1: #{nlayer_discriminator_forward.8} parent=0
    #allocation3 [shape = 'u8[43008]{0}', space=vmem, size = 0xa800, scoped, tag = 'input window, operand 0, single buffered']
    #allocation4 [shape = 's32[1]{0}', space=sflag, size = 0x4, scoped, tag = 'scoped memory for nlayer_discriminator_forward.8']
    #allocation5 [shape = 's32[1]{0}', space=sflag, size = 0x4, scoped, tag = 'scoped memory for nlayer_discriminator_forward.8']
    #allocation6 [shape = 'u8[32768]{0}', space=vmem, size = 0x8000, scoped, tag = 'input window, operand 1, single buffered']
    #allocation7 [shape = 's32[1]{0}', space=sflag, size = 0x4, scoped, tag = 'scoped memory for nlayer_discriminator_forward.8']
    #allocation8 [shape = 'u8[512]{0}', space=vmem, size = 0x400, scoped, tag = 'input window, operand 2, single buffered']
    #allocation9 [shape = 'u8[43008]{0}', space=vmem, size = 0xa800, scoped, tag = 'output window, operand 0, single buffered']
    %8 = vsyncpa [#allocation4], 0
    %9 = vsyncpa [#allocation7], 0
    %10 = vsyncpa [#allocation5], 0
    // Predicated region
    $region2: #{nlayer_discriminator_forward.8} parent=1 // pred_check
      _
    $region3: #{nlayer_discriminator_forward.8} parent=1 // pred_check_branch
      %12 = sbr.rel (0) target = $region5
    $region4: #{nlayer_discriminator_forward.8} parent=1 // pred_region
      %s14 = ssub.s32 1344, 1344
      %15 = vsyncadd [#allocation4], %s14
      %s16 = sshll.u32 [#allocation3], 4
      %s17 = int_to_ptr.vmem [resolvable:$true] %s16
      %22 = dma.hbm_to_vmem [thread:$0]  %s0, 1344, %s17, [#allocation4], 64, 64, 4
    $region5: #{nlayer_discriminator_forward.8} parent=1 // pred_fallthru
      _
    // Predicated region
    $region6: #{nlayer_discriminator_forward.8} parent=1 // pred_check
      _
    $region7: #{nlayer_discriminator_forward.8} parent=1 // pred_check_branch
      %24 = sbr.rel (0) target = $region9
    $region8: #{nlayer_discriminator_forward.8} parent=1 // pred_region
      %s26 = ssub.s32 1024, 1024
      %27 = vsyncadd [#allocation7], %s26
      %s28 = sshll.u32 [#allocation6], 4
      %s29 = int_to_ptr.vmem [resolvable:$true] %s28
      %34 = dma.hbm_to_vmem [thread:$0]  %s1, 1024, %s29, [#allocation7], 64, 64, 4
    $region9: #{nlayer_discriminator_forward.8} parent=1 // pred_fallthru
      _
    // Predicated region
    $region10: #{nlayer_discriminator_forward.8} parent=1 // pred_check
      _
    $region11: #{nlayer_discriminator_forward.8} parent=1 // pred_check_branch
      %36 = sbr.rel (0) target = $region13
    $region12: #{nlayer_discriminator_forward.8} parent=1 // pred_region
      %s38 = ssub.s32 16, 16
      %39 = vsyncadd [#allocation7], %s38
      %s41 = sshll.u32 [#allocation8], 4
      %s42 = int_to_ptr.vmem [resolvable:$true] %s41
      %44 = dma.hbm_to_vmem [thread:$0]  %s2, 16, %s42, [#allocation7]
    $region13: #{nlayer_discriminator_forward.8} parent=1 // pred_fallthru
      _
    // Predicated region
    $region14: #{nlayer_discriminator_forward.8} parent=1 // pred_check
      _
    $region15: #{nlayer_discriminator_forward.8} parent=1 // pred_check_branch
      %46 = sbr.rel (0) target = $region17
    $region16: #{nlayer_discriminator_forward.8} parent=1 // pred_region
      %47 = dma.done [#allocation4], 1344
    $region17: #{nlayer_discriminator_forward.8} parent=1 // pred_fallthru
      _
    // Predicated region
    $region18: #{nlayer_discriminator_forward.8} parent=1 // pred_check
      _
    $region19: #{nlayer_discriminator_forward.8} parent=1 // pred_check_branch
      %49 = sbr.rel (0) target = $region21
    $region20: #{nlayer_discriminator_forward.8} parent=1 // pred_region
      %50 = dma.done [#allocation7], 1024
    $region21: #{nlayer_discriminator_forward.8} parent=1 // pred_fallthru
      _
    // Predicated region
    $region22: #{nlayer_discriminator_forward.8} parent=1 // pred_check
      _
    $region23: #{nlayer_discriminator_forward.8} parent=1 // pred_check_branch
      %52 = sbr.rel (0) target = $region25
    $region24: #{nlayer_discriminator_forward.8} parent=1 // pred_region
      %53 = dma.done [#allocation7], 16
    $region25: #{nlayer_discriminator_forward.8} parent=1 // pred_fallthru
      _
    %p55 = scmp.eq.s32.totalorder 0, 0
    // Predicated region
    $region26: #{nlayer_discriminator_forward.8} parent=1 // pred_check
      %p56 = pneg %p55
    $region27: #{nlayer_discriminator_forward.8} parent=1 // pred_check_branch
      %58 = sbr.rel (%p56) target = $region29
    $region28: #{nlayer_discriminator_forward.8} parent=1 // pred_region
      %59 = vst [vmem:[#allocation2] sm:$0xff] 0.0
      %60 = vst [vmem:[#allocation2 + $0x8] sm:$0xff] 0.0
      %61 = vst [vmem:[#allocation2 + $0x10] sm:$0xff] 0.0
      %62 = vst [vmem:[#allocation2 + $0x18] sm:$0xff] 0.0
      %63 = vst [vmem:[#allocation2 + $0x20] sm:$0xff] 0.0
      %64 = vst [vmem:[#allocation2 + $0x28] sm:$0xff] 0.0
      %65 = vst [vmem:[#allocation2 + $0x30] sm:$0xff] 0.0
      %66 = vst [vmem:[#allocation2 + $0x38] sm:$0xff] 0.0
      %67 = vst [vmem:[#allocation2 + $0x40] sm:$0xff] 0.0
      %68 = vst [vmem:[#allocation2 + $0x48] sm:$0xff] 0.0
      %69 = vst [vmem:[#allocation2 + $0x50] sm:$0xff] 0.0
      %70 = vst [vmem:[#allocation2 + $0x58] sm:$0xff] 0.0
      %71 = vst [vmem:[#allocation2 + $0x60] sm:$0xff] 0.0
      %72 = vst [vmem:[#allocation2 + $0x68] sm:$0xff] 0.0
      %73 = vst [vmem:[#allocation2 + $0x70] sm:$0xff] 0.0
      %74 = vst [vmem:[#allocation2 + $0x78] sm:$0xff] 0.0
      %75 = vst [vmem:[#allocation2 + $0x80] sm:$0xff] 0.0
      %76 = vst [vmem:[#allocation2 + $0x88] sm:$0xff] 0.0
      %77 = vst [vmem:[#allocation2 + $0x90] sm:$0xff] 0.0
      %78 = vst [vmem:[#allocation2 + $0x98] sm:$0xff] 0.0
      %79 = vst [vmem:[#allocation2 + $0xa0] sm:$0xff] 0.0
    $region29: #{nlayer_discriminator_forward.8} parent=1 // pred_fallthru
      _
    %v80 = vld [vmem:[#allocation2] sm:$0xff]
    %v81 = vld [vmem:[#allocation2 + $0x8] sm:$0xff]
    %v82 = vld [vmem:[#allocation2 + $0x10] sm:$0xff]
    %v83 = vld [vmem:[#allocation2 + $0x18] sm:$0xff]
    %v84 = vld [vmem:[#allocation2 + $0x20] sm:$0xff]
    %v85 = vld [vmem:[#allocation2 + $0x28] sm:$0xff]
    %v86 = vld [vmem:[#allocation2 + $0x30] sm:$0xff]
    %v87 = vld [vmem:[#allocation2 + $0x38] sm:$0xff]
    %v88 = vld [vmem:[#allocation2 + $0x40] sm:$0xff]
    %v89 = vld [vmem:[#allocation2 + $0x48] sm:$0xff]
    %v90 = vld [vmem:[#allocation2 + $0x50] sm:$0xff]
    %v91 = vld [vmem:[#allocation2 + $0x58] sm:$0xff]
    %v92 = vld [vmem:[#allocation2 + $0x60] sm:$0xff]
    %v93 = vld [vmem:[#allocation2 + $0x68] sm:$0xff]
    %v94 = vld [vmem:[#allocation2 + $0x70] sm:$0xff]
    %v95 = vld [vmem:[#allocation2 + $0x78] sm:$0xff]
    %v96 = vld [vmem:[#allocation2 + $0x80] sm:$0xff]
    %v97 = vld [vmem:[#allocation2 + $0x88] sm:$0xff]
    %v98 = vld [vmem:[#allocation2 + $0x90] sm:$0xff]
    %v99 = vld [vmem:[#allocation2 + $0x98] sm:$0xff]
    %v100 = vld [vmem:[#allocation2 + $0xa0] sm:$0xff]
    %v101 = vld [vmem:[#allocation3] sm:$0xf]
    %v102 = vld [vmem:[#allocation3 + $0x4] sm:$0xf]
    %v103 = vld [vmem:[#allocation3 + $0x8] sm:$0xf]
    %v104 = vld [vmem:[#allocation3 + $0xc] sm:$0xf]
    %v105 = vld [vmem:[#allocation3 + $0x10] sm:$0xf]
    %v106 = vld [vmem:[#allocation3 + $0x14] sm:$0xf]
    %v107 = vld [vmem:[#allocation3 + $0x18] sm:$0xf]
    %v108 = vld [vmem:[#allocation3 + $0x1c] sm:$0xf]
    %v109 = vld [vmem:[#allocation3 + $0x20] sm:$0xf]
    %v110 = vld [vmem:[#allocation3 + $0x24] sm:$0xf]
    %v111 = vld [vmem:[#allocation3 + $0x28] sm:$0xf]
    %v112 = vld [vmem:[#allocation3 + $0x2c] sm:$0xf]
    %v113 = vld [vmem:[#allocation3 + $0x30] sm:$0xf]
    %v114 = vld [vmem:[#allocation3 + $0x34] sm:$0xf]
    %v115 = vld [vmem:[#allocation3 + $0x38] sm:$0xf]
    %v116 = vld [vmem:[#allocation3 + $0x3c] sm:$0xf]
    %v117 = vld [vmem:[#allocation3 + $0x40] sm:$0xf]
    %v118 = vld [vmem:[#allocation3 + $0x44] sm:$0xf]
    %v119 = vld [vmem:[#allocation3 + $0x48] sm:$0xf]
    %v120 = vld [vmem:[#allocation3 + $0x4c] sm:$0xf]
    %v121 = vld [vmem:[#allocation3 + $0x50] sm:$0xf]
    %v122 = vld [vmem:[#allocation6] sm:$0xf]
    %v123 = vld [vmem:[#allocation6 + $0x4] sm:$0xf]
    %v124 = vld [vmem:[#allocation6 + $0x8] sm:$0xf]
    %v125 = vld [vmem:[#allocation6 + $0xc] sm:$0xf]
    %v126 = vld [vmem:[#allocation6 + $0x10] sm:$0xf]
    %v127 = vld [vmem:[#allocation6 + $0x14] sm:$0xf]
    %v128 = vld [vmem:[#allocation6 + $0x18] sm:$0xf]
    %v129 = vld [vmem:[#allocation6 + $0x1c] sm:$0xf]
    %v130 = vld [vmem:[#allocation6 + $0x20] sm:$0xf]
    %v131 = vld [vmem:[#allocation6 + $0x24] sm:$0xf]
    %v132 = vld [vmem:[#allocation6 + $0x28] sm:$0xf]
    %v133 = vld [vmem:[#allocation6 + $0x2c] sm:$0xf]
    %v134 = vld [vmem:[#allocation6 + $0x30] sm:$0xf]
    %v135 = vld [vmem:[#allocation6 + $0x34] sm:$0xf]
    %v136 = vld [vmem:[#allocation6 + $0x38] sm:$0xf]
    %v137 = vld [vmem:[#allocation6 + $0x3c] sm:$0xf]
    %v159 = vunpack.c.l.b16 %v101
    %v160 = vunpack.c.l.b16 %v102
    %v161 = vunpack.c.l.b16 %v103
    %v162 = vunpack.c.l.b16 %v104
    %v163 = vunpack.c.l.b16 %v105
    %v164 = vunpack.c.l.b16 %v106
    %v165 = vunpack.c.l.b16 %v107
    %v166 = vunpack.c.l.b16 %v108
    %v167 = vunpack.c.l.b16 %v109
    %v168 = vunpack.c.l.b16 %v110
    %v169 = vunpack.c.l.b16 %v111
    %v170 = vunpack.c.l.b16 %v112
    %v171 = vunpack.c.l.b16 %v113
    %v172 = vunpack.c.l.b16 %v114
    %v173 = vunpack.c.l.b16 %v115
    %v174 = vunpack.c.l.b16 %v116
    %v175 = vunpack.c.l.b16 %v117
    %v176 = vunpack.c.l.b16 %v118
    %v177 = vunpack.c.l.b16 %v119
    %v178 = vunpack.c.l.b16 %v120
    %v179 = vunpack.c.l.b16 %v121
    %v180 = vpack.c.b16 %v160, %v159
    %v181 = vpack.c.b16 %v162, %v161
    %v182 = vpack.c.b16 %v164, %v163
    %v183 = vpack.c.b16 %v166, %v165
    %v184 = vpack.c.b16 %v168, %v167
    %v185 = vpack.c.b16 %v170, %v169
    %v186 = vpack.c.b16 %v172, %v171
    %v187 = vpack.c.b16 %v174, %v173
    %v188 = vpack.c.b16 %v176, %v175
    %v189 = vpack.c.b16 %v178, %v177
    %v190 = vpack.c.b16 %v179, %v179
    %v218 = vunpack.c.l.b16 %v122
    %v219 = vunpack.c.l.b16 %v123
    %v220 = vunpack.c.l.b16 %v124
    %v221 = vunpack.c.l.b16 %v125
    %v222 = vunpack.c.l.b16 %v126
    %v223 = vunpack.c.l.b16 %v127
    %v224 = vunpack.c.l.b16 %v128
    %v225 = vunpack.c.l.b16 %v129
    %v226 = vunpack.c.l.b16 %v130
    %v227 = vunpack.c.l.b16 %v131
    %v228 = vunpack.c.l.b16 %v132
    %v229 = vunpack.c.l.b16 %v133
    %v230 = vunpack.c.l.b16 %v134
    %v231 = vunpack.c.l.b16 %v135
    %v232 = vunpack.c.l.b16 %v136
    %v233 = vunpack.c.l.b16 %v137
    %v234 = vpack.c.b16 %v219, %v218
    %v235 = vpack.c.b16 %v221, %v220
    %v236 = vpack.c.b16 %v223, %v222
    %v237 = vpack.c.b16 %v225, %v224
    %v238 = vpack.c.b16 %v227, %v226
    %v239 = vpack.c.b16 %v229, %v228
    %v240 = vpack.c.b16 %v231, %v230
    %v241 = vpack.c.b16 %v233, %v232
    %250 = vmatprep.subr.bf16.mxu0 0
    %251 = vmatpush1.bf16.msra.mxu0 %v234
    %252 = vmatprep.subr.bf16.mxu0 0
    %253 = vmatpush1.bf16.msra.mxu0 %v235
    %254 = vmatprep.subr.bf16.mxu0 0
    %255 = vmatpush1.bf16.msra.mxu0 %v236
    %256 = vmatprep.subr.bf16.mxu0 0
    %257 = vmatpush1.bf16.msra.mxu0 %v237
    %258 = vmatprep.subr.bf16.mxu0 0
    %259 = vmatpush1.bf16.msra.mxu0 %v238
    %260 = vmatprep.subr.bf16.mxu0 0
    %261 = vmatpush1.bf16.msra.mxu0 %v239
    %262 = vmatprep.subr.bf16.mxu0 0
    %263 = vmatpush1.bf16.msra.mxu0 %v240
    %264 = vmatprep.subr.bf16.mxu0 0
    %265 = vmatpush1.bf16.msra.mxu0 %v241
    %266 = vmatprep.subr.bf16.mxu0 0
    %267 = vmatpush1.bf16.msra.mxu0 0
    %268 = vmatprep.subr.bf16.mxu0 0
    %269 = vmatpush1.bf16.msra.mxu0 0
    %270 = vmatprep.subr.bf16.mxu0 0
    %271 = vmatpush1.bf16.msra.mxu0 0
    %272 = vmatprep.subr.bf16.mxu0 0
    %273 = vmatpush1.bf16.msra.mxu0 0
    %274 = vmatprep.subr.bf16.mxu0 0
    %275 = vmatpush1.bf16.msra.mxu0 0
    %276 = vmatprep.subr.bf16.mxu0 0
    %277 = vmatpush1.bf16.msra.mxu0 0
    %278 = vmatprep.subr.bf16.mxu0 0
    %279 = vmatpush1.bf16.msra.mxu0 0
    %280 = vmatprep.subr.bf16.mxu0 0
    %281 = vmatpush1.bf16.msra.mxu0 0
    %282 = vmatprep.mubr.bf16.mxu0 0
    %283 = vmatmul.mubr.bf16.gmra.mrb[0].mxu0 %v180
    %v284 = vpop.f32.mrb[0].mxu0
    %v285 = vadd.f32 0.0, %v284
    %v286 = vpop.f32.mrb[0].mxu0
    %v287 = vpop.f32.mrb[0].mxu0
    %v288 = vadd.f32 0.0, %v287
    %v289 = vpop.f32.mrb[0].mxu0
    %290 = vmatprep.mubr.bf16.mxu0 0
    %291 = vmatmul.mubr.bf16.gmra.mrb[0].mxu0 %v181
    %v292 = vpop.f32.mrb[0].mxu0
    %v293 = vadd.f32 0.0, %v292
    %v294 = vpop.f32.mrb[0].mxu0
    %v295 = vpop.f32.mrb[0].mxu0
    %v296 = vadd.f32 0.0, %v295
    %v297 = vpop.f32.mrb[0].mxu0
    %298 = vmatprep.mubr.bf16.mxu0 0
    %299 = vmatmul.mubr.bf16.gmra.mrb[0].mxu0 %v182
    %v300 = vpop.f32.mrb[0].mxu0
    %v301 = vadd.f32 0.0, %v300
    %v302 = vpop.f32.mrb[0].mxu0
    %v303 = vpop.f32.mrb[0].mxu0
    %v304 = vadd.f32 0.0, %v303
    %v305 = vpop.f32.mrb[0].mxu0
    %306 = vmatprep.mubr.bf16.mxu0 0
    %307 = vmatmul.mubr.bf16.gmra.mrb[0].mxu0 %v183
    %v308 = vpop.f32.mrb[0].mxu0
    %v309 = vadd.f32 0.0, %v308
    %v310 = vpop.f32.mrb[0].mxu0
    %v311 = vpop.f32.mrb[0].mxu0
    %v312 = vadd.f32 0.0, %v311
    %v313 = vpop.f32.mrb[0].mxu0
    %314 = vmatprep.mubr.bf16.mxu0 0
    %315 = vmatmul.mubr.bf16.gmra.mrb[0].mxu0 %v184
    %v316 = vpop.f32.mrb[0].mxu0
    %v317 = vadd.f32 0.0, %v316
    %v318 = vpop.f32.mrb[0].mxu0
    %v319 = vpop.f32.mrb[0].mxu0
    %v320 = vadd.f32 0.0, %v319
    %v321 = vpop.f32.mrb[0].mxu0
    %322 = vmatprep.mubr.bf16.mxu0 0
    %323 = vmatmul.mubr.bf16.gmra.mrb[0].mxu0 %v185
    %v324 = vpop.f32.mrb[0].mxu0
    %v325 = vadd.f32 0.0, %v324
    %v326 = vpop.f32.mrb[0].mxu0
    %v327 = vpop.f32.mrb[0].mxu0
    %v328 = vadd.f32 0.0, %v327
    %v329 = vpop.f32.mrb[0].mxu0
    %330 = vmatprep.mubr.bf16.mxu0 0
    %331 = vmatmul.mubr.bf16.gmra.mrb[0].mxu0 %v186
    %v332 = vpop.f32.mrb[0].mxu0
    %v333 = vadd.f32 0.0, %v332
    %v334 = vpop.f32.mrb[0].mxu0
    %v335 = vpop.f32.mrb[0].mxu0
    %v336 = vadd.f32 0.0, %v335
    %v337 = vpop.f32.mrb[0].mxu0
    %338 = vmatprep.mubr.bf16.mxu0 0
    %339 = vmatmul.mubr.bf16.gmra.mrb[0].mxu0 %v187
    %v340 = vpop.f32.mrb[0].mxu0
    %v341 = vadd.f32 0.0, %v340
    %v342 = vpop.f32.mrb[0].mxu0
    %v343 = vpop.f32.mrb[0].mxu0
    %v344 = vadd.f32 0.0, %v343
    %v345 = vpop.f32.mrb[0].mxu0
    %346 = vmatprep.mubr.bf16.mxu0 0
    %347 = vmatmul.mubr.bf16.gmra.mrb[0].mxu0 %v188
    %v348 = vpop.f32.mrb[0].mxu0
    %v349 = vadd.f32 0.0, %v348
    %v350 = vpop.f32.mrb[0].mxu0
    %v351 = vpop.f32.mrb[0].mxu0
    %v352 = vadd.f32 0.0, %v351
    %v353 = vpop.f32.mrb[0].mxu0
    %354 = vmatprep.mubr.bf16.mxu0 0
    %355 = vmatmul.mubr.bf16.gmra.mrb[0].mxu0 %v189
    %v356 = vpop.f32.mrb[0].mxu0
    %v357 = vadd.f32 0.0, %v356
    %v358 = vpop.f32.mrb[0].mxu0
    %v359 = vpop.f32.mrb[0].mxu0
    %v360 = vadd.f32 0.0, %v359
    %v361 = vpop.f32.mrb[0].mxu0
    %362 = vmatprep.mubr.bf16.mxu0 0
    %363 = vmatmul.mubr.bf16.gmra.mrb[0].mxu0 %v190
    %v364 = vpop.f32.mrb[0].mxu0
    %v365 = vadd.f32 0.0, %v364
    %v366 = vpop.f32.mrb[0].mxu0
    %v367 = vpop.f32.mrb[0].mxu0
    %v368 = vpop.f32.mrb[0].mxu0
    %369 = vdwg.mxu0
    %v370 = vadd.f32 %v80, %v285
    %v371 = vadd.f32 %v81, %v288
    %v372 = vadd.f32 %v82, %v293
    %v373 = vadd.f32 %v83, %v296
    %v374 = vadd.f32 %v84, %v301
    %v375 = vadd.f32 %v85, %v304
    %v376 = vadd.f32 %v86, %v309
    %v377 = vadd.f32 %v87, %v312
    %v378 = vadd.f32 %v88, %v317
    %v379 = vadd.f32 %v89, %v320
    %v380 = vadd.f32 %v90, %v325
    %v381 = vadd.f32 %v91, %v328
    %v382 = vadd.f32 %v92, %v333
    %v383 = vadd.f32 %v93, %v336
    %v384 = vadd.f32 %v94, %v341
    %v385 = vadd.f32 %v95, %v344
    %v386 = vadd.f32 %v96, %v349
    %v387 = vadd.f32 %v97, %v352
    %v388 = vadd.f32 %v98, %v357
    %v389 = vadd.f32 %v99, %v360
    %v390 = vadd.f32 %v100, %v365
    %391 = vst [vmem:[#allocation2] sm:$0xff] %v370
    %392 = vst [vmem:[#allocation2 + $0x8] sm:$0xff] %v371
    %393 = vst [vmem:[#allocation2 + $0x10] sm:$0xff] %v372
    %394 = vst [vmem:[#allocation2 + $0x18] sm:$0xff] %v373
    %395 = vst [vmem:[#allocation2 + $0x20] sm:$0xff] %v374
    %396 = vst [vmem:[#allocation2 + $0x28] sm:$0xff] %v375
    %397 = vst [vmem:[#allocation2 + $0x30] sm:$0xff] %v376
    %398 = vst [vmem:[#allocation2 + $0x38] sm:$0xff] %v377
    %399 = vst [vmem:[#allocation2 + $0x40] sm:$0xff] %v378
    %400 = vst [vmem:[#allocation2 + $0x48] sm:$0xff] %v379
    %401 = vst [vmem:[#allocation2 + $0x50] sm:$0xff] %v380
    %402 = vst [vmem:[#allocation2 + $0x58] sm:$0xff] %v381
    %403 = vst [vmem:[#allocation2 + $0x60] sm:$0xff] %v382
    %404 = vst [vmem:[#allocation2 + $0x68] sm:$0xff] %v383
    %405 = vst [vmem:[#allocation2 + $0x70] sm:$0xff] %v384
    %406 = vst [vmem:[#allocation2 + $0x78] sm:$0xff] %v385
    %407 = vst [vmem:[#allocation2 + $0x80] sm:$0xff] %v386
    %408 = vst [vmem:[#allocation2 + $0x88] sm:$0xff] %v387
    %409 = vst [vmem:[#allocation2 + $0x90] sm:$0xff] %v388
    %410 = vst [vmem:[#allocation2 + $0x98] sm:$0xff] %v389
    %411 = vst [vmem:[#allocation2 + $0xa0] sm:$0xff] %v390
    // Predicated region
    $region30: #{nlayer_discriminator_forward.8} parent=1 // pred_check
      %p412 = pneg %p55
    $region31: #{nlayer_discriminator_forward.8} parent=1 // pred_check_branch
      %414 = sbr.rel (%p412) target = $region33
    $region32: #{nlayer_discriminator_forward.8} parent=1 // pred_region
      %v415 = vld [vmem:[#allocation2] sm:$0xff]
      %v416 = vld [vmem:[#allocation2 + $0x8] sm:$0xff]
      %v417 = vld [vmem:[#allocation2 + $0x10] sm:$0xff]
      %v418 = vld [vmem:[#allocation2 + $0x18] sm:$0xff]
      %v419 = vld [vmem:[#allocation2 + $0x20] sm:$0xff]
      %v420 = vld [vmem:[#allocation2 + $0x28] sm:$0xff]
      %v421 = vld [vmem:[#allocation2 + $0x30] sm:$0xff]
      %v422 = vld [vmem:[#allocation2 + $0x38] sm:$0xff]
      %v423 = vld [vmem:[#allocation2 + $0x40] sm:$0xff]
      %v424 = vld [vmem:[#allocation2 + $0x48] sm:$0xff]
      %v425 = vld [vmem:[#allocation2 + $0x50] sm:$0xff]
      %v426 = vld [vmem:[#allocation2 + $0x58] sm:$0xff]
      %v427 = vld [vmem:[#allocation2 + $0x60] sm:$0xff]
      %v428 = vld [vmem:[#allocation2 + $0x68] sm:$0xff]
      %v429 = vld [vmem:[#allocation2 + $0x70] sm:$0xff]
      %v430 = vld [vmem:[#allocation2 + $0x78] sm:$0xff]
      %v431 = vld [vmem:[#allocation2 + $0x80] sm:$0xff]
      %v432 = vld [vmem:[#allocation2 + $0x88] sm:$0xff]
      %v433 = vld [vmem:[#allocation2 + $0x90] sm:$0xff]
      %v434 = vld [vmem:[#allocation2 + $0x98] sm:$0xff]
      %v435 = vld [vmem:[#allocation2 + $0xa0] sm:$0xff]
      %v436 = vld [vmem:[#allocation8] sm:$0x1]
      %v438 = vlaneseq
      %v439 = vshrl.u32 %v438, 7
      %v440 = vsub.s32 0, %v439
      %v441 = vrot.slane %v436, %v440
      %v443 = vadd.f32 %v415, %v441
      %v444 = vadd.f32 %v416, %v441
      %v445 = vadd.f32 %v417, %v441
      %v446 = vadd.f32 %v418, %v441
      %v447 = vadd.f32 %v419, %v441
      %v448 = vadd.f32 %v420, %v441
      %v449 = vadd.f32 %v421, %v441
      %v450 = vadd.f32 %v422, %v441
      %v451 = vadd.f32 %v423, %v441
      %v452 = vadd.f32 %v424, %v441
      %v453 = vadd.f32 %v425, %v441
      %v454 = vadd.f32 %v426, %v441
      %v455 = vadd.f32 %v427, %v441
      %v456 = vadd.f32 %v428, %v441
      %v457 = vadd.f32 %v429, %v441
      %v458 = vadd.f32 %v430, %v441
      %v459 = vadd.f32 %v431, %v441
      %v460 = vadd.f32 %v432, %v441
      %v461 = vadd.f32 %v433, %v441
      %v462 = vadd.f32 %v434, %v441
      %v463 = vadd.f32 %v435, %v441
      %vm464 = vcmp.ge.f32.partialorder %v443, 0.0
      %vm465 = vcmp.ge.f32.partialorder %v444, 0.0
      %vm466 = vcmp.ge.f32.partialorder %v445, 0.0
      %vm467 = vcmp.ge.f32.partialorder %v446, 0.0
      %vm468 = vcmp.ge.f32.partialorder %v447, 0.0
      %vm469 = vcmp.ge.f32.partialorder %v448, 0.0
      %vm470 = vcmp.ge.f32.partialorder %v449, 0.0
      %vm471 = vcmp.ge.f32.partialorder %v450, 0.0
      %vm472 = vcmp.ge.f32.partialorder %v451, 0.0
      %vm473 = vcmp.ge.f32.partialorder %v452, 0.0
      %vm474 = vcmp.ge.f32.partialorder %v453, 0.0
      %vm475 = vcmp.ge.f32.partialorder %v454, 0.0
      %vm476 = vcmp.ge.f32.partialorder %v455, 0.0
      %vm477 = vcmp.ge.f32.partialorder %v456, 0.0
      %vm478 = vcmp.ge.f32.partialorder %v457, 0.0
      %vm479 = vcmp.ge.f32.partialorder %v458, 0.0
      %vm480 = vcmp.ge.f32.partialorder %v459, 0.0
      %vm481 = vcmp.ge.f32.partialorder %v460, 0.0
      %vm482 = vcmp.ge.f32.partialorder %v461, 0.0
      %vm483 = vcmp.ge.f32.partialorder %v462, 0.0
      %vm484 = vcmp.ge.f32.partialorder %v463, 0.0
      %v485 = vmul.f32 %v443, 0.2
      %v486 = vmul.f32 %v444, 0.2
      %v487 = vmul.f32 %v445, 0.2
      %v488 = vmul.f32 %v446, 0.2
      %v489 = vmul.f32 %v447, 0.2
      %v490 = vmul.f32 %v448, 0.2
      %v491 = vmul.f32 %v449, 0.2
      %v492 = vmul.f32 %v450, 0.2
      %v493 = vmul.f32 %v451, 0.2
      %v494 = vmul.f32 %v452, 0.2
      %v495 = vmul.f32 %v453, 0.2
      %v496 = vmul.f32 %v454, 0.2
      %v497 = vmul.f32 %v455, 0.2
      %v498 = vmul.f32 %v456, 0.2
      %v499 = vmul.f32 %v457, 0.2
      %v500 = vmul.f32 %v458, 0.2
      %v501 = vmul.f32 %v459, 0.2
      %v502 = vmul.f32 %v460, 0.2
      %v503 = vmul.f32 %v461, 0.2
      %v504 = vmul.f32 %v462, 0.2
      %v505 = vmul.f32 %v463, 0.2
      %v506 = vsel %vm464, %v443, %v485
      %v507 = vsel %vm465, %v444, %v486
      %v508 = vsel %vm466, %v445, %v487
      %v509 = vsel %vm467, %v446, %v488
      %v510 = vsel %vm468, %v447, %v489
      %v511 = vsel %vm469, %v448, %v490
      %v512 = vsel %vm470, %v449, %v491
      %v513 = vsel %vm471, %v450, %v492
      %v514 = vsel %vm472, %v451, %v493
      %v515 = vsel %vm473, %v452, %v494
      %v516 = vsel %vm474, %v453, %v495
      %v517 = vsel %vm475, %v454, %v496
      %v518 = vsel %vm476, %v455, %v497
      %v519 = vsel %vm477, %v456, %v498
      %v520 = vsel %vm478, %v457, %v499
      %v521 = vsel %vm479, %v458, %v500
      %v522 = vsel %vm480, %v459, %v501
      %v523 = vsel %vm481, %v460, %v502
      %v524 = vsel %vm482, %v461, %v503
      %v525 = vsel %vm483, %v462, %v504
      %v526 = vsel %vm484, %v463, %v505
      %v527 = vpack.c.bf16 %v507, %v506
      %v528 = vpack.c.bf16 %v509, %v508
      %v529 = vpack.c.bf16 %v511, %v510
      %v530 = vpack.c.bf16 %v513, %v512
      %v531 = vpack.c.bf16 %v515, %v514
      %v532 = vpack.c.bf16 %v517, %v516
      %v533 = vpack.c.bf16 %v519, %v518
      %v534 = vpack.c.bf16 %v521, %v520
      %v535 = vpack.c.bf16 %v523, %v522
      %v536 = vpack.c.bf16 %v525, %v524
      %v537 = vpack.c.bf16 %v526, %v526
      %v549 = vunpack.c.l.b16 %v527
      %v550 = vunpack.c.h.b16 %v527
      %v551 = vunpack.c.l.b16 %v528
      %v552 = vunpack.c.h.b16 %v528
      %v553 = vunpack.c.l.b16 %v529
      %v554 = vunpack.c.h.b16 %v529
      %v555 = vunpack.c.l.b16 %v530
      %v556 = vunpack.c.h.b16 %v530
      %v557 = vunpack.c.l.b16 %v531
      %v558 = vunpack.c.h.b16 %v531
      %v559 = vunpack.c.l.b16 %v532
      %v560 = vunpack.c.h.b16 %v532
      %v561 = vunpack.c.l.b16 %v533
      %v562 = vunpack.c.h.b16 %v533
      %v563 = vunpack.c.l.b16 %v534
      %v564 = vunpack.c.h.b16 %v534
      %v565 = vunpack.c.l.b16 %v535
      %v566 = vunpack.c.h.b16 %v535
      %v567 = vunpack.c.l.b16 %v536
      %v568 = vunpack.c.h.b16 %v536
      %v569 = vunpack.c.l.b16 %v537
      %v570 = vpack.c.b16 %v549, %v549
      %v571 = vpack.c.b16 %v550, %v550
      %v572 = vpack.c.b16 %v551, %v551
      %v573 = vpack.c.b16 %v552, %v552
      %v574 = vpack.c.b16 %v553, %v553
      %v575 = vpack.c.b16 %v554, %v554
      %v576 = vpack.c.b16 %v555, %v555
      %v577 = vpack.c.b16 %v556, %v556
      %v578 = vpack.c.b16 %v557, %v557
      %v579 = vpack.c.b16 %v558, %v558
      %v580 = vpack.c.b16 %v559, %v559
      %v581 = vpack.c.b16 %v560, %v560
      %v582 = vpack.c.b16 %v561, %v561
      %v583 = vpack.c.b16 %v562, %v562
      %v584 = vpack.c.b16 %v563, %v563
      %v585 = vpack.c.b16 %v564, %v564
      %v586 = vpack.c.b16 %v565, %v565
      %v587 = vpack.c.b16 %v566, %v566
      %v588 = vpack.c.b16 %v567, %v567
      %v589 = vpack.c.b16 %v568, %v568
      %v590 = vpack.c.b16 %v569, %v569
      %612 = vst [vmem:[#allocation9] sm:$0xf] %v570
      %613 = vst [vmem:[#allocation9 + $0x4] sm:$0xf] %v571
      %614 = vst [vmem:[#allocation9 + $0x8] sm:$0xf] %v572
      %615 = vst [vmem:[#allocation9 + $0xc] sm:$0xf] %v573
      %616 = vst [vmem:[#allocation9 + $0x10] sm:$0xf] %v574
      %617 = vst [vmem:[#allocation9 + $0x14] sm:$0xf] %v575
      %618 = vst [vmem:[#allocation9 + $0x18] sm:$0xf] %v576
      %619 = vst [vmem:[#allocation9 + $0x1c] sm:$0xf] %v577
      %620 = vst [vmem:[#allocation9 + $0x20] sm:$0xf] %v578
      %621 = vst [vmem:[#allocation9 + $0x24] sm:$0xf] %v579
      %622 = vst [vmem:[#allocation9 + $0x28] sm:$0xf] %v580
      %623 = vst [vmem:[#allocation9 + $0x2c] sm:$0xf] %v581
      %624 = vst [vmem:[#allocation9 + $0x30] sm:$0xf] %v582
      %625 = vst [vmem:[#allocation9 + $0x34] sm:$0xf] %v583
      %626 = vst [vmem:[#allocation9 + $0x38] sm:$0xf] %v584
      %627 = vst [vmem:[#allocation9 + $0x3c] sm:$0xf] %v585
      %628 = vst [vmem:[#allocation9 + $0x40] sm:$0xf] %v586
      %629 = vst [vmem:[#allocation9 + $0x44] sm:$0xf] %v587
      %630 = vst [vmem:[#allocation9 + $0x48] sm:$0xf] %v588
      %631 = vst [vmem:[#allocation9 + $0x4c] sm:$0xf] %v589
      %632 = vst [vmem:[#allocation9 + $0x50] sm:$0xf] %v590
    $region33: #{nlayer_discriminator_forward.8} parent=1 // pred_fallthru
      _
    // Predicated region
    $region34: #{nlayer_discriminator_forward.8} parent=1 // pred_check
      _
    $region35: #{nlayer_discriminator_forward.8} parent=1 // pred_check_branch
      %634 = sbr.rel (0) target = $region37
    $region36: #{nlayer_discriminator_forward.8} parent=1 // pred_region
      %s636 = ssub.s32 1344, 1344
      %637 = vsyncadd [#allocation5], %s636
      %s638 = sshll.u32 [#allocation9], 4
      %s639 = int_to_ptr.vmem [resolvable:$true] %s638
      %644 = dma.vmem_to_hbm [thread:$0]  %s639, 1344, %s3, [#allocation5], 64, 64, 4
    $region37: #{nlayer_discriminator_forward.8} parent=1 // pred_fallthru
      _
    // Predicated region
    $region38: #{nlayer_discriminator_forward.8} parent=1 // pred_check
      _
    $region39: #{nlayer_discriminator_forward.8} parent=1 // pred_check_branch
      %646 = sbr.rel (0) target = $region41
    $region40: #{nlayer_discriminator_forward.8} parent=1 // pred_region
      %647 = dma.done [#allocation5], 1344
    $region41: #{nlayer_discriminator_forward.8} parent=1 // pred_fallthru
      _
    %648 = vsyncpa [#allocation4], 1
    %649 = vsyncpa [#allocation7], 1
    %650 = vsyncpa [#allocation5], 1

// kernel: nlayer_discriminator_forward.9
$region0: #{nlayer_discriminator_forward.9}
  #allocation0 [shape = 'u32[]', space=smem, size = 0x4, offset = 0x4, fixed_abs, tag = 'smem constant byte address 0x4 - core index']
  #allocation1 [shape = 'u32[144,128]{1,0:T(1,128)}', space=vmem, size = 0x12000, scoped, tag = 'internal scratch']
  #allocation2 [shape = 'f32[56,128]{1,0:T(8,128)}', space=vmem, size = 0x7000, scoped, tag = 'scratch operand']
  %s0 = inlined_call_operand.hbm [shape: bf16[56,256], index: 0, kind: input, shape index: {}]
  %s1 = inlined_call_operand.hbm [shape: bf16[256,128], index: 1, kind: input, shape index: {}]
  %s2 = inlined_call_operand.hbm [shape: bf16[56,128], index: 2, kind: output, shape index: {0}]
  %s3 = inlined_call_operand.hbm [shape: f32[8,128], index: 3, kind: output, shape index: {1}]
  %4 = xla_tuple %s2, %s3
  %s5 = sld [smem:[#allocation0]]
  $region42: #{nlayer_discriminator_forward.9} parent=0
    _
  %s7 = ssub.s32 1, %s5
  %s8 = scalar_select 0, %s7, %s5
  $region1: #{nlayer_discriminator_forward.9} parent=0
    #allocation3 [shape = 'u8[28672]{0}', space=vmem, size = 0x7000, scoped, tag = 'input window, operand 0, single buffered']
    #allocation4 [shape = 's32[1]{0}', space=sflag, size = 0x4, scoped, tag = 'scoped memory for nlayer_discriminator_forward.9']
    #allocation5 [shape = 's32[1]{0}', space=sflag, size = 0x4, scoped, tag = 'scoped memory for nlayer_discriminator_forward.9']
    #allocation6 [shape = 'u8[65536]{0}', space=vmem, size = 0x10000, scoped, tag = 'input window, operand 1, single buffered']
    #allocation7 [shape = 's32[1]{0}', space=sflag, size = 0x4, scoped, tag = 'scoped memory for nlayer_discriminator_forward.9']
    #allocation8 [shape = 'u8[14336]{0}', space=vmem, size = 0x3800, scoped, tag = 'output window, operand 0, single buffered']
    #allocation9 [shape = 'u8[4096]{0}', space=vmem, size = 0x1000, scoped, tag = 'output window, operand 1, single buffered']
    #allocation10 [shape = 's32[1]{0}', space=sflag, size = 0x4, scoped, tag = 'scoped memory for nlayer_discriminator_forward.9']
    %9 = vsyncpa [#allocation4], 0
    %10 = vsyncpa [#allocation7], 0
    %11 = vsyncpa [#allocation5], 0
    %12 = vsyncpa [#allocation10], 0
    // Predicated region
    $region2: #{nlayer_discriminator_forward.9} parent=1 // pred_check
      _
    $region3: #{nlayer_discriminator_forward.9} parent=1 // pred_check_branch
      %14 = sbr.rel (0) target = $region5
    $region4: #{nlayer_discriminator_forward.9} parent=1 // pred_region
      %s16 = ssub.s32 896, 896
      %17 = vsyncadd [#allocation4], %s16
      %s18 = sshll.u32 [#allocation3], 4
      %s19 = int_to_ptr.vmem [resolvable:$true] %s18
      %24 = dma.hbm_to_vmem [thread:$0]  %s0, 896, %s19, [#allocation4], 128, 128, 8
    $region5: #{nlayer_discriminator_forward.9} parent=1 // pred_fallthru
      _
    // Predicated region
    $region6: #{nlayer_discriminator_forward.9} parent=1 // pred_check
      _
    $region7: #{nlayer_discriminator_forward.9} parent=1 // pred_check_branch
      %26 = sbr.rel (0) target = $region9
    $region8: #{nlayer_discriminator_forward.9} parent=1 // pred_region
      %s28 = ssub.s32 2048, 2048
      %29 = vsyncadd [#allocation7], %s28
      %s30 = sshll.u32 [#allocation6], 4
      %s31 = int_to_ptr.vmem [resolvable:$true] %s30
      %36 = dma.hbm_to_vmem [thread:$0]  %s1, 2048, %s31, [#allocation7], 64, 64, 4
    $region9: #{nlayer_discriminator_forward.9} parent=1 // pred_fallthru
      _
    // Predicated region
    $region10: #{nlayer_discriminator_forward.9} parent=1 // pred_check
      _
    $region11: #{nlayer_discriminator_forward.9} parent=1 // pred_check_branch
      %38 = sbr.rel (0) target = $region13
    $region12: #{nlayer_discriminator_forward.9} parent=1 // pred_region
      %39 = dma.done [#allocation4], 896
    $region13: #{nlayer_discriminator_forward.9} parent=1 // pred_fallthru
      _
    // Predicated region
    $region14: #{nlayer_discriminator_forward.9} parent=1 // pred_check
      _
    $region15: #{nlayer_discriminator_forward.9} parent=1 // pred_check_branch
      %41 = sbr.rel (0) target = $region17
    $region16: #{nlayer_discriminator_forward.9} parent=1 // pred_region
      %42 = dma.done [#allocation7], 2048
    $region17: #{nlayer_discriminator_forward.9} parent=1 // pred_fallthru
      _
    %p44 = scmp.eq.s32.totalorder 0, 0
    // Predicated region
    $region18: #{nlayer_discriminator_forward.9} parent=1 // pred_check
      %p45 = pneg %p44
    $region19: #{nlayer_discriminator_forward.9} parent=1 // pred_check_branch
      %47 = sbr.rel (%p45) target = $region21
    $region20: #{nlayer_discriminator_forward.9} parent=1 // pred_region
      %48 = vst [vmem:[#allocation2] sm:$0xff] 0.0
      %49 = vst [vmem:[#allocation2 + $0x8] sm:$0xff] 0.0
      %50 = vst [vmem:[#allocation2 + $0x10] sm:$0xff] 0.0
      %51 = vst [vmem:[#allocation2 + $0x18] sm:$0xff] 0.0
      %52 = vst [vmem:[#allocation2 + $0x20] sm:$0xff] 0.0
      %53 = vst [vmem:[#allocation2 + $0x28] sm:$0xff] 0.0
      %54 = vst [vmem:[#allocation2 + $0x30] sm:$0xff] 0.0
    $region21: #{nlayer_discriminator_forward.9} parent=1 // pred_fallthru
      _
    %v55 = vld [vmem:[#allocation2] sm:$0xff]
    %v56 = vld [vmem:[#allocation2 + $0x8] sm:$0xff]
    %v57 = vld [vmem:[#allocation2 + $0x10] sm:$0xff]
    %v58 = vld [vmem:[#allocation2 + $0x18] sm:$0xff]
    %v59 = vld [vmem:[#allocation2 + $0x20] sm:$0xff]
    %v60 = vld [vmem:[#allocation2 + $0x28] sm:$0xff]
    %v61 = vld [vmem:[#allocation2 + $0x30] sm:$0xff]
    %v62 = vld [vmem:[#allocation3] sm:$0xff]
    %v63 = vld [vmem:[#allocation3 + $0x8] sm:$0xff]
    %v64 = vld [vmem:[#allocation3 + $0x10] sm:$0xff]
    %v65 = vld [vmem:[#allocation3 + $0x18] sm:$0xff]
    %v66 = vld [vmem:[#allocation3 + $0x20] sm:$0xff]
    %v67 = vld [vmem:[#allocation3 + $0x28] sm:$0xff]
    %v68 = vld [vmem:[#allocation3 + $0x30] sm:$0xff]
    %v69 = vld [vmem:[#allocation6] sm:$0xf]
    %v70 = vld [vmem:[#allocation6 + $0x4] sm:$0xf]
    %v71 = vld [vmem:[#allocation6 + $0x8] sm:$0xf]
    %v72 = vld [vmem:[#allocation6 + $0xc] sm:$0xf]
    %v73 = vld [vmem:[#allocation6 + $0x10] sm:$0xf]
    %v74 = vld [vmem:[#allocation6 + $0x14] sm:$0xf]
    %v75 = vld [vmem:[#allocation6 + $0x18] sm:$0xf]
    %v76 = vld [vmem:[#allocation6 + $0x1c] sm:$0xf]
    %v77 = vld [vmem:[#allocation6 + $0x20] sm:$0xf]
    %v78 = vld [vmem:[#allocation6 + $0x24] sm:$0xf]
    %v79 = vld [vmem:[#allocation6 + $0x28] sm:$0xf]
    %v80 = vld [vmem:[#allocation6 + $0x2c] sm:$0xf]
    %v81 = vld [vmem:[#allocation6 + $0x30] sm:$0xf]
    %v82 = vld [vmem:[#allocation6 + $0x34] sm:$0xf]
    %v83 = vld [vmem:[#allocation6 + $0x38] sm:$0xf]
    %v84 = vld [vmem:[#allocation6 + $0x3c] sm:$0xf]
    %v85 = vld [vmem:[#allocation6 + $0x40] sm:$0xf]
    %v86 = vld [vmem:[#allocation6 + $0x44] sm:$0xf]
    %v87 = vld [vmem:[#allocation6 + $0x48] sm:$0xf]
    %v88 = vld [vmem:[#allocation6 + $0x4c] sm:$0xf]
    %v89 = vld [vmem:[#allocation6 + $0x50] sm:$0xf]
    %v90 = vld [vmem:[#allocation6 + $0x54] sm:$0xf]
    %v91 = vld [vmem:[#allocation6 + $0x58] sm:$0xf]
    %v92 = vld [vmem:[#allocation6 + $0x5c] sm:$0xf]
    %v93 = vld [vmem:[#allocation6 + $0x60] sm:$0xf]
    %v94 = vld [vmem:[#allocation6 + $0x64] sm:$0xf]
    %v95 = vld [vmem:[#allocation6 + $0x68] sm:$0xf]
    %v96 = vld [vmem:[#allocation6 + $0x6c] sm:$0xf]
    %v97 = vld [vmem:[#allocation6 + $0x70] sm:$0xf]
    %v98 = vld [vmem:[#allocation6 + $0x74] sm:$0xf]
    %v99 = vld [vmem:[#allocation6 + $0x78] sm:$0xf]
    %v100 = vld [vmem:[#allocation6 + $0x7c] sm:$0xf]
    %v108 = vunpack.c.l.b16 %v62
    %v109 = vunpack.c.h.b16 %v62
    %v110 = vunpack.c.l.b16 %v63
    %v111 = vunpack.c.h.b16 %v63
    %v112 = vunpack.c.l.b16 %v64
    %v113 = vunpack.c.h.b16 %v64
    %v114 = vunpack.c.l.b16 %v65
    %v115 = vunpack.c.h.b16 %v65
    %v116 = vunpack.c.l.b16 %v66
    %v117 = vunpack.c.h.b16 %v66
    %v118 = vunpack.c.l.b16 %v67
    %v119 = vunpack.c.h.b16 %v67
    %v120 = vunpack.c.l.b16 %v68
    %v121 = vunpack.c.h.b16 %v68
    %v122 = vpack.c.b16 %v110, %v108
    %v123 = vpack.c.b16 %v111, %v109
    %v124 = vpack.c.b16 %v114, %v112
    %v125 = vpack.c.b16 %v115, %v113
    %v126 = vpack.c.b16 %v118, %v116
    %v127 = vpack.c.b16 %v119, %v117
    %v128 = vpack.c.b16 %v120, %v120
    %v129 = vpack.c.b16 %v121, %v121
    %v170 = vunpack.c.l.b16 %v69
    %v171 = vunpack.c.l.b16 %v70
    %v172 = vunpack.c.l.b16 %v71
    %v173 = vunpack.c.l.b16 %v72
    %v174 = vunpack.c.l.b16 %v73
    %v175 = vunpack.c.l.b16 %v74
    %v176 = vunpack.c.l.b16 %v75
    %v177 = vunpack.c.l.b16 %v76
    %v178 = vunpack.c.l.b16 %v77
    %v179 = vunpack.c.l.b16 %v78
    %v180 = vunpack.c.l.b16 %v79
    %v181 = vunpack.c.l.b16 %v80
    %v182 = vunpack.c.l.b16 %v81
    %v183 = vunpack.c.l.b16 %v82
    %v184 = vunpack.c.l.b16 %v83
    %v185 = vunpack.c.l.b16 %v84
    %v186 = vunpack.c.l.b16 %v85
    %v187 = vunpack.c.l.b16 %v86
    %v188 = vunpack.c.l.b16 %v87
    %v189 = vunpack.c.l.b16 %v88
    %v190 = vunpack.c.l.b16 %v89
    %v191 = vunpack.c.l.b16 %v90
    %v192 = vunpack.c.l.b16 %v91
    %v193 = vunpack.c.l.b16 %v92
    %v194 = vunpack.c.l.b16 %v93
    %v195 = vunpack.c.l.b16 %v94
    %v196 = vunpack.c.l.b16 %v95
    %v197 = vunpack.c.l.b16 %v96
    %v198 = vunpack.c.l.b16 %v97
    %v199 = vunpack.c.l.b16 %v98
    %v200 = vunpack.c.l.b16 %v99
    %v201 = vunpack.c.l.b16 %v100
    %v202 = vpack.c.b16 %v171, %v170
    %v203 = vpack.c.b16 %v173, %v172
    %v204 = vpack.c.b16 %v175, %v174
    %v205 = vpack.c.b16 %v177, %v176
    %v206 = vpack.c.b16 %v179, %v178
    %v207 = vpack.c.b16 %v181, %v180
    %v208 = vpack.c.b16 %v183, %v182
    %v209 = vpack.c.b16 %v185, %v184
    %v210 = vpack.c.b16 %v187, %v186
    %v211 = vpack.c.b16 %v189, %v188
    %v212 = vpack.c.b16 %v191, %v190
    %v213 = vpack.c.b16 %v193, %v192
    %v214 = vpack.c.b16 %v195, %v194
    %v215 = vpack.c.b16 %v197, %v196
    %v216 = vpack.c.b16 %v199, %v198
    %v217 = vpack.c.b16 %v201, %v200
    %234 = vmatprep.subr.bf16.mxu0 0
    %235 = vmatpush1.bf16.msra.mxu0 %v202
    %236 = vmatprep.subr.bf16.mxu0 0
    %237 = vmatpush1.bf16.msra.mxu0 %v203
    %238 = vmatprep.subr.bf16.mxu0 0
    %239 = vmatpush1.bf16.msra.mxu0 %v204
    %240 = vmatprep.subr.bf16.mxu0 0
    %241 = vmatpush1.bf16.msra.mxu0 %v205
    %242 = vmatprep.subr.bf16.mxu0 0
    %243 = vmatpush1.bf16.msra.mxu0 %v206
    %244 = vmatprep.subr.bf16.mxu0 0
    %245 = vmatpush1.bf16.msra.mxu0 %v207
    %246 = vmatprep.subr.bf16.mxu0 0
    %247 = vmatpush1.bf16.msra.mxu0 %v208
    %248 = vmatprep.subr.bf16.mxu0 0
    %249 = vmatpush1.bf16.msra.mxu0 %v209
    %250 = vmatprep.subr.bf16.mxu0 0
    %251 = vmatpush1.bf16.msra.mxu0 %v210
    %252 = vmatprep.subr.bf16.mxu0 0
    %253 = vmatpush1.bf16.msra.mxu0 %v211
    %254 = vmatprep.subr.bf16.mxu0 0
    %255 = vmatpush1.bf16.msra.mxu0 %v212
    %256 = vmatprep.subr.bf16.mxu0 0
    %257 = vmatpush1.bf16.msra.mxu0 %v213
    %258 = vmatprep.subr.bf16.mxu0 0
    %259 = vmatpush1.bf16.msra.mxu0 %v214
    %260 = vmatprep.subr.bf16.mxu0 0
    %261 = vmatpush1.bf16.msra.mxu0 %v215
    %262 = vmatprep.subr.bf16.mxu0 0
    %263 = vmatpush1.bf16.msra.mxu0 %v216
    %264 = vmatprep.subr.bf16.mxu0 0
    %265 = vmatpush1.bf16.msra.mxu0 %v217
    %266 = vmatprep.mubr.bf16.mxu0 %v123
    %267 = vmatmul.mubr.bf16.gmra.mrb[0].mxu0 %v122
    %v268 = vpop.f32.mrb[0].mxu0
    %v269 = vadd.f32 0.0, %v268
    %v270 = vpop.f32.mrb[0].mxu0
    %v271 = vpop.f32.mrb[0].mxu0
    %v272 = vadd.f32 0.0, %v271
    %v273 = vpop.f32.mrb[0].mxu0
    %274 = vmatprep.mubr.bf16.mxu0 %v125
    %275 = vmatmul.mubr.bf16.gmra.mrb[0].mxu0 %v124
    %v276 = vpop.f32.mrb[0].mxu0
    %v277 = vadd.f32 0.0, %v276
    %v278 = vpop.f32.mrb[0].mxu0
    %v279 = vpop.f32.mrb[0].mxu0
    %v280 = vadd.f32 0.0, %v279
    %v281 = vpop.f32.mrb[0].mxu0
    %282 = vmatprep.mubr.bf16.mxu0 %v127
    %283 = vmatmul.mubr.bf16.gmra.mrb[0].mxu0 %v126
    %v284 = vpop.f32.mrb[0].mxu0
    %v285 = vadd.f32 0.0, %v284
    %v286 = vpop.f32.mrb[0].mxu0
    %v287 = vpop.f32.mrb[0].mxu0
    %v288 = vadd.f32 0.0, %v287
    %v289 = vpop.f32.mrb[0].mxu0
    %290 = vmatprep.mubr.bf16.mxu0 %v129
    %291 = vmatmul.mubr.bf16.gmra.mrb[0].mxu0 %v128
    %v292 = vpop.f32.mrb[0].mxu0
    %v293 = vadd.f32 0.0, %v292
    %v294 = vpop.f32.mrb[0].mxu0
    %v295 = vpop.f32.mrb[0].mxu0
    %v296 = vpop.f32.mrb[0].mxu0
    %297 = vdwg.mxu0
    %v298 = vadd.f32 %v55, %v269
    %v299 = vadd.f32 %v56, %v272
    %v300 = vadd.f32 %v57, %v277
    %v301 = vadd.f32 %v58, %v280
    %v302 = vadd.f32 %v59, %v285
    %v303 = vadd.f32 %v60, %v288
    %v304 = vadd.f32 %v61, %v293
    %305 = vst [vmem:[#allocation2] sm:$0xff] %v298
    %306 = vst [vmem:[#allocation2 + $0x8] sm:$0xff] %v299
    %307 = vst [vmem:[#allocation2 + $0x10] sm:$0xff] %v300
    %308 = vst [vmem:[#allocation2 + $0x18] sm:$0xff] %v301
    %309 = vst [vmem:[#allocation2 + $0x20] sm:$0xff] %v302
    %310 = vst [vmem:[#allocation2 + $0x28] sm:$0xff] %v303
    %311 = vst [vmem:[#allocation2 + $0x30] sm:$0xff] %v304
    // Predicated region
    $region22: #{nlayer_discriminator_forward.9} parent=1 // pred_check
      %p312 = pneg %p44
    $region23: #{nlayer_discriminator_forward.9} parent=1 // pred_check_branch
      %314 = sbr.rel (%p312) target = $region25
    $region24: #{nlayer_discriminator_forward.9} parent=1 // pred_region
      %v315 = vld [vmem:[#allocation2] sm:$0xff]
      %v316 = vld [vmem:[#allocation2 + $0x8] sm:$0xff]
      %v317 = vld [vmem:[#allocation2 + $0x10] sm:$0xff]
      %v318 = vld [vmem:[#allocation2 + $0x18] sm:$0xff]
      %v319 = vld [vmem:[#allocation2 + $0x20] sm:$0xff]
      %v320 = vld [vmem:[#allocation2 + $0x28] sm:$0xff]
      %v321 = vld [vmem:[#allocation2 + $0x30] sm:$0xff]
      %v322 = vpack.c.bf16 %v316, %v315
      %v323 = vpack.c.bf16 %v318, %v317
      %v324 = vpack.c.bf16 %v320, %v319
      %v325 = vpack.c.bf16 %v321, %v321
      %v330 = vunpack.c.l.b16 %v322
      %v331 = vunpack.c.h.b16 %v322
      %v332 = vunpack.c.l.b16 %v323
      %v333 = vunpack.c.h.b16 %v323
      %v334 = vunpack.c.l.b16 %v324
      %v335 = vunpack.c.h.b16 %v324
      %v336 = vunpack.c.l.b16 %v325
      %v337 = vpack.c.b16 %v330, %v330
      %v338 = vpack.c.b16 %v331, %v331
      %v339 = vpack.c.b16 %v332, %v332
      %v340 = vpack.c.b16 %v333, %v333
      %v341 = vpack.c.b16 %v334, %v334
      %v342 = vpack.c.b16 %v335, %v335
      %v343 = vpack.c.b16 %v336, %v336
      %351 = vst [vmem:[#allocation8] sm:$0xf] %v337
      %352 = vst [vmem:[#allocation8 + $0x4] sm:$0xf] %v338
      %353 = vst [vmem:[#allocation8 + $0x8] sm:$0xf] %v339
      %354 = vst [vmem:[#allocation8 + $0xc] sm:$0xf] %v340
      %355 = vst [vmem:[#allocation8 + $0x10] sm:$0xf] %v341
      %356 = vst [vmem:[#allocation8 + $0x14] sm:$0xf] %v342
      %357 = vst [vmem:[#allocation8 + $0x18] sm:$0xf] %v343
      %v358 = vadd.f32 %v315, %v316
      %v359 = vadd.f32 %v358, %v317
      %v360 = vadd.f32 %v359, %v318
      %v361 = vadd.f32 %v360, %v319
      %v362 = vadd.f32 %v361, %v320
      %v363 = vadd.f32 %v362, %v321
      %v364 = vrot.slane %v363, 4
      %v365 = vadd.f32 %v363, %v364
      %v366 = vrot.slane %v365, 2
      %v367 = vadd.f32 %v365, %v366
      %v368 = vrot.slane %v367, 1
      %v369 = vadd.f32 %v367, %v368
      %v370 = vmul.f32 %v315, %v315
      %v371 = vmul.f32 %v316, %v316
      %v372 = vmul.f32 %v317, %v317
      %v373 = vmul.f32 %v318, %v318
      %v374 = vmul.f32 %v319, %v319
      %v375 = vmul.f32 %v320, %v320
      %v376 = vmul.f32 %v321, %v321
      %v377 = vadd.f32 %v370, %v371
      %v378 = vadd.f32 %v377, %v372
      %v379 = vadd.f32 %v378, %v373
      %v380 = vadd.f32 %v379, %v374
      %v381 = vadd.f32 %v380, %v375
      %v382 = vadd.f32 %v381, %v376
      %v383 = vrot.slane %v382, 4
      %v384 = vadd.f32 %v382, %v383
      %v385 = vrot.slane %v384, 2
      %v386 = vadd.f32 %v384, %v385
      %v387 = vrot.slane %v386, 1
      %v388 = vadd.f32 %v386, %v387
      %v389 = vlaneseq
      %v390 = vshrl.u32 %v389, 7
      %vm391 = vcmp.eq.s32.totalorder %v390, 0
      %vm392 = vcmp.eq.s32.totalorder %v390, 1
      %v393 = vsel %vm392, %v388, 0.0
      %v394 = vsel %vm391, %v369, %v393
      %395 = vst [vmem:[#allocation9] sm:$0xff] %v394
    $region25: #{nlayer_discriminator_forward.9} parent=1 // pred_fallthru
      _
    // Predicated region
    $region26: #{nlayer_discriminator_forward.9} parent=1 // pred_check
      _
    $region27: #{nlayer_discriminator_forward.9} parent=1 // pred_check_branch
      %397 = sbr.rel (0) target = $region29
    $region28: #{nlayer_discriminator_forward.9} parent=1 // pred_region
      %s399 = ssub.s32 448, 448
      %400 = vsyncadd [#allocation5], %s399
      %s401 = sshll.u32 [#allocation8], 4
      %s402 = int_to_ptr.vmem [resolvable:$true] %s401
      %407 = dma.vmem_to_hbm [thread:$0]  %s402, 448, %s2, [#allocation5], 64, 64, 4
    $region29: #{nlayer_discriminator_forward.9} parent=1 // pred_fallthru
      _
    // Predicated region
    $region30: #{nlayer_discriminator_forward.9} parent=1 // pred_check
      _
    $region31: #{nlayer_discriminator_forward.9} parent=1 // pred_check_branch
      %409 = sbr.rel (0) target = $region33
    $region32: #{nlayer_discriminator_forward.9} parent=1 // pred_region
      %s411 = ssub.s32 128, 128
      %412 = vsyncadd [#allocation10], %s411
      %s414 = sshll.u32 [#allocation9], 4
      %s415 = int_to_ptr.vmem [resolvable:$true] %s414
      %417 = dma.vmem_to_hbm [thread:$0]  %s415, 128, %s3, [#allocation10]
    $region33: #{nlayer_discriminator_forward.9} parent=1 // pred_fallthru
      _
    // Predicated region
    $region34: #{nlayer_discriminator_forward.9} parent=1 // pred_check
      _
    $region35: #{nlayer_discriminator_forward.9} parent=1 // pred_check_branch
      %419 = sbr.rel (0) target = $region37
    $region36: #{nlayer_discriminator_forward.9} parent=1 // pred_region
      %420 = dma.done [#allocation5], 448
    $region37: #{nlayer_discriminator_forward.9} parent=1 // pred_fallthru
      _
    // Predicated region
    $region38: #{nlayer_discriminator_forward.9} parent=1 // pred_check
      _
    $region39: #{nlayer_discriminator_forward.9} parent=1 // pred_check_branch
      %422 = sbr.rel (0) target = $region41
    $region40: #{nlayer_discriminator_forward.9} parent=1 // pred_region
      %423 = dma.done [#allocation10], 128
    $region41: #{nlayer_discriminator_forward.9} parent=1 // pred_fallthru
      _
    %424 = vsyncpa [#allocation4], 1
    %425 = vsyncpa [#allocation7], 1
    %426 = vsyncpa [#allocation5], 1
    %427 = vsyncpa [#allocation10], 1

// kernel: nlayer_discriminator_forward.10
$region0: #{nlayer_discriminator_forward.10}
  #allocation0 [shape = 'u32[]', space=smem, size = 0x4, offset = 0x4, fixed_abs, tag = 'smem constant byte address 0x4 - core index']
  #allocation1 [shape = 'u32[144,128]{1,0:T(1,128)}', space=vmem, size = 0x12000, scoped, tag = 'internal scratch']
  %s0 = inlined_call_operand.hbm [shape: bf16[56,128], index: 0, kind: input, shape index: {}]
  %s1 = inlined_call_operand.hbm [shape: f32[1,128], index: 1, kind: input, shape index: {}]
  %s2 = inlined_call_operand.hbm [shape: f32[1,128], index: 2, kind: input, shape index: {}]
  %s3 = inlined_call_operand.hbm [shape: bf16[56,128], index: 3, kind: output, shape index: {}]
  %s4 = sld [smem:[#allocation0]]
  $region34: #{nlayer_discriminator_forward.10} parent=0
    _
  %s6 = ssub.s32 1, %s4
  %s7 = scalar_select 0, %s6, %s4
  $region1: #{nlayer_discriminator_forward.10} parent=0
    #allocation2 [shape = 'u8[14336]{0}', space=vmem, size = 0x3800, scoped, tag = 'input window, operand 0, single buffered']
    #allocation3 [shape = 's32[1]{0}', space=sflag, size = 0x4, scoped, tag = 'scoped memory for nlayer_discriminator_forward.10']
    #allocation4 [shape = 's32[1]{0}', space=sflag, size = 0x4, scoped, tag = 'scoped memory for nlayer_discriminator_forward.10']
    #allocation5 [shape = 'u8[512]{0}', space=vmem, size = 0x400, scoped, tag = 'input window, operand 1, single buffered']
    #allocation6 [shape = 's32[1]{0}', space=sflag, size = 0x4, scoped, tag = 'scoped memory for nlayer_discriminator_forward.10']
    #allocation7 [shape = 'u8[512]{0}', space=vmem, size = 0x400, scoped, tag = 'input window, operand 2, single buffered']
    #allocation8 [shape = 'u8[14336]{0}', space=vmem, size = 0x3800, scoped, tag = 'output window, operand 0, single buffered']
    %8 = vsyncpa [#allocation3], 0
    %9 = vsyncpa [#allocation6], 0
    %10 = vsyncpa [#allocation4], 0
    // Predicated region
    $region2: #{nlayer_discriminator_forward.10} parent=1 // pred_check
      _
    $region3: #{nlayer_discriminator_forward.10} parent=1 // pred_check_branch
      %12 = sbr.rel (0) target = $region5
    $region4: #{nlayer_discriminator_forward.10} parent=1 // pred_region
      %s14 = ssub.s32 448, 448
      %15 = vsyncadd [#allocation3], %s14
      %s16 = sshll.u32 [#allocation2], 4
      %s17 = int_to_ptr.vmem [resolvable:$true] %s16
      %22 = dma.hbm_to_vmem [thread:$0]  %s0, 448, %s17, [#allocation3], 64, 64, 4
    $region5: #{nlayer_discriminator_forward.10} parent=1 // pred_fallthru
      _
    // Predicated region
    $region6: #{nlayer_discriminator_forward.10} parent=1 // pred_check
      _
    $region7: #{nlayer_discriminator_forward.10} parent=1 // pred_check_branch
      %24 = sbr.rel (0) target = $region9
    $region8: #{nlayer_discriminator_forward.10} parent=1 // pred_region
      %s26 = ssub.s32 16, 16
      %27 = vsyncadd [#allocation6], %s26
      %s29 = sshll.u32 [#allocation5], 4
      %s30 = int_to_ptr.vmem [resolvable:$true] %s29
      %32 = dma.hbm_to_vmem [thread:$0]  %s1, 16, %s30, [#allocation6]
    $region9: #{nlayer_discriminator_forward.10} parent=1 // pred_fallthru
      _
    // Predicated region
    $region10: #{nlayer_discriminator_forward.10} parent=1 // pred_check
      _
    $region11: #{nlayer_discriminator_forward.10} parent=1 // pred_check_branch
      %34 = sbr.rel (0) target = $region13
    $region12: #{nlayer_discriminator_forward.10} parent=1 // pred_region
      %s36 = ssub.s32 16, 16
      %37 = vsyncadd [#allocation6], %s36
      %s39 = sshll.u32 [#allocation7], 4
      %s40 = int_to_ptr.vmem [resolvable:$true] %s39
      %42 = dma.hbm_to_vmem [thread:$0]  %s2, 16, %s40, [#allocation6]
    $region13: #{nlayer_discriminator_forward.10} parent=1 // pred_fallthru
      _
    // Predicated region
    $region14: #{nlayer_discriminator_forward.10} parent=1 // pred_check
      _
    $region15: #{nlayer_discriminator_forward.10} parent=1 // pred_check_branch
      %44 = sbr.rel (0) target = $region17
    $region16: #{nlayer_discriminator_forward.10} parent=1 // pred_region
      %45 = dma.done [#allocation3], 448
    $region17: #{nlayer_discriminator_forward.10} parent=1 // pred_fallthru
      _
    // Predicated region
    $region18: #{nlayer_discriminator_forward.10} parent=1 // pred_check
      _
    $region19: #{nlayer_discriminator_forward.10} parent=1 // pred_check_branch
      %47 = sbr.rel (0) target = $region21
    $region20: #{nlayer_discriminator_forward.10} parent=1 // pred_region
      %48 = dma.done [#allocation6], 16
    $region21: #{nlayer_discriminator_forward.10} parent=1 // pred_fallthru
      _
    // Predicated region
    $region22: #{nlayer_discriminator_forward.10} parent=1 // pred_check
      _
    $region23: #{nlayer_discriminator_forward.10} parent=1 // pred_check_branch
      %50 = sbr.rel (0) target = $region25
    $region24: #{nlayer_discriminator_forward.10} parent=1 // pred_region
      %51 = dma.done [#allocation6], 16
    $region25: #{nlayer_discriminator_forward.10} parent=1 // pred_fallthru
      _
    %v52 = vld [vmem:[#allocation2] sm:$0xf]
    %v53 = vld [vmem:[#allocation2 + $0x4] sm:$0xf]
    %v54 = vld [vmem:[#allocation2 + $0x8] sm:$0xf]
    %v55 = vld [vmem:[#allocation2 + $0xc] sm:$0xf]
    %v56 = vld [vmem:[#allocation2 + $0x10] sm:$0xf]
    %v57 = vld [vmem:[#allocation2 + $0x14] sm:$0xf]
    %v58 = vld [vmem:[#allocation2 + $0x18] sm:$0xf]
    %v59 = vunpack.c.l.bf16 %v52
    %v60 = vunpack.c.l.bf16 %v53
    %v61 = vunpack.c.l.bf16 %v54
    %v62 = vunpack.c.l.bf16 %v55
    %v63 = vunpack.c.l.bf16 %v56
    %v64 = vunpack.c.l.bf16 %v57
    %v65 = vunpack.c.l.bf16 %v58
    %v66 = vld [vmem:[#allocation5] sm:$0x1]
    %v68 = vlaneseq
    %v69 = vshrl.u32 %v68, 7
    %v70 = vsub.s32 0, %v69
    %v71 = vrot.slane %v66, %v70
    %v73 = vmul.f32 %v59, %v71
    %v74 = vmul.f32 %v60, %v71
    %v75 = vmul.f32 %v61, %v71
    %v76 = vmul.f32 %v62, %v71
    %v77 = vmul.f32 %v63, %v71
    %v78 = vmul.f32 %v64, %v71
    %v79 = vmul.f32 %v65, %v71
    %v80 = vld [vmem:[#allocation7] sm:$0x1]
    %v82 = vlaneseq
    %v83 = vshrl.u32 %v82, 7
    %v84 = vsub.s32 0, %v83
    %v85 = vrot.slane %v80, %v84
    %v87 = vadd.f32 %v73, %v85
    %v88 = vadd.f32 %v74, %v85
    %v89 = vadd.f32 %v75, %v85
    %v90 = vadd.f32 %v76, %v85
    %v91 = vadd.f32 %v77, %v85
    %v92 = vadd.f32 %v78, %v85
    %v93 = vadd.f32 %v79, %v85
    %vm94 = vcmp.ge.f32.partialorder %v87, 0.0
    %vm95 = vcmp.ge.f32.partialorder %v88, 0.0
    %vm96 = vcmp.ge.f32.partialorder %v89, 0.0
    %vm97 = vcmp.ge.f32.partialorder %v90, 0.0
    %vm98 = vcmp.ge.f32.partialorder %v91, 0.0
    %vm99 = vcmp.ge.f32.partialorder %v92, 0.0
    %vm100 = vcmp.ge.f32.partialorder %v93, 0.0
    %v101 = vmul.f32 %v87, 0.2
    %v102 = vmul.f32 %v88, 0.2
    %v103 = vmul.f32 %v89, 0.2
    %v104 = vmul.f32 %v90, 0.2
    %v105 = vmul.f32 %v91, 0.2
    %v106 = vmul.f32 %v92, 0.2
    %v107 = vmul.f32 %v93, 0.2
    %v108 = vsel %vm94, %v87, %v101
    %v109 = vsel %vm95, %v88, %v102
    %v110 = vsel %vm96, %v89, %v103
    %v111 = vsel %vm97, %v90, %v104
    %v112 = vsel %vm98, %v91, %v105
    %v113 = vsel %vm99, %v92, %v106
    %v114 = vsel %vm100, %v93, %v107
    %v115 = vpack.c.bf16 %v109, %v108
    %v116 = vpack.c.bf16 %v111, %v110
    %v117 = vpack.c.bf16 %v113, %v112
    %v118 = vpack.c.bf16 %v114, %v114
    %v123 = vunpack.c.l.b16 %v115
    %v124 = vunpack.c.h.b16 %v115
    %v125 = vunpack.c.l.b16 %v116
    %v126 = vunpack.c.h.b16 %v116
    %v127 = vunpack.c.l.b16 %v117
    %v128 = vunpack.c.h.b16 %v117
    %v129 = vunpack.c.l.b16 %v118
    %v130 = vpack.c.b16 %v123, %v123
    %v131 = vpack.c.b16 %v124, %v124
    %v132 = vpack.c.b16 %v125, %v125
    %v133 = vpack.c.b16 %v126, %v126
    %v134 = vpack.c.b16 %v127, %v127
    %v135 = vpack.c.b16 %v128, %v128
    %v136 = vpack.c.b16 %v129, %v129
    %144 = vst [vmem:[#allocation8] sm:$0xf] %v130
    %145 = vst [vmem:[#allocation8 + $0x4] sm:$0xf] %v131
    %146 = vst [vmem:[#allocation8 + $0x8] sm:$0xf] %v132
    %147 = vst [vmem:[#allocation8 + $0xc] sm:$0xf] %v133
    %148 = vst [vmem:[#allocation8 + $0x10] sm:$0xf] %v134
    %149 = vst [vmem:[#allocation8 + $0x14] sm:$0xf] %v135
    %150 = vst [vmem:[#allocation8 + $0x18] sm:$0xf] %v136
    // Predicated region
    $region26: #{nlayer_discriminator_forward.10} parent=1 // pred_check
      _
    $region27: #{nlayer_discriminator_forward.10} parent=1 // pred_check_branch
      %152 = sbr.rel (0) target = $region29
    $region28: #{nlayer_discriminator_forward.10} parent=1 // pred_region
      %s154 = ssub.s32 448, 448
      %155 = vsyncadd [#allocation4], %s154
      %s156 = sshll.u32 [#allocation8], 4
      %s157 = int_to_ptr.vmem [resolvable:$true] %s156
      %162 = dma.vmem_to_hbm [thread:$0]  %s157, 448, %s3, [#allocation4], 64, 64, 4
    $region29: #{nlayer_discriminator_forward.10} parent=1 // pred_fallthru
      _
    // Predicated region
    $region30: #{nlayer_discriminator_forward.10} parent=1 // pred_check
      _
    $region31: #{nlayer_discriminator_forward.10} parent=1 // pred_check_branch
      %164 = sbr.rel (0) target = $region33
    $region32: #{nlayer_discriminator_forward.10} parent=1 // pred_region
      %165 = dma.done [#allocation4], 448
    $region33: #{nlayer_discriminator_forward.10} parent=1 // pred_fallthru
      _
    %166 = vsyncpa [#allocation3], 1
    %167 = vsyncpa [#allocation6], 1
    %168 = vsyncpa [#allocation4], 1

// kernel: nlayer_discriminator_forward.12
$region0: #{nlayer_discriminator_forward.12}
  #allocation0 [shape = 'u32[]', space=smem, size = 0x4, offset = 0x4, fixed_abs, tag = 'smem constant byte address 0x4 - core index']
  #allocation1 [shape = 'u32[144,128]{1,0:T(1,128)}', space=vmem, size = 0x12000, scoped, tag = 'internal scratch']
  %s0 = inlined_call_operand.hbm [shape: bf16[24,128], index: 0, kind: input, shape index: {}]
  %s1 = inlined_call_operand.hbm [shape: f32[1,128], index: 1, kind: input, shape index: {}]
  %s2 = inlined_call_operand.hbm [shape: f32[1,128], index: 2, kind: input, shape index: {}]
  %s3 = inlined_call_operand.hbm [shape: bf16[24,128], index: 3, kind: output, shape index: {}]
  %s4 = sld [smem:[#allocation0]]
  $region34: #{nlayer_discriminator_forward.12} parent=0
    _
  %s6 = ssub.s32 1, %s4
  %s7 = scalar_select 0, %s6, %s4
  $region1: #{nlayer_discriminator_forward.12} parent=0
    #allocation2 [shape = 'u8[6144]{0}', space=vmem, size = 0x1800, scoped, tag = 'input window, operand 0, single buffered']
    #allocation3 [shape = 's32[1]{0}', space=sflag, size = 0x4, scoped, tag = 'scoped memory for nlayer_discriminator_forward.12']
    #allocation4 [shape = 's32[1]{0}', space=sflag, size = 0x4, scoped, tag = 'scoped memory for nlayer_discriminator_forward.12']
    #allocation5 [shape = 'u8[512]{0}', space=vmem, size = 0x400, scoped, tag = 'input window, operand 1, single buffered']
    #allocation6 [shape = 's32[1]{0}', space=sflag, size = 0x4, scoped, tag = 'scoped memory for nlayer_discriminator_forward.12']
    #allocation7 [shape = 'u8[512]{0}', space=vmem, size = 0x400, scoped, tag = 'input window, operand 2, single buffered']
    #allocation8 [shape = 'u8[6144]{0}', space=vmem, size = 0x1800, scoped, tag = 'output window, operand 0, single buffered']
    %8 = vsyncpa [#allocation3], 0
    %9 = vsyncpa [#allocation6], 0
    %10 = vsyncpa [#allocation4], 0
    // Predicated region
    $region2: #{nlayer_discriminator_forward.12} parent=1 // pred_check
      _
    $region3: #{nlayer_discriminator_forward.12} parent=1 // pred_check_branch
      %12 = sbr.rel (0) target = $region5
    $region4: #{nlayer_discriminator_forward.12} parent=1 // pred_region
      %s14 = ssub.s32 192, 192
      %15 = vsyncadd [#allocation3], %s14
      %s16 = sshll.u32 [#allocation2], 4
      %s17 = int_to_ptr.vmem [resolvable:$true] %s16
      %22 = dma.hbm_to_vmem [thread:$0]  %s0, 192, %s17, [#allocation3], 64, 64, 4
    $region5: #{nlayer_discriminator_forward.12} parent=1 // pred_fallthru
      _
    // Predicated region
    $region6: #{nlayer_discriminator_forward.12} parent=1 // pred_check
      _
    $region7: #{nlayer_discriminator_forward.12} parent=1 // pred_check_branch
      %24 = sbr.rel (0) target = $region9
    $region8: #{nlayer_discriminator_forward.12} parent=1 // pred_region
      %s26 = ssub.s32 16, 16
      %27 = vsyncadd [#allocation6], %s26
      %s29 = sshll.u32 [#allocation5], 4
      %s30 = int_to_ptr.vmem [resolvable:$true] %s29
      %32 = dma.hbm_to_vmem [thread:$0]  %s1, 16, %s30, [#allocation6]
    $region9: #{nlayer_discriminator_forward.12} parent=1 // pred_fallthru
      _
    // Predicated region
    $region10: #{nlayer_discriminator_forward.12} parent=1 // pred_check
      _
    $region11: #{nlayer_discriminator_forward.12} parent=1 // pred_check_branch
      %34 = sbr.rel (0) target = $region13
    $region12: #{nlayer_discriminator_forward.12} parent=1 // pred_region
      %s36 = ssub.s32 16, 16
      %37 = vsyncadd [#allocation6], %s36
      %s39 = sshll.u32 [#allocation7], 4
      %s40 = int_to_ptr.vmem [resolvable:$true] %s39
      %42 = dma.hbm_to_vmem [thread:$0]  %s2, 16, %s40, [#allocation6]
    $region13: #{nlayer_discriminator_forward.12} parent=1 // pred_fallthru
      _
    // Predicated region
    $region14: #{nlayer_discriminator_forward.12} parent=1 // pred_check
      _
    $region15: #{nlayer_discriminator_forward.12} parent=1 // pred_check_branch
      %44 = sbr.rel (0) target = $region17
    $region16: #{nlayer_discriminator_forward.12} parent=1 // pred_region
      %45 = dma.done [#allocation3], 192
    $region17: #{nlayer_discriminator_forward.12} parent=1 // pred_fallthru
      _
    // Predicated region
    $region18: #{nlayer_discriminator_forward.12} parent=1 // pred_check
      _
    $region19: #{nlayer_discriminator_forward.12} parent=1 // pred_check_branch
      %47 = sbr.rel (0) target = $region21
    $region20: #{nlayer_discriminator_forward.12} parent=1 // pred_region
      %48 = dma.done [#allocation6], 16
    $region21: #{nlayer_discriminator_forward.12} parent=1 // pred_fallthru
      _
    // Predicated region
    $region22: #{nlayer_discriminator_forward.12} parent=1 // pred_check
      _
    $region23: #{nlayer_discriminator_forward.12} parent=1 // pred_check_branch
      %50 = sbr.rel (0) target = $region25
    $region24: #{nlayer_discriminator_forward.12} parent=1 // pred_region
      %51 = dma.done [#allocation6], 16
    $region25: #{nlayer_discriminator_forward.12} parent=1 // pred_fallthru
      _
    %v52 = vld [vmem:[#allocation2] sm:$0xf]
    %v53 = vld [vmem:[#allocation2 + $0x4] sm:$0xf]
    %v54 = vld [vmem:[#allocation2 + $0x8] sm:$0xf]
    %v55 = vunpack.c.l.bf16 %v52
    %v56 = vunpack.c.l.bf16 %v53
    %v57 = vunpack.c.l.bf16 %v54
    %v58 = vld [vmem:[#allocation5] sm:$0x1]
    %v60 = vlaneseq
    %v61 = vshrl.u32 %v60, 7
    %v62 = vsub.s32 0, %v61
    %v63 = vrot.slane %v58, %v62
    %v65 = vmul.f32 %v55, %v63
    %v66 = vmul.f32 %v56, %v63
    %v67 = vmul.f32 %v57, %v63
    %v68 = vld [vmem:[#allocation7] sm:$0x1]
    %v70 = vlaneseq
    %v71 = vshrl.u32 %v70, 7
    %v72 = vsub.s32 0, %v71
    %v73 = vrot.slane %v68, %v72
    %v75 = vadd.f32 %v65, %v73
    %v76 = vadd.f32 %v66, %v73
    %v77 = vadd.f32 %v67, %v73
    %vm78 = vcmp.ge.f32.partialorder %v75, 0.0
    %vm79 = vcmp.ge.f32.partialorder %v76, 0.0
    %vm80 = vcmp.ge.f32.partialorder %v77, 0.0
    %v81 = vmul.f32 %v75, 0.2
    %v82 = vmul.f32 %v76, 0.2
    %v83 = vmul.f32 %v77, 0.2
    %v84 = vsel %vm78, %v75, %v81
    %v85 = vsel %vm79, %v76, %v82
    %v86 = vsel %vm80, %v77, %v83
    %v87 = vpack.c.bf16 %v85, %v84
    %v88 = vpack.c.bf16 %v86, %v86
    %v91 = vunpack.c.l.b16 %v87
    %v92 = vunpack.c.h.b16 %v87
    %v93 = vunpack.c.l.b16 %v88
    %v94 = vpack.c.b16 %v91, %v91
    %v95 = vpack.c.b16 %v92, %v92
    %v96 = vpack.c.b16 %v93, %v93
    %100 = vst [vmem:[#allocation8] sm:$0xf] %v94
    %101 = vst [vmem:[#allocation8 + $0x4] sm:$0xf] %v95
    %102 = vst [vmem:[#allocation8 + $0x8] sm:$0xf] %v96
    // Predicated region
    $region26: #{nlayer_discriminator_forward.12} parent=1 // pred_check
      _
    $region27: #{nlayer_discriminator_forward.12} parent=1 // pred_check_branch
      %104 = sbr.rel (0) target = $region29
    $region28: #{nlayer_discriminator_forward.12} parent=1 // pred_region
      %s106 = ssub.s32 192, 192
      %107 = vsyncadd [#allocation4], %s106
      %s108 = sshll.u32 [#allocation8], 4
      %s109 = int_to_ptr.vmem [resolvable:$true] %s108
      %114 = dma.vmem_to_hbm [thread:$0]  %s109, 192, %s3, [#allocation4], 64, 64, 4
    $region29: #{nlayer_discriminator_forward.12} parent=1 // pred_fallthru
      _
    // Predicated region
    $region30: #{nlayer_discriminator_forward.12} parent=1 // pred_check
      _
    $region31: #{nlayer_discriminator_forward.12} parent=1 // pred_check_branch
      %116 = sbr.rel (0) target = $region33
    $region32: #{nlayer_discriminator_forward.12} parent=1 // pred_region
      %117 = dma.done [#allocation4], 192
    $region33: #{nlayer_discriminator_forward.12} parent=1 // pred_fallthru
      _
    %118 = vsyncpa [#allocation3], 1
    %119 = vsyncpa [#allocation6], 1
    %120 = vsyncpa [#allocation4], 1

// kernel: nlayer_discriminator_forward.11
$region0: #{nlayer_discriminator_forward.11}
  #allocation0 [shape = 'u32[]', space=smem, size = 0x4, offset = 0x4, fixed_abs, tag = 'smem constant byte address 0x4 - core index']
  #allocation1 [shape = 'u32[144,128]{1,0:T(1,128)}', space=vmem, size = 0x12000, scoped, tag = 'internal scratch']
  #allocation2 [shape = 'f32[24,128]{1,0:T(8,128)}', space=vmem, size = 0x3000, scoped, tag = 'scratch operand']
  %s0 = inlined_call_operand.hbm [shape: bf16[24,512], index: 0, kind: input, shape index: {}]
  %s1 = inlined_call_operand.hbm [shape: bf16[512,128], index: 1, kind: input, shape index: {}]
  %s2 = inlined_call_operand.hbm [shape: bf16[24,128], index: 2, kind: output, shape index: {0}]
  %s3 = inlined_call_operand.hbm [shape: f32[8,128], index: 3, kind: output, shape index: {1}]
  %4 = xla_tuple %s2, %s3
  %s5 = sld [smem:[#allocation0]]
  $region42: #{nlayer_discriminator_forward.11} parent=0
    _
  %s7 = ssub.s32 1, %s5
  %s8 = scalar_select 0, %s7, %s5
  $region1: #{nlayer_discriminator_forward.11} parent=0
    #allocation3 [shape = 'u8[24576]{0}', space=vmem, size = 0x6000, scoped, tag = 'input window, operand 0, single buffered']
    #allocation4 [shape = 's32[1]{0}', space=sflag, size = 0x4, scoped, tag = 'scoped memory for nlayer_discriminator_forward.11']
    #allocation5 [shape = 's32[1]{0}', space=sflag, size = 0x4, scoped, tag = 'scoped memory for nlayer_discriminator_forward.11']
    #allocation6 [shape = 'u8[131072]{0}', space=vmem, size = 0x20000, scoped, tag = 'input window, operand 1, single buffered']
    #allocation7 [shape = 's32[1]{0}', space=sflag, size = 0x4, scoped, tag = 'scoped memory for nlayer_discriminator_forward.11']
    #allocation8 [shape = 'u8[6144]{0}', space=vmem, size = 0x1800, scoped, tag = 'output window, operand 0, single buffered']
    #allocation9 [shape = 'u8[4096]{0}', space=vmem, size = 0x1000, scoped, tag = 'output window, operand 1, single buffered']
    #allocation10 [shape = 's32[1]{0}', space=sflag, size = 0x4, scoped, tag = 'scoped memory for nlayer_discriminator_forward.11']
    %9 = vsyncpa [#allocation4], 0
    %10 = vsyncpa [#allocation7], 0
    %11 = vsyncpa [#allocation5], 0
    %12 = vsyncpa [#allocation10], 0
    // Predicated region
    $region2: #{nlayer_discriminator_forward.11} parent=1 // pred_check
      _
    $region3: #{nlayer_discriminator_forward.11} parent=1 // pred_check_branch
      %14 = sbr.rel (0) target = $region5
    $region4: #{nlayer_discriminator_forward.11} parent=1 // pred_region
      %s16 = ssub.s32 768, 768
      %17 = vsyncadd [#allocation4], %s16
      %s18 = sshll.u32 [#allocation3], 4
      %s19 = int_to_ptr.vmem [resolvable:$true] %s18
      %24 = dma.hbm_to_vmem [thread:$0]  %s0, 768, %s19, [#allocation4], 256, 256, 16
    $region5: #{nlayer_discriminator_forward.11} parent=1 // pred_fallthru
      _
    // Predicated region
    $region6: #{nlayer_discriminator_forward.11} parent=1 // pred_check
      _
    $region7: #{nlayer_discriminator_forward.11} parent=1 // pred_check_branch
      %26 = sbr.rel (0) target = $region9
    $region8: #{nlayer_discriminator_forward.11} parent=1 // pred_region
      %s28 = ssub.s32 4096, 4096
      %29 = vsyncadd [#allocation7], %s28
      %s30 = sshll.u32 [#allocation6], 4
      %s31 = int_to_ptr.vmem [resolvable:$true] %s30
      %36 = dma.hbm_to_vmem [thread:$0]  %s1, 4096, %s31, [#allocation7], 64, 64, 4
    $region9: #{nlayer_discriminator_forward.11} parent=1 // pred_fallthru
      _
    // Predicated region
    $region10: #{nlayer_discriminator_forward.11} parent=1 // pred_check
      _
    $region11: #{nlayer_discriminator_forward.11} parent=1 // pred_check_branch
      %38 = sbr.rel (0) target = $region13
    $region12: #{nlayer_discriminator_forward.11} parent=1 // pred_region
      %39 = dma.done [#allocation4], 768
    $region13: #{nlayer_discriminator_forward.11} parent=1 // pred_fallthru
      _
    // Predicated region
    $region14: #{nlayer_discriminator_forward.11} parent=1 // pred_check
      _
    $region15: #{nlayer_discriminator_forward.11} parent=1 // pred_check_branch
      %41 = sbr.rel (0) target = $region17
    $region16: #{nlayer_discriminator_forward.11} parent=1 // pred_region
      %42 = dma.done [#allocation7], 4096
    $region17: #{nlayer_discriminator_forward.11} parent=1 // pred_fallthru
      _
    %p44 = scmp.eq.s32.totalorder 0, 0
    // Predicated region
    $region18: #{nlayer_discriminator_forward.11} parent=1 // pred_check
      %p45 = pneg %p44
    $region19: #{nlayer_discriminator_forward.11} parent=1 // pred_check_branch
      %47 = sbr.rel (%p45) target = $region21
    $region20: #{nlayer_discriminator_forward.11} parent=1 // pred_region
      %48 = vst [vmem:[#allocation2] sm:$0xff] 0.0
      %49 = vst [vmem:[#allocation2 + $0x8] sm:$0xff] 0.0
      %50 = vst [vmem:[#allocation2 + $0x10] sm:$0xff] 0.0
    $region21: #{nlayer_discriminator_forward.11} parent=1 // pred_fallthru
      _
    %v51 = vld [vmem:[#allocation2] sm:$0xff]
    %v52 = vld [vmem:[#allocation2 + $0x8] sm:$0xff]
    %v53 = vld [vmem:[#allocation2 + $0x10] sm:$0xff]
    %v54 = vld [vmem:[#allocation3] sm:$0xff]
    %v55 = vld [vmem:[#allocation3 + $0x8] sm:$0xff]
    %v56 = vld [vmem:[#allocation3 + $0x10] sm:$0xff]
    %v57 = vld [vmem:[#allocation3 + $0x18] sm:$0xff]
    %v58 = vld [vmem:[#allocation3 + $0x20] sm:$0xff]
    %v59 = vld [vmem:[#allocation3 + $0x28] sm:$0xff]
    %v60 = vld [vmem:[#allocation6] sm:$0xf]
    %v61 = vld [vmem:[#allocation6 + $0x4] sm:$0xf]
    %v62 = vld [vmem:[#allocation6 + $0x8] sm:$0xf]
    %v63 = vld [vmem:[#allocation6 + $0xc] sm:$0xf]
    %v64 = vld [vmem:[#allocation6 + $0x10] sm:$0xf]
    %v65 = vld [vmem:[#allocation6 + $0x14] sm:$0xf]
    %v66 = vld [vmem:[#allocation6 + $0x18] sm:$0xf]
    %v67 = vld [vmem:[#allocation6 + $0x1c] sm:$0xf]
    %v68 = vld [vmem:[#allocation6 + $0x20] sm:$0xf]
    %v69 = vld [vmem:[#allocation6 + $0x24] sm:$0xf]
    %v70 = vld [vmem:[#allocation6 + $0x28] sm:$0xf]
    %v71 = vld [vmem:[#allocation6 + $0x2c] sm:$0xf]
    %v72 = vld [vmem:[#allocation6 + $0x30] sm:$0xf]
    %v73 = vld [vmem:[#allocation6 + $0x34] sm:$0xf]
    %v74 = vld [vmem:[#allocation6 + $0x38] sm:$0xf]
    %v75 = vld [vmem:[#allocation6 + $0x3c] sm:$0xf]
    %v76 = vld [vmem:[#allocation6 + $0x40] sm:$0xf]
    %v77 = vld [vmem:[#allocation6 + $0x44] sm:$0xf]
    %v78 = vld [vmem:[#allocation6 + $0x48] sm:$0xf]
    %v79 = vld [vmem:[#allocation6 + $0x4c] sm:$0xf]
    %v80 = vld [vmem:[#allocation6 + $0x50] sm:$0xf]
    %v81 = vld [vmem:[#allocation6 + $0x54] sm:$0xf]
    %v82 = vld [vmem:[#allocation6 + $0x58] sm:$0xf]
    %v83 = vld [vmem:[#allocation6 + $0x5c] sm:$0xf]
    %v84 = vld [vmem:[#allocation6 + $0x60] sm:$0xf]
    %v85 = vld [vmem:[#allocation6 + $0x64] sm:$0xf]
    %v86 = vld [vmem:[#allocation6 + $0x68] sm:$0xf]
    %v87 = vld [vmem:[#allocation6 + $0x6c] sm:$0xf]
    %v88 = vld [vmem:[#allocation6 + $0x70] sm:$0xf]
    %v89 = vld [vmem:[#allocation6 + $0x74] sm:$0xf]
    %v90 = vld [vmem:[#allocation6 + $0x78] sm:$0xf]
    %v91 = vld [vmem:[#allocation6 + $0x7c] sm:$0xf]
    %v92 = vld [vmem:[#allocation6 + $0x80] sm:$0xf]
    %v93 = vld [vmem:[#allocation6 + $0x84] sm:$0xf]
    %v94 = vld [vmem:[#allocation6 + $0x88] sm:$0xf]
    %v95 = vld [vmem:[#allocation6 + $0x8c] sm:$0xf]
    %v96 = vld [vmem:[#allocation6 + $0x90] sm:$0xf]
    %v97 = vld [vmem:[#allocation6 + $0x94] sm:$0xf]
    %v98 = vld [vmem:[#allocation6 + $0x98] sm:$0xf]
    %v99 = vld [vmem:[#allocation6 + $0x9c] sm:$0xf]
    %v100 = vld [vmem:[#allocation6 + $0xa0] sm:$0xf]
    %v101 = vld [vmem:[#allocation6 + $0xa4] sm:$0xf]
    %v102 = vld [vmem:[#allocation6 + $0xa8] sm:$0xf]
    %v103 = vld [vmem:[#allocation6 + $0xac] sm:$0xf]
    %v104 = vld [vmem:[#allocation6 + $0xb0] sm:$0xf]
    %v105 = vld [vmem:[#allocation6 + $0xb4] sm:$0xf]
    %v106 = vld [vmem:[#allocation6 + $0xb8] sm:$0xf]
    %v107 = vld [vmem:[#allocation6 + $0xbc] sm:$0xf]
    %v108 = vld [vmem:[#allocation6 + $0xc0] sm:$0xf]
    %v109 = vld [vmem:[#allocation6 + $0xc4] sm:$0xf]
    %v110 = vld [vmem:[#allocation6 + $0xc8] sm:$0xf]
    %v111 = vld [vmem:[#allocation6 + $0xcc] sm:$0xf]
    %v112 = vld [vmem:[#allocation6 + $0xd0] sm:$0xf]
    %v113 = vld [vmem:[#allocation6 + $0xd4] sm:$0xf]
    %v114 = vld [vmem:[#allocation6 + $0xd8] sm:$0xf]
    %v115 = vld [vmem:[#allocation6 + $0xdc] sm:$0xf]
    %v116 = vld [vmem:[#allocation6 + $0xe0] sm:$0xf]
    %v117 = vld [vmem:[#allocation6 + $0xe4] sm:$0xf]
    %v118 = vld [vmem:[#allocation6 + $0xe8] sm:$0xf]
    %v119 = vld [vmem:[#allocation6 + $0xec] sm:$0xf]
    %v120 = vld [vmem:[#allocation6 + $0xf0] sm:$0xf]
    %v121 = vld [vmem:[#allocation6 + $0xf4] sm:$0xf]
    %v122 = vld [vmem:[#allocation6 + $0xf8] sm:$0xf]
    %v123 = vld [vmem:[#allocation6 + $0xfc] sm:$0xf]
    %v130 = vunpack.c.l.b16 %v54
    %v131 = vunpack.c.h.b16 %v54
    %v132 = vunpack.c.l.b16 %v55
    %v133 = vunpack.c.h.b16 %v55
    %v134 = vunpack.c.l.b16 %v56
    %v135 = vunpack.c.h.b16 %v56
    %v136 = vunpack.c.l.b16 %v57
    %v137 = vunpack.c.h.b16 %v57
    %v138 = vunpack.c.l.b16 %v58
    %v139 = vunpack.c.h.b16 %v58
    %v140 = vunpack.c.l.b16 %v59
    %v141 = vunpack.c.h.b16 %v59
    %v142 = vpack.c.b16 %v134, %v130
    %v143 = vpack.c.b16 %v135, %v131
    %v144 = vpack.c.b16 %v136, %v132
    %v145 = vpack.c.b16 %v137, %v133
    %v146 = vpack.c.b16 %v138, %v138
    %v147 = vpack.c.b16 %v139, %v139
    %v148 = vpack.c.b16 %v140, %v140
    %v149 = vpack.c.b16 %v141, %v141
    %v222 = vunpack.c.l.b16 %v60
    %v223 = vunpack.c.l.b16 %v61
    %v224 = vunpack.c.l.b16 %v62
    %v225 = vunpack.c.l.b16 %v63
    %v226 = vunpack.c.l.b16 %v64
    %v227 = vunpack.c.l.b16 %v65
    %v228 = vunpack.c.l.b16 %v66
    %v229 = vunpack.c.l.b16 %v67
    %v230 = vunpack.c.l.b16 %v68
    %v231 = vunpack.c.l.b16 %v69
    %v232 = vunpack.c.l.b16 %v70
    %v233 = vunpack.c.l.b16 %v71
    %v234 = vunpack.c.l.b16 %v72
    %v235 = vunpack.c.l.b16 %v73
    %v236 = vunpack.c.l.b16 %v74
    %v237 = vunpack.c.l.b16 %v75
    %v238 = vunpack.c.l.b16 %v76
    %v239 = vunpack.c.l.b16 %v77
    %v240 = vunpack.c.l.b16 %v78
    %v241 = vunpack.c.l.b16 %v79
    %v242 = vunpack.c.l.b16 %v80
    %v243 = vunpack.c.l.b16 %v81
    %v244 = vunpack.c.l.b16 %v82
    %v245 = vunpack.c.l.b16 %v83
    %v246 = vunpack.c.l.b16 %v84
    %v247 = vunpack.c.l.b16 %v85
    %v248 = vunpack.c.l.b16 %v86
    %v249 = vunpack.c.l.b16 %v87
    %v250 = vunpack.c.l.b16 %v88
    %v251 = vunpack.c.l.b16 %v89
    %v252 = vunpack.c.l.b16 %v90
    %v253 = vunpack.c.l.b16 %v91
    %v254 = vunpack.c.l.b16 %v92
    %v255 = vunpack.c.l.b16 %v93
    %v256 = vunpack.c.l.b16 %v94
    %v257 = vunpack.c.l.b16 %v95
    %v258 = vunpack.c.l.b16 %v96
    %v259 = vunpack.c.l.b16 %v97
    %v260 = vunpack.c.l.b16 %v98
    %v261 = vunpack.c.l.b16 %v99
    %v262 = vunpack.c.l.b16 %v100
    %v263 = vunpack.c.l.b16 %v101
    %v264 = vunpack.c.l.b16 %v102
    %v265 = vunpack.c.l.b16 %v103
    %v266 = vunpack.c.l.b16 %v104
    %v267 = vunpack.c.l.b16 %v105
    %v268 = vunpack.c.l.b16 %v106
    %v269 = vunpack.c.l.b16 %v107
    %v270 = vunpack.c.l.b16 %v108
    %v271 = vunpack.c.l.b16 %v109
    %v272 = vunpack.c.l.b16 %v110
    %v273 = vunpack.c.l.b16 %v111
    %v274 = vunpack.c.l.b16 %v112
    %v275 = vunpack.c.l.b16 %v113
    %v276 = vunpack.c.l.b16 %v114
    %v277 = vunpack.c.l.b16 %v115
    %v278 = vunpack.c.l.b16 %v116
    %v279 = vunpack.c.l.b16 %v117
    %v280 = vunpack.c.l.b16 %v118
    %v281 = vunpack.c.l.b16 %v119
    %v282 = vunpack.c.l.b16 %v120
    %v283 = vunpack.c.l.b16 %v121
    %v284 = vunpack.c.l.b16 %v122
    %v285 = vunpack.c.l.b16 %v123
    %v286 = vpack.c.b16 %v223, %v222
    %v287 = vpack.c.b16 %v225, %v224
    %v288 = vpack.c.b16 %v227, %v226
    %v289 = vpack.c.b16 %v229, %v228
    %v290 = vpack.c.b16 %v231, %v230
    %v291 = vpack.c.b16 %v233, %v232
    %v292 = vpack.c.b16 %v235, %v234
    %v293 = vpack.c.b16 %v237, %v236
    %v294 = vpack.c.b16 %v239, %v238
    %v295 = vpack.c.b16 %v241, %v240
    %v296 = vpack.c.b16 %v243, %v242
    %v297 = vpack.c.b16 %v245, %v244
    %v298 = vpack.c.b16 %v247, %v246
    %v299 = vpack.c.b16 %v249, %v248
    %v300 = vpack.c.b16 %v251, %v250
    %v301 = vpack.c.b16 %v253, %v252
    %v302 = vpack.c.b16 %v255, %v254
    %v303 = vpack.c.b16 %v257, %v256
    %v304 = vpack.c.b16 %v259, %v258
    %v305 = vpack.c.b16 %v261, %v260
    %v306 = vpack.c.b16 %v263, %v262
    %v307 = vpack.c.b16 %v265, %v264
    %v308 = vpack.c.b16 %v267, %v266
    %v309 = vpack.c.b16 %v269, %v268
    %v310 = vpack.c.b16 %v271, %v270
    %v311 = vpack.c.b16 %v273, %v272
    %v312 = vpack.c.b16 %v275, %v274
    %v313 = vpack.c.b16 %v277, %v276
    %v314 = vpack.c.b16 %v279, %v278
    %v315 = vpack.c.b16 %v281, %v280
    %v316 = vpack.c.b16 %v283, %v282
    %v317 = vpack.c.b16 %v285, %v284
    %350 = vmatprep.subr.bf16.mxu0 0
    %351 = vmatpush1.bf16.msra.mxu0 %v286
    %352 = vmatprep.subr.bf16.mxu0 0
    %353 = vmatpush1.bf16.msra.mxu0 %v287
    %354 = vmatprep.subr.bf16.mxu0 0
    %355 = vmatpush1.bf16.msra.mxu0 %v288
    %356 = vmatprep.subr.bf16.mxu0 0
    %357 = vmatpush1.bf16.msra.mxu0 %v289
    %358 = vmatprep.subr.bf16.mxu0 0
    %359 = vmatpush1.bf16.msra.mxu0 %v290
    %360 = vmatprep.subr.bf16.mxu0 0
    %361 = vmatpush1.bf16.msra.mxu0 %v291
    %362 = vmatprep.subr.bf16.mxu0 0
    %363 = vmatpush1.bf16.msra.mxu0 %v292
    %364 = vmatprep.subr.bf16.mxu0 0
    %365 = vmatpush1.bf16.msra.mxu0 %v293
    %366 = vmatprep.subr.bf16.mxu0 0
    %367 = vmatpush1.bf16.msra.mxu0 %v294
    %368 = vmatprep.subr.bf16.mxu0 0
    %369 = vmatpush1.bf16.msra.mxu0 %v295
    %370 = vmatprep.subr.bf16.mxu0 0
    %371 = vmatpush1.bf16.msra.mxu0 %v296
    %372 = vmatprep.subr.bf16.mxu0 0
    %373 = vmatpush1.bf16.msra.mxu0 %v297
    %374 = vmatprep.subr.bf16.mxu0 0
    %375 = vmatpush1.bf16.msra.mxu0 %v298
    %376 = vmatprep.subr.bf16.mxu0 0
    %377 = vmatpush1.bf16.msra.mxu0 %v299
    %378 = vmatprep.subr.bf16.mxu0 0
    %379 = vmatpush1.bf16.msra.mxu0 %v300
    %380 = vmatprep.subr.bf16.mxu0 0
    %381 = vmatpush1.bf16.msra.mxu0 %v301
    %382 = vmatprep.mubr.bf16.mxu0 %v143
    %383 = vmatmul.mubr.bf16.gmra.mrb[0].mxu0 %v142
    %v384 = vpop.f32.mrb[0].mxu0
    %v385 = vadd.f32 0.0, %v384
    %v386 = vpop.f32.mrb[0].mxu0
    %v387 = vpop.f32.mrb[0].mxu0
    %v388 = vadd.f32 0.0, %v387
    %v389 = vpop.f32.mrb[0].mxu0
    %390 = vmatprep.mubr.bf16.mxu0 %v147
    %391 = vmatmul.mubr.bf16.gmra.mrb[0].mxu0 %v146
    %v392 = vpop.f32.mrb[0].mxu0
    %v393 = vadd.f32 0.0, %v392
    %v394 = vpop.f32.mrb[0].mxu0
    %v395 = vpop.f32.mrb[0].mxu0
    %v396 = vpop.f32.mrb[0].mxu0
    %397 = vdwg.mxu0
    %398 = vmatprep.subr.bf16.mxu0 0
    %399 = vmatpush1.bf16.msra.mxu0 %v302
    %400 = vmatprep.subr.bf16.mxu0 0
    %401 = vmatpush1.bf16.msra.mxu0 %v303
    %402 = vmatprep.subr.bf16.mxu0 0
    %403 = vmatpush1.bf16.msra.mxu0 %v304
    %404 = vmatprep.subr.bf16.mxu0 0
    %405 = vmatpush1.bf16.msra.mxu0 %v305
    %406 = vmatprep.subr.bf16.mxu0 0
    %407 = vmatpush1.bf16.msra.mxu0 %v306
    %408 = vmatprep.subr.bf16.mxu0 0
    %409 = vmatpush1.bf16.msra.mxu0 %v307
    %410 = vmatprep.subr.bf16.mxu0 0
    %411 = vmatpush1.bf16.msra.mxu0 %v308
    %412 = vmatprep.subr.bf16.mxu0 0
    %413 = vmatpush1.bf16.msra.mxu0 %v309
    %414 = vmatprep.subr.bf16.mxu0 0
    %415 = vmatpush1.bf16.msra.mxu0 %v310
    %416 = vmatprep.subr.bf16.mxu0 0
    %417 = vmatpush1.bf16.msra.mxu0 %v311
    %418 = vmatprep.subr.bf16.mxu0 0
    %419 = vmatpush1.bf16.msra.mxu0 %v312
    %420 = vmatprep.subr.bf16.mxu0 0
    %421 = vmatpush1.bf16.msra.mxu0 %v313
    %422 = vmatprep.subr.bf16.mxu0 0
    %423 = vmatpush1.bf16.msra.mxu0 %v314
    %424 = vmatprep.subr.bf16.mxu0 0
    %425 = vmatpush1.bf16.msra.mxu0 %v315
    %426 = vmatprep.subr.bf16.mxu0 0
    %427 = vmatpush1.bf16.msra.mxu0 %v316
    %428 = vmatprep.subr.bf16.mxu0 0
    %429 = vmatpush1.bf16.msra.mxu0 %v317
    %430 = vmatprep.mubr.bf16.mxu0 %v145
    %431 = vmatmul.mubr.bf16.gmra.mrb[0].mxu0 %v144
    %v432 = vpop.f32.mrb[0].mxu0
    %v433 = vadd.f32 %v385, %v432
    %v434 = vpop.f32.mrb[0].mxu0
    %v435 = vpop.f32.mrb[0].mxu0
    %v436 = vadd.f32 %v388, %v435
    %v437 = vpop.f32.mrb[0].mxu0
    %438 = vmatprep.mubr.bf16.mxu0 %v149
    %439 = vmatmul.mubr.bf16.gmra.mrb[0].mxu0 %v148
    %v440 = vpop.f32.mrb[0].mxu0
    %v441 = vadd.f32 %v393, %v440
    %v442 = vpop.f32.mrb[0].mxu0
    %v443 = vpop.f32.mrb[0].mxu0
    %v444 = vpop.f32.mrb[0].mxu0
    %445 = vdwg.mxu0
    %v446 = vadd.f32 %v51, %v433
    %v447 = vadd.f32 %v52, %v436
    %v448 = vadd.f32 %v53, %v441
    %449 = vst [vmem:[#allocation2] sm:$0xff] %v446
    %450 = vst [vmem:[#allocation2 + $0x8] sm:$0xff] %v447
    %451 = vst [vmem:[#allocation2 + $0x10] sm:$0xff] %v448
    // Predicated region
    $region22: #{nlayer_discriminator_forward.11} parent=1 // pred_check
      %p452 = pneg %p44
    $region23: #{nlayer_discriminator_forward.11} parent=1 // pred_check_branch
      %454 = sbr.rel (%p452) target = $region25
    $region24: #{nlayer_discriminator_forward.11} parent=1 // pred_region
      %v455 = vld [vmem:[#allocation2] sm:$0xff]
      %v456 = vld [vmem:[#allocation2 + $0x8] sm:$0xff]
      %v457 = vld [vmem:[#allocation2 + $0x10] sm:$0xff]
      %v458 = vpack.c.bf16 %v456, %v455
      %v459 = vpack.c.bf16 %v457, %v457
      %v462 = vunpack.c.l.b16 %v458
      %v463 = vunpack.c.h.b16 %v458
      %v464 = vunpack.c.l.b16 %v459
      %v465 = vpack.c.b16 %v462, %v462
      %v466 = vpack.c.b16 %v463, %v463
      %v467 = vpack.c.b16 %v464, %v464
      %471 = vst [vmem:[#allocation8] sm:$0xf] %v465
      %472 = vst [vmem:[#allocation8 + $0x4] sm:$0xf] %v466
      %473 = vst [vmem:[#allocation8 + $0x8] sm:$0xf] %v467
      %v474 = vadd.f32 %v455, %v456
      %v475 = vadd.f32 %v474, %v457
      %v476 = vrot.slane %v475, 4
      %v477 = vadd.f32 %v475, %v476
      %v478 = vrot.slane %v477, 2
      %v479 = vadd.f32 %v477, %v478
      %v480 = vrot.slane %v479, 1
      %v481 = vadd.f32 %v479, %v480
      %v482 = vmul.f32 %v455, %v455
      %v483 = vmul.f32 %v456, %v456
      %v484 = vmul.f32 %v457, %v457
      %v485 = vadd.f32 %v482, %v483
      %v486 = vadd.f32 %v485, %v484
      %v487 = vrot.slane %v486, 4
      %v488 = vadd.f32 %v486, %v487
      %v489 = vrot.slane %v488, 2
      %v490 = vadd.f32 %v488, %v489
      %v491 = vrot.slane %v490, 1
      %v492 = vadd.f32 %v490, %v491
      %v493 = vlaneseq
      %v494 = vshrl.u32 %v493, 7
      %vm495 = vcmp.eq.s32.totalorder %v494, 0
      %vm496 = vcmp.eq.s32.totalorder %v494, 1
      %v497 = vsel %vm496, %v492, 0.0
      %v498 = vsel %vm495, %v481, %v497
      %499 = vst [vmem:[#allocation9] sm:$0xff] %v498
    $region25: #{nlayer_discriminator_forward.11} parent=1 // pred_fallthru
      _
    // Predicated region
    $region26: #{nlayer_discriminator_forward.11} parent=1 // pred_check
      _
    $region27: #{nlayer_discriminator_forward.11} parent=1 // pred_check_branch
      %501 = sbr.rel (0) target = $region29
    $region28: #{nlayer_discriminator_forward.11} parent=1 // pred_region
      %s503 = ssub.s32 192, 192
      %504 = vsyncadd [#allocation5], %s503
      %s505 = sshll.u32 [#allocation8], 4
      %s506 = int_to_ptr.vmem [resolvable:$true] %s505
      %511 = dma.vmem_to_hbm [thread:$0]  %s506, 192, %s2, [#allocation5], 64, 64, 4
    $region29: #{nlayer_discriminator_forward.11} parent=1 // pred_fallthru
      _
    // Predicated region
    $region30: #{nlayer_discriminator_forward.11} parent=1 // pred_check
      _
    $region31: #{nlayer_discriminator_forward.11} parent=1 // pred_check_branch
      %513 = sbr.rel (0) target = $region33
    $region32: #{nlayer_discriminator_forward.11} parent=1 // pred_region
      %s515 = ssub.s32 128, 128
      %516 = vsyncadd [#allocation10], %s515
      %s518 = sshll.u32 [#allocation9], 4
      %s519 = int_to_ptr.vmem [resolvable:$true] %s518
      %521 = dma.vmem_to_hbm [thread:$0]  %s519, 128, %s3, [#allocation10]
    $region33: #{nlayer_discriminator_forward.11} parent=1 // pred_fallthru
      _
    // Predicated region
    $region34: #{nlayer_discriminator_forward.11} parent=1 // pred_check
      _
    $region35: #{nlayer_discriminator_forward.11} parent=1 // pred_check_branch
      %523 = sbr.rel (0) target = $region37
    $region36: #{nlayer_discriminator_forward.11} parent=1 // pred_region
      %524 = dma.done [#allocation5], 192
    $region37: #{nlayer_discriminator_forward.11} parent=1 // pred_fallthru
      _
    // Predicated region
    $region38: #{nlayer_discriminator_forward.11} parent=1 // pred_check
      _
    $region39: #{nlayer_discriminator_forward.11} parent=1 // pred_check_branch
      %526 = sbr.rel (0) target = $region41
    $region40: #{nlayer_discriminator_forward.11} parent=1 // pred_region
      %527 = dma.done [#allocation10], 128
    $region41: #{nlayer_discriminator_forward.11} parent=1 // pred_fallthru
      _
    %528 = vsyncpa [#allocation4], 1
    %529 = vsyncpa [#allocation7], 1
    %530 = vsyncpa [#allocation5], 1
    %531 = vsyncpa [#allocation10], 1

// kernel: nlayer_discriminator_forward.14
$region0: #{nlayer_discriminator_forward.14}
  #allocation0 [shape = 'u32[]', space=smem, size = 0x4, offset = 0x4, fixed_abs, tag = 'smem constant byte address 0x4 - core index']
  #allocation1 [shape = 'u32[144,128]{1,0:T(1,128)}', space=vmem, size = 0x12000, scoped, tag = 'internal scratch']
  %s0 = inlined_call_operand.hbm [shape: bf16[32,128], index: 0, kind: input, shape index: {}]
  %s1 = inlined_call_operand.hbm [shape: f32[1,128], index: 1, kind: input, shape index: {}]
  %s2 = inlined_call_operand.hbm [shape: f32[1,128], index: 2, kind: input, shape index: {}]
  %s3 = inlined_call_operand.hbm [shape: bf16[32,128], index: 3, kind: output, shape index: {}]
  %s4 = sld [smem:[#allocation0]]
  $region34: #{nlayer_discriminator_forward.14} parent=0
    _
  %s6 = ssub.s32 1, %s4
  %s7 = scalar_select 0, %s6, %s4
  $region1: #{nlayer_discriminator_forward.14} parent=0
    #allocation2 [shape = 'u8[8192]{0}', space=vmem, size = 0x2000, scoped, tag = 'input window, operand 0, single buffered']
    #allocation3 [shape = 's32[1]{0}', space=sflag, size = 0x4, scoped, tag = 'scoped memory for nlayer_discriminator_forward.14']
    #allocation4 [shape = 's32[1]{0}', space=sflag, size = 0x4, scoped, tag = 'scoped memory for nlayer_discriminator_forward.14']
    #allocation5 [shape = 'u8[512]{0}', space=vmem, size = 0x400, scoped, tag = 'input window, operand 1, single buffered']
    #allocation6 [shape = 's32[1]{0}', space=sflag, size = 0x4, scoped, tag = 'scoped memory for nlayer_discriminator_forward.14']
    #allocation7 [shape = 'u8[512]{0}', space=vmem, size = 0x400, scoped, tag = 'input window, operand 2, single buffered']
    #allocation8 [shape = 'u8[8192]{0}', space=vmem, size = 0x2000, scoped, tag = 'output window, operand 0, single buffered']
    %8 = vsyncpa [#allocation3], 0
    %9 = vsyncpa [#allocation6], 0
    %10 = vsyncpa [#allocation4], 0
    // Predicated region
    $region2: #{nlayer_discriminator_forward.14} parent=1 // pred_check
      _
    $region3: #{nlayer_discriminator_forward.14} parent=1 // pred_check_branch
      %12 = sbr.rel (0) target = $region5
    $region4: #{nlayer_discriminator_forward.14} parent=1 // pred_region
      %s14 = ssub.s32 256, 256
      %15 = vsyncadd [#allocation3], %s14
      %s16 = sshll.u32 [#allocation2], 4
      %s17 = int_to_ptr.vmem [resolvable:$true] %s16
      %22 = dma.hbm_to_vmem [thread:$0]  %s0, 256, %s17, [#allocation3], 64, 64, 4
    $region5: #{nlayer_discriminator_forward.14} parent=1 // pred_fallthru
      _
    // Predicated region
    $region6: #{nlayer_discriminator_forward.14} parent=1 // pred_check
      _
    $region7: #{nlayer_discriminator_forward.14} parent=1 // pred_check_branch
      %24 = sbr.rel (0) target = $region9
    $region8: #{nlayer_discriminator_forward.14} parent=1 // pred_region
      %s26 = ssub.s32 16, 16
      %27 = vsyncadd [#allocation6], %s26
      %s29 = sshll.u32 [#allocation5], 4
      %s30 = int_to_ptr.vmem [resolvable:$true] %s29
      %32 = dma.hbm_to_vmem [thread:$0]  %s1, 16, %s30, [#allocation6]
    $region9: #{nlayer_discriminator_forward.14} parent=1 // pred_fallthru
      _
    // Predicated region
    $region10: #{nlayer_discriminator_forward.14} parent=1 // pred_check
      _
    $region11: #{nlayer_discriminator_forward.14} parent=1 // pred_check_branch
      %34 = sbr.rel (0) target = $region13
    $region12: #{nlayer_discriminator_forward.14} parent=1 // pred_region
      %s36 = ssub.s32 16, 16
      %37 = vsyncadd [#allocation6], %s36
      %s39 = sshll.u32 [#allocation7], 4
      %s40 = int_to_ptr.vmem [resolvable:$true] %s39
      %42 = dma.hbm_to_vmem [thread:$0]  %s2, 16, %s40, [#allocation6]
    $region13: #{nlayer_discriminator_forward.14} parent=1 // pred_fallthru
      _
    // Predicated region
    $region14: #{nlayer_discriminator_forward.14} parent=1 // pred_check
      _
    $region15: #{nlayer_discriminator_forward.14} parent=1 // pred_check_branch
      %44 = sbr.rel (0) target = $region17
    $region16: #{nlayer_discriminator_forward.14} parent=1 // pred_region
      %45 = dma.done [#allocation3], 256
    $region17: #{nlayer_discriminator_forward.14} parent=1 // pred_fallthru
      _
    // Predicated region
    $region18: #{nlayer_discriminator_forward.14} parent=1 // pred_check
      _
    $region19: #{nlayer_discriminator_forward.14} parent=1 // pred_check_branch
      %47 = sbr.rel (0) target = $region21
    $region20: #{nlayer_discriminator_forward.14} parent=1 // pred_region
      %48 = dma.done [#allocation6], 16
    $region21: #{nlayer_discriminator_forward.14} parent=1 // pred_fallthru
      _
    // Predicated region
    $region22: #{nlayer_discriminator_forward.14} parent=1 // pred_check
      _
    $region23: #{nlayer_discriminator_forward.14} parent=1 // pred_check_branch
      %50 = sbr.rel (0) target = $region25
    $region24: #{nlayer_discriminator_forward.14} parent=1 // pred_region
      %51 = dma.done [#allocation6], 16
    $region25: #{nlayer_discriminator_forward.14} parent=1 // pred_fallthru
      _
    %v52 = vld [vmem:[#allocation2] sm:$0xf]
    %v53 = vld [vmem:[#allocation2 + $0x4] sm:$0xf]
    %v54 = vld [vmem:[#allocation2 + $0x8] sm:$0xf]
    %v55 = vld [vmem:[#allocation2 + $0xc] sm:$0xf]
    %v56 = vunpack.c.l.bf16 %v52
    %v57 = vunpack.c.l.bf16 %v53
    %v58 = vunpack.c.l.bf16 %v54
    %v59 = vunpack.c.l.bf16 %v55
    %v60 = vld [vmem:[#allocation5] sm:$0x1]
    %v62 = vlaneseq
    %v63 = vshrl.u32 %v62, 7
    %v64 = vsub.s32 0, %v63
    %v65 = vrot.slane %v60, %v64
    %v67 = vmul.f32 %v56, %v65
    %v68 = vmul.f32 %v57, %v65
    %v69 = vmul.f32 %v58, %v65
    %v70 = vmul.f32 %v59, %v65
    %v71 = vld [vmem:[#allocation7] sm:$0x1]
    %v73 = vlaneseq
    %v74 = vshrl.u32 %v73, 7
    %v75 = vsub.s32 0, %v74
    %v76 = vrot.slane %v71, %v75
    %v78 = vadd.f32 %v67, %v76
    %v79 = vadd.f32 %v68, %v76
    %v80 = vadd.f32 %v69, %v76
    %v81 = vadd.f32 %v70, %v76
    %vm82 = vcmp.ge.f32.partialorder %v78, 0.0
    %vm83 = vcmp.ge.f32.partialorder %v79, 0.0
    %vm84 = vcmp.ge.f32.partialorder %v80, 0.0
    %vm85 = vcmp.ge.f32.partialorder %v81, 0.0
    %v86 = vmul.f32 %v78, 0.2
    %v87 = vmul.f32 %v79, 0.2
    %v88 = vmul.f32 %v80, 0.2
    %v89 = vmul.f32 %v81, 0.2
    %v90 = vsel %vm82, %v78, %v86
    %v91 = vsel %vm83, %v79, %v87
    %v92 = vsel %vm84, %v80, %v88
    %v93 = vsel %vm85, %v81, %v89
    %v94 = vpack.c.bf16 %v91, %v90
    %v95 = vpack.c.bf16 %v93, %v92
    %v98 = vunpack.c.l.b16 %v94
    %v99 = vunpack.c.h.b16 %v94
    %v100 = vunpack.c.l.b16 %v95
    %v101 = vunpack.c.h.b16 %v95
    %v102 = vpack.c.b16 %v98, %v98
    %v103 = vpack.c.b16 %v99, %v99
    %v104 = vpack.c.b16 %v100, %v100
    %v105 = vpack.c.b16 %v101, %v101
    %110 = vst [vmem:[#allocation8] sm:$0xf] %v102
    %111 = vst [vmem:[#allocation8 + $0x4] sm:$0xf] %v103
    %112 = vst [vmem:[#allocation8 + $0x8] sm:$0xf] %v104
    %113 = vst [vmem:[#allocation8 + $0xc] sm:$0xf] %v105
    // Predicated region
    $region26: #{nlayer_discriminator_forward.14} parent=1 // pred_check
      _
    $region27: #{nlayer_discriminator_forward.14} parent=1 // pred_check_branch
      %115 = sbr.rel (0) target = $region29
    $region28: #{nlayer_discriminator_forward.14} parent=1 // pred_region
      %s117 = ssub.s32 256, 256
      %118 = vsyncadd [#allocation4], %s117
      %s119 = sshll.u32 [#allocation8], 4
      %s120 = int_to_ptr.vmem [resolvable:$true] %s119
      %125 = dma.vmem_to_hbm [thread:$0]  %s120, 256, %s3, [#allocation4], 64, 64, 4
    $region29: #{nlayer_discriminator_forward.14} parent=1 // pred_fallthru
      _
    // Predicated region
    $region30: #{nlayer_discriminator_forward.14} parent=1 // pred_check
      _
    $region31: #{nlayer_discriminator_forward.14} parent=1 // pred_check_branch
      %127 = sbr.rel (0) target = $region33
    $region32: #{nlayer_discriminator_forward.14} parent=1 // pred_region
      %128 = dma.done [#allocation4], 256
    $region33: #{nlayer_discriminator_forward.14} parent=1 // pred_fallthru
      _
    %129 = vsyncpa [#allocation3], 1
    %130 = vsyncpa [#allocation6], 1
    %131 = vsyncpa [#allocation4], 1

// kernel: nlayer_discriminator_forward.13
$region0: #{nlayer_discriminator_forward.13}
  #allocation0 [shape = 'u32[]', space=smem, size = 0x4, offset = 0x4, fixed_abs, tag = 'smem constant byte address 0x4 - core index']
  #allocation1 [shape = 'u32[144,128]{1,0:T(1,128)}', space=vmem, size = 0x12000, scoped, tag = 'internal scratch']
  #allocation2 [shape = 'f32[32,128]{1,0:T(8,128)}', space=vmem, size = 0x4000, scoped, tag = 'scratch operand']
  %s0 = inlined_call_operand.hbm [shape: bf16[32,1024], index: 0, kind: input, shape index: {}]
  %s1 = inlined_call_operand.hbm [shape: bf16[1024,128], index: 1, kind: input, shape index: {}]
  %s2 = inlined_call_operand.hbm [shape: bf16[32,128], index: 2, kind: output, shape index: {0}]
  %s3 = inlined_call_operand.hbm [shape: f32[8,128], index: 3, kind: output, shape index: {1}]
  %4 = xla_tuple %s2, %s3
  %s5 = sld [smem:[#allocation0]]
  $region42: #{nlayer_discriminator_forward.13} parent=0
    _
  %s7 = ssub.s32 1, %s5
  %s8 = scalar_select 0, %s7, %s5
  $region1: #{nlayer_discriminator_forward.13} parent=0
    #allocation3 [shape = 'u8[65536]{0}', space=vmem, size = 0x10000, scoped, tag = 'input window, operand 0, single buffered']
    #allocation4 [shape = 's32[1]{0}', space=sflag, size = 0x4, scoped, tag = 'scoped memory for nlayer_discriminator_forward.13']
    #allocation5 [shape = 's32[1]{0}', space=sflag, size = 0x4, scoped, tag = 'scoped memory for nlayer_discriminator_forward.13']
    #allocation6 [shape = 'u8[262144]{0}', space=vmem, size = 0x40000, scoped, tag = 'input window, operand 1, single buffered']
    #allocation7 [shape = 's32[1]{0}', space=sflag, size = 0x4, scoped, tag = 'scoped memory for nlayer_discriminator_forward.13']
    #allocation8 [shape = 'u8[8192]{0}', space=vmem, size = 0x2000, scoped, tag = 'output window, operand 0, single buffered']
    #allocation9 [shape = 'u8[4096]{0}', space=vmem, size = 0x1000, scoped, tag = 'output window, operand 1, single buffered']
    #allocation10 [shape = 's32[1]{0}', space=sflag, size = 0x4, scoped, tag = 'scoped memory for nlayer_discriminator_forward.13']
    %9 = vsyncpa [#allocation4], 0
    %10 = vsyncpa [#allocation7], 0
    %11 = vsyncpa [#allocation5], 0
    %12 = vsyncpa [#allocation10], 0
    // Predicated region
    $region2: #{nlayer_discriminator_forward.13} parent=1 // pred_check
      _
    $region3: #{nlayer_discriminator_forward.13} parent=1 // pred_check_branch
      %14 = sbr.rel (0) target = $region5
    $region4: #{nlayer_discriminator_forward.13} parent=1 // pred_region
      %s16 = ssub.s32 2048, 2048
      %17 = vsyncadd [#allocation4], %s16
      %s18 = sshll.u32 [#allocation3], 4
      %s19 = int_to_ptr.vmem [resolvable:$true] %s18
      %24 = dma.hbm_to_vmem [thread:$0]  %s0, 2048, %s19, [#allocation4], 512, 512, 32
    $region5: #{nlayer_discriminator_forward.13} parent=1 // pred_fallthru
      _
    // Predicated region
    $region6: #{nlayer_discriminator_forward.13} parent=1 // pred_check
      _
    $region7: #{nlayer_discriminator_forward.13} parent=1 // pred_check_branch
      %26 = sbr.rel (0) target = $region9
    $region8: #{nlayer_discriminator_forward.13} parent=1 // pred_region
      %s28 = ssub.s32 8192, 8192
      %29 = vsyncadd [#allocation7], %s28
      %s30 = sshll.u32 [#allocation6], 4
      %s31 = int_to_ptr.vmem [resolvable:$true] %s30
      %36 = dma.hbm_to_vmem [thread:$0]  %s1, 8192, %s31, [#allocation7], 64, 64, 4
    $region9: #{nlayer_discriminator_forward.13} parent=1 // pred_fallthru
      _
    // Predicated region
    $region10: #{nlayer_discriminator_forward.13} parent=1 // pred_check
      _
    $region11: #{nlayer_discriminator_forward.13} parent=1 // pred_check_branch
      %38 = sbr.rel (0) target = $region13
    $region12: #{nlayer_discriminator_forward.13} parent=1 // pred_region
      %39 = dma.done [#allocation4], 2048
    $region13: #{nlayer_discriminator_forward.13} parent=1 // pred_fallthru
      _
    // Predicated region
    $region14: #{nlayer_discriminator_forward.13} parent=1 // pred_check
      _
    $region15: #{nlayer_discriminator_forward.13} parent=1 // pred_check_branch
      %41 = sbr.rel (0) target = $region17
    $region16: #{nlayer_discriminator_forward.13} parent=1 // pred_region
      %42 = dma.done [#allocation7], 8192
    $region17: #{nlayer_discriminator_forward.13} parent=1 // pred_fallthru
      _
    %p44 = scmp.eq.s32.totalorder 0, 0
    // Predicated region
    $region18: #{nlayer_discriminator_forward.13} parent=1 // pred_check
      %p45 = pneg %p44
    $region19: #{nlayer_discriminator_forward.13} parent=1 // pred_check_branch
      %47 = sbr.rel (%p45) target = $region21
    $region20: #{nlayer_discriminator_forward.13} parent=1 // pred_region
      %48 = vst [vmem:[#allocation2] sm:$0xff] 0.0
      %49 = vst [vmem:[#allocation2 + $0x8] sm:$0xff] 0.0
      %50 = vst [vmem:[#allocation2 + $0x10] sm:$0xff] 0.0
      %51 = vst [vmem:[#allocation2 + $0x18] sm:$0xff] 0.0
    $region21: #{nlayer_discriminator_forward.13} parent=1 // pred_fallthru
      _
    %v52 = vld [vmem:[#allocation2] sm:$0xff]
    %v53 = vld [vmem:[#allocation2 + $0x8] sm:$0xff]
    %v54 = vld [vmem:[#allocation2 + $0x10] sm:$0xff]
    %v55 = vld [vmem:[#allocation2 + $0x18] sm:$0xff]
    %v56 = vld [vmem:[#allocation3] sm:$0xff]
    %v57 = vld [vmem:[#allocation3 + $0x8] sm:$0xff]
    %v58 = vld [vmem:[#allocation3 + $0x10] sm:$0xff]
    %v59 = vld [vmem:[#allocation3 + $0x18] sm:$0xff]
    %v60 = vld [vmem:[#allocation3 + $0x20] sm:$0xff]
    %v61 = vld [vmem:[#allocation3 + $0x28] sm:$0xff]
    %v62 = vld [vmem:[#allocation3 + $0x30] sm:$0xff]
    %v63 = vld [vmem:[#allocation3 + $0x38] sm:$0xff]
    %v64 = vld [vmem:[#allocation3 + $0x40] sm:$0xff]
    %v65 = vld [vmem:[#allocation3 + $0x48] sm:$0xff]
    %v66 = vld [vmem:[#allocation3 + $0x50] sm:$0xff]
    %v67 = vld [vmem:[#allocation3 + $0x58] sm:$0xff]
    %v68 = vld [vmem:[#allocation3 + $0x60] sm:$0xff]
    %v69 = vld [vmem:[#allocation3 + $0x68] sm:$0xff]
    %v70 = vld [vmem:[#allocation3 + $0x70] sm:$0xff]
    %v71 = vld [vmem:[#allocation3 + $0x78] sm:$0xff]
    %v72 = vld [vmem:[#allocation6] sm:$0xf]
    %v73 = vld [vmem:[#allocation6 + $0x4] sm:$0xf]
    %v74 = vld [vmem:[#allocation6 + $0x8] sm:$0xf]
    %v75 = vld [vmem:[#allocation6 + $0xc] sm:$0xf]
    %v76 = vld [vmem:[#allocation6 + $0x10] sm:$0xf]
    %v77 = vld [vmem:[#allocation6 + $0x14] sm:$0xf]
    %v78 = vld [vmem:[#allocation6 + $0x18] sm:$0xf]
    %v79 = vld [vmem:[#allocation6 + $0x1c] sm:$0xf]
    %v80 = vld [vmem:[#allocation6 + $0x20] sm:$0xf]
    %v81 = vld [vmem:[#allocation6 + $0x24] sm:$0xf]
    %v82 = vld [vmem:[#allocation6 + $0x28] sm:$0xf]
    %v83 = vld [vmem:[#allocation6 + $0x2c] sm:$0xf]
    %v84 = vld [vmem:[#allocation6 + $0x30] sm:$0xf]
    %v85 = vld [vmem:[#allocation6 + $0x34] sm:$0xf]
    %v86 = vld [vmem:[#allocation6 + $0x38] sm:$0xf]
    %v87 = vld [vmem:[#allocation6 + $0x3c] sm:$0xf]
    %v88 = vld [vmem:[#allocation6 + $0x40] sm:$0xf]
    %v89 = vld [vmem:[#allocation6 + $0x44] sm:$0xf]
    %v90 = vld [vmem:[#allocation6 + $0x48] sm:$0xf]
    %v91 = vld [vmem:[#allocation6 + $0x4c] sm:$0xf]
    %v92 = vld [vmem:[#allocation6 + $0x50] sm:$0xf]
    %v93 = vld [vmem:[#allocation6 + $0x54] sm:$0xf]
    %v94 = vld [vmem:[#allocation6 + $0x58] sm:$0xf]
    %v95 = vld [vmem:[#allocation6 + $0x5c] sm:$0xf]
    %v96 = vld [vmem:[#allocation6 + $0x60] sm:$0xf]
    %v97 = vld [vmem:[#allocation6 + $0x64] sm:$0xf]
    %v98 = vld [vmem:[#allocation6 + $0x68] sm:$0xf]
    %v99 = vld [vmem:[#allocation6 + $0x6c] sm:$0xf]
    %v100 = vld [vmem:[#allocation6 + $0x70] sm:$0xf]
    %v101 = vld [vmem:[#allocation6 + $0x74] sm:$0xf]
    %v102 = vld [vmem:[#allocation6 + $0x78] sm:$0xf]
    %v103 = vld [vmem:[#allocation6 + $0x7c] sm:$0xf]
    %v104 = vld [vmem:[#allocation6 + $0x80] sm:$0xf]
    %v105 = vld [vmem:[#allocation6 + $0x84] sm:$0xf]
    %v106 = vld [vmem:[#allocation6 + $0x88] sm:$0xf]
    %v107 = vld [vmem:[#allocation6 + $0x8c] sm:$0xf]
    %v108 = vld [vmem:[#allocation6 + $0x90] sm:$0xf]
    %v109 = vld [vmem:[#allocation6 + $0x94] sm:$0xf]
    %v110 = vld [vmem:[#allocation6 + $0x98] sm:$0xf]
    %v111 = vld [vmem:[#allocation6 + $0x9c] sm:$0xf]
    %v112 = vld [vmem:[#allocation6 + $0xa0] sm:$0xf]
    %v113 = vld [vmem:[#allocation6 + $0xa4] sm:$0xf]
    %v114 = vld [vmem:[#allocation6 + $0xa8] sm:$0xf]
    %v115 = vld [vmem:[#allocation6 + $0xac] sm:$0xf]
    %v116 = vld [vmem:[#allocation6 + $0xb0] sm:$0xf]
    %v117 = vld [vmem:[#allocation6 + $0xb4] sm:$0xf]
    %v118 = vld [vmem:[#allocation6 + $0xb8] sm:$0xf]
    %v119 = vld [vmem:[#allocation6 + $0xbc] sm:$0xf]
    %v120 = vld [vmem:[#allocation6 + $0xc0] sm:$0xf]
    %v121 = vld [vmem:[#allocation6 + $0xc4] sm:$0xf]
    %v122 = vld [vmem:[#allocation6 + $0xc8] sm:$0xf]
    %v123 = vld [vmem:[#allocation6 + $0xcc] sm:$0xf]
    %v124 = vld [vmem:[#allocation6 + $0xd0] sm:$0xf]
    %v125 = vld [vmem:[#allocation6 + $0xd4] sm:$0xf]
    %v126 = vld [vmem:[#allocation6 + $0xd8] sm:$0xf]
    %v127 = vld [vmem:[#allocation6 + $0xdc] sm:$0xf]
    %v128 = vld [vmem:[#allocation6 + $0xe0] sm:$0xf]
    %v129 = vld [vmem:[#allocation6 + $0xe4] sm:$0xf]
    %v130 = vld [vmem:[#allocation6 + $0xe8] sm:$0xf]
    %v131 = vld [vmem:[#allocation6 + $0xec] sm:$0xf]
    %v132 = vld [vmem:[#allocation6 + $0xf0] sm:$0xf]
    %v133 = vld [vmem:[#allocation6 + $0xf4] sm:$0xf]
    %v134 = vld [vmem:[#allocation6 + $0xf8] sm:$0xf]
    %v135 = vld [vmem:[#allocation6 + $0xfc] sm:$0xf]
    %v136 = vld [vmem:[#allocation6 + $0x100] sm:$0xf]
    %v137 = vld [vmem:[#allocation6 + $0x104] sm:$0xf]
    %v138 = vld [vmem:[#allocation6 + $0x108] sm:$0xf]
    %v139 = vld [vmem:[#allocation6 + $0x10c] sm:$0xf]
    %v140 = vld [vmem:[#allocation6 + $0x110] sm:$0xf]
    %v141 = vld [vmem:[#allocation6 + $0x114] sm:$0xf]
    %v142 = vld [vmem:[#allocation6 + $0x118] sm:$0xf]
    %v143 = vld [vmem:[#allocation6 + $0x11c] sm:$0xf]
    %v144 = vld [vmem:[#allocation6 + $0x120] sm:$0xf]
    %v145 = vld [vmem:[#allocation6 + $0x124] sm:$0xf]
    %v146 = vld [vmem:[#allocation6 + $0x128] sm:$0xf]
    %v147 = vld [vmem:[#allocation6 + $0x12c] sm:$0xf]
    %v148 = vld [vmem:[#allocation6 + $0x130] sm:$0xf]
    %v149 = vld [vmem:[#allocation6 + $0x134] sm:$0xf]
    %v150 = vld [vmem:[#allocation6 + $0x138] sm:$0xf]
    %v151 = vld [vmem:[#allocation6 + $0x13c] sm:$0xf]
    %v152 = vld [vmem:[#allocation6 + $0x140] sm:$0xf]
    %v153 = vld [vmem:[#allocation6 + $0x144] sm:$0xf]
    %v154 = vld [vmem:[#allocation6 + $0x148] sm:$0xf]
    %v155 = vld [vmem:[#allocation6 + $0x14c] sm:$0xf]
    %v156 = vld [vmem:[#allocation6 + $0x150] sm:$0xf]
    %v157 = vld [vmem:[#allocation6 + $0x154] sm:$0xf]
    %v158 = vld [vmem:[#allocation6 + $0x158] sm:$0xf]
    %v159 = vld [vmem:[#allocation6 + $0x15c] sm:$0xf]
    %v160 = vld [vmem:[#allocation6 + $0x160] sm:$0xf]
    %v161 = vld [vmem:[#allocation6 + $0x164] sm:$0xf]
    %v162 = vld [vmem:[#allocation6 + $0x168] sm:$0xf]
    %v163 = vld [vmem:[#allocation6 + $0x16c] sm:$0xf]
    %v164 = vld [vmem:[#allocation6 + $0x170] sm:$0xf]
    %v165 = vld [vmem:[#allocation6 + $0x174] sm:$0xf]
    %v166 = vld [vmem:[#allocation6 + $0x178] sm:$0xf]
    %v167 = vld [vmem:[#allocation6 + $0x17c] sm:$0xf]
    %v168 = vld [vmem:[#allocation6 + $0x180] sm:$0xf]
    %v169 = vld [vmem:[#allocation6 + $0x184] sm:$0xf]
    %v170 = vld [vmem:[#allocation6 + $0x188] sm:$0xf]
    %v171 = vld [vmem:[#allocation6 + $0x18c] sm:$0xf]
    %v172 = vld [vmem:[#allocation6 + $0x190] sm:$0xf]
    %v173 = vld [vmem:[#allocation6 + $0x194] sm:$0xf]
    %v174 = vld [vmem:[#allocation6 + $0x198] sm:$0xf]
    %v175 = vld [vmem:[#allocation6 + $0x19c] sm:$0xf]
    %v176 = vld [vmem:[#allocation6 + $0x1a0] sm:$0xf]
    %v177 = vld [vmem:[#allocation6 + $0x1a4] sm:$0xf]
    %v178 = vld [vmem:[#allocation6 + $0x1a8] sm:$0xf]
    %v179 = vld [vmem:[#allocation6 + $0x1ac] sm:$0xf]
    %v180 = vld [vmem:[#allocation6 + $0x1b0] sm:$0xf]
    %v181 = vld [vmem:[#allocation6 + $0x1b4] sm:$0xf]
    %v182 = vld [vmem:[#allocation6 + $0x1b8] sm:$0xf]
    %v183 = vld [vmem:[#allocation6 + $0x1bc] sm:$0xf]
    %v184 = vld [vmem:[#allocation6 + $0x1c0] sm:$0xf]
    %v185 = vld [vmem:[#allocation6 + $0x1c4] sm:$0xf]
    %v186 = vld [vmem:[#allocation6 + $0x1c8] sm:$0xf]
    %v187 = vld [vmem:[#allocation6 + $0x1cc] sm:$0xf]
    %v188 = vld [vmem:[#allocation6 + $0x1d0] sm:$0xf]
    %v189 = vld [vmem:[#allocation6 + $0x1d4] sm:$0xf]
    %v190 = vld [vmem:[#allocation6 + $0x1d8] sm:$0xf]
    %v191 = vld [vmem:[#allocation6 + $0x1dc] sm:$0xf]
    %v192 = vld [vmem:[#allocation6 + $0x1e0] sm:$0xf]
    %v193 = vld [vmem:[#allocation6 + $0x1e4] sm:$0xf]
    %v194 = vld [vmem:[#allocation6 + $0x1e8] sm:$0xf]
    %v195 = vld [vmem:[#allocation6 + $0x1ec] sm:$0xf]
    %v196 = vld [vmem:[#allocation6 + $0x1f0] sm:$0xf]
    %v197 = vld [vmem:[#allocation6 + $0x1f4] sm:$0xf]
    %v198 = vld [vmem:[#allocation6 + $0x1f8] sm:$0xf]
    %v199 = vld [vmem:[#allocation6 + $0x1fc] sm:$0xf]
    %v216 = vunpack.c.l.b16 %v56
    %v217 = vunpack.c.h.b16 %v56
    %v218 = vunpack.c.l.b16 %v57
    %v219 = vunpack.c.h.b16 %v57
    %v220 = vunpack.c.l.b16 %v58
    %v221 = vunpack.c.h.b16 %v58
    %v222 = vunpack.c.l.b16 %v59
    %v223 = vunpack.c.h.b16 %v59
    %v224 = vunpack.c.l.b16 %v60
    %v225 = vunpack.c.h.b16 %v60
    %v226 = vunpack.c.l.b16 %v61
    %v227 = vunpack.c.h.b16 %v61
    %v228 = vunpack.c.l.b16 %v62
    %v229 = vunpack.c.h.b16 %v62
    %v230 = vunpack.c.l.b16 %v63
    %v231 = vunpack.c.h.b16 %v63
    %v232 = vunpack.c.l.b16 %v64
    %v233 = vunpack.c.h.b16 %v64
    %v234 = vunpack.c.l.b16 %v65
    %v235 = vunpack.c.h.b16 %v65
    %v236 = vunpack.c.l.b16 %v66
    %v237 = vunpack.c.h.b16 %v66
    %v238 = vunpack.c.l.b16 %v67
    %v239 = vunpack.c.h.b16 %v67
    %v240 = vunpack.c.l.b16 %v68
    %v241 = vunpack.c.h.b16 %v68
    %v242 = vunpack.c.l.b16 %v69
    %v243 = vunpack.c.h.b16 %v69
    %v244 = vunpack.c.l.b16 %v70
    %v245 = vunpack.c.h.b16 %v70
    %v246 = vunpack.c.l.b16 %v71
    %v247 = vunpack.c.h.b16 %v71
    %v248 = vpack.c.b16 %v224, %v216
    %v249 = vpack.c.b16 %v225, %v217
    %v250 = vpack.c.b16 %v226, %v218
    %v251 = vpack.c.b16 %v227, %v219
    %v252 = vpack.c.b16 %v228, %v220
    %v253 = vpack.c.b16 %v229, %v221
    %v254 = vpack.c.b16 %v230, %v222
    %v255 = vpack.c.b16 %v231, %v223
    %v256 = vpack.c.b16 %v240, %v232
    %v257 = vpack.c.b16 %v241, %v233
    %v258 = vpack.c.b16 %v242, %v234
    %v259 = vpack.c.b16 %v243, %v235
    %v260 = vpack.c.b16 %v244, %v236
    %v261 = vpack.c.b16 %v245, %v237
    %v262 = vpack.c.b16 %v246, %v238
    %v263 = vpack.c.b16 %v247, %v239
    %v408 = vunpack.c.l.b16 %v72
    %v409 = vunpack.c.l.b16 %v73
    %v410 = vunpack.c.l.b16 %v74
    %v411 = vunpack.c.l.b16 %v75
    %v412 = vunpack.c.l.b16 %v76
    %v413 = vunpack.c.l.b16 %v77
    %v414 = vunpack.c.l.b16 %v78
    %v415 = vunpack.c.l.b16 %v79
    %v416 = vunpack.c.l.b16 %v80
    %v417 = vunpack.c.l.b16 %v81
    %v418 = vunpack.c.l.b16 %v82
    %v419 = vunpack.c.l.b16 %v83
    %v420 = vunpack.c.l.b16 %v84
    %v421 = vunpack.c.l.b16 %v85
    %v422 = vunpack.c.l.b16 %v86
    %v423 = vunpack.c.l.b16 %v87
    %v424 = vunpack.c.l.b16 %v88
    %v425 = vunpack.c.l.b16 %v89
    %v426 = vunpack.c.l.b16 %v90
    %v427 = vunpack.c.l.b16 %v91
    %v428 = vunpack.c.l.b16 %v92
    %v429 = vunpack.c.l.b16 %v93
    %v430 = vunpack.c.l.b16 %v94
    %v431 = vunpack.c.l.b16 %v95
    %v432 = vunpack.c.l.b16 %v96
    %v433 = vunpack.c.l.b16 %v97
    %v434 = vunpack.c.l.b16 %v98
    %v435 = vunpack.c.l.b16 %v99
    %v436 = vunpack.c.l.b16 %v100
    %v437 = vunpack.c.l.b16 %v101
    %v438 = vunpack.c.l.b16 %v102
    %v439 = vunpack.c.l.b16 %v103
    %v440 = vunpack.c.l.b16 %v104
    %v441 = vunpack.c.l.b16 %v105
    %v442 = vunpack.c.l.b16 %v106
    %v443 = vunpack.c.l.b16 %v107
    %v444 = vunpack.c.l.b16 %v108
    %v445 = vunpack.c.l.b16 %v109
    %v446 = vunpack.c.l.b16 %v110
    %v447 = vunpack.c.l.b16 %v111
    %v448 = vunpack.c.l.b16 %v112
    %v449 = vunpack.c.l.b16 %v113
    %v450 = vunpack.c.l.b16 %v114
    %v451 = vunpack.c.l.b16 %v115
    %v452 = vunpack.c.l.b16 %v116
    %v453 = vunpack.c.l.b16 %v117
    %v454 = vunpack.c.l.b16 %v118
    %v455 = vunpack.c.l.b16 %v119
    %v456 = vunpack.c.l.b16 %v120
    %v457 = vunpack.c.l.b16 %v121
    %v458 = vunpack.c.l.b16 %v122
    %v459 = vunpack.c.l.b16 %v123
    %v460 = vunpack.c.l.b16 %v124
    %v461 = vunpack.c.l.b16 %v125
    %v462 = vunpack.c.l.b16 %v126
    %v463 = vunpack.c.l.b16 %v127
    %v464 = vunpack.c.l.b16 %v128
    %v465 = vunpack.c.l.b16 %v129
    %v466 = vunpack.c.l.b16 %v130
    %v467 = vunpack.c.l.b16 %v131
    %v468 = vunpack.c.l.b16 %v132
    %v469 = vunpack.c.l.b16 %v133
    %v470 = vunpack.c.l.b16 %v134
    %v471 = vunpack.c.l.b16 %v135
    %v472 = vunpack.c.l.b16 %v136
    %v473 = vunpack.c.l.b16 %v137
    %v474 = vunpack.c.l.b16 %v138
    %v475 = vunpack.c.l.b16 %v139
    %v476 = vunpack.c.l.b16 %v140
    %v477 = vunpack.c.l.b16 %v141
    %v478 = vunpack.c.l.b16 %v142
    %v479 = vunpack.c.l.b16 %v143
    %v480 = vunpack.c.l.b16 %v144
    %v481 = vunpack.c.l.b16 %v145
    %v482 = vunpack.c.l.b16 %v146
    %v483 = vunpack.c.l.b16 %v147
    %v484 = vunpack.c.l.b16 %v148
    %v485 = vunpack.c.l.b16 %v149
    %v486 = vunpack.c.l.b16 %v150
    %v487 = vunpack.c.l.b16 %v151
    %v488 = vunpack.c.l.b16 %v152
    %v489 = vunpack.c.l.b16 %v153
    %v490 = vunpack.c.l.b16 %v154
    %v491 = vunpack.c.l.b16 %v155
    %v492 = vunpack.c.l.b16 %v156
    %v493 = vunpack.c.l.b16 %v157
    %v494 = vunpack.c.l.b16 %v158
    %v495 = vunpack.c.l.b16 %v159
    %v496 = vunpack.c.l.b16 %v160
    %v497 = vunpack.c.l.b16 %v161
    %v498 = vunpack.c.l.b16 %v162
    %v499 = vunpack.c.l.b16 %v163
    %v500 = vunpack.c.l.b16 %v164
    %v501 = vunpack.c.l.b16 %v165
    %v502 = vunpack.c.l.b16 %v166
    %v503 = vunpack.c.l.b16 %v167
    %v504 = vunpack.c.l.b16 %v168
    %v505 = vunpack.c.l.b16 %v169
    %v506 = vunpack.c.l.b16 %v170
    %v507 = vunpack.c.l.b16 %v171
    %v508 = vunpack.c.l.b16 %v172
    %v509 = vunpack.c.l.b16 %v173
    %v510 = vunpack.c.l.b16 %v174
    %v511 = vunpack.c.l.b16 %v175
    %v512 = vunpack.c.l.b16 %v176
    %v513 = vunpack.c.l.b16 %v177
    %v514 = vunpack.c.l.b16 %v178
    %v515 = vunpack.c.l.b16 %v179
    %v516 = vunpack.c.l.b16 %v180
    %v517 = vunpack.c.l.b16 %v181
    %v518 = vunpack.c.l.b16 %v182
    %v519 = vunpack.c.l.b16 %v183
    %v520 = vunpack.c.l.b16 %v184
    %v521 = vunpack.c.l.b16 %v185
    %v522 = vunpack.c.l.b16 %v186
    %v523 = vunpack.c.l.b16 %v187
    %v524 = vunpack.c.l.b16 %v188
    %v525 = vunpack.c.l.b16 %v189
    %v526 = vunpack.c.l.b16 %v190
    %v527 = vunpack.c.l.b16 %v191
    %v528 = vunpack.c.l.b16 %v192
    %v529 = vunpack.c.l.b16 %v193
    %v530 = vunpack.c.l.b16 %v194
    %v531 = vunpack.c.l.b16 %v195
    %v532 = vunpack.c.l.b16 %v196
    %v533 = vunpack.c.l.b16 %v197
    %v534 = vunpack.c.l.b16 %v198
    %v535 = vunpack.c.l.b16 %v199
    %v536 = vpack.c.b16 %v409, %v408
    %v537 = vpack.c.b16 %v411, %v410
    %v538 = vpack.c.b16 %v413, %v412
    %v539 = vpack.c.b16 %v415, %v414
    %v540 = vpack.c.b16 %v417, %v416
    %v541 = vpack.c.b16 %v419, %v418
    %v542 = vpack.c.b16 %v421, %v420
    %v543 = vpack.c.b16 %v423, %v422
    %v544 = vpack.c.b16 %v425, %v424
    %v545 = vpack.c.b16 %v427, %v426
    %v546 = vpack.c.b16 %v429, %v428
    %v547 = vpack.c.b16 %v431, %v430
    %v548 = vpack.c.b16 %v433, %v432
    %v549 = vpack.c.b16 %v435, %v434
    %v550 = vpack.c.b16 %v437, %v436
    %v551 = vpack.c.b16 %v439, %v438
    %v552 = vpack.c.b16 %v441, %v440
    %v553 = vpack.c.b16 %v443, %v442
    %v554 = vpack.c.b16 %v445, %v444
    %v555 = vpack.c.b16 %v447, %v446
    %v556 = vpack.c.b16 %v449, %v448
    %v557 = vpack.c.b16 %v451, %v450
    %v558 = vpack.c.b16 %v453, %v452
    %v559 = vpack.c.b16 %v455, %v454
    %v560 = vpack.c.b16 %v457, %v456
    %v561 = vpack.c.b16 %v459, %v458
    %v562 = vpack.c.b16 %v461, %v460
    %v563 = vpack.c.b16 %v463, %v462
    %v564 = vpack.c.b16 %v465, %v464
    %v565 = vpack.c.b16 %v467, %v466
    %v566 = vpack.c.b16 %v469, %v468
    %v567 = vpack.c.b16 %v471, %v470
    %v568 = vpack.c.b16 %v473, %v472
    %v569 = vpack.c.b16 %v475, %v474
    %v570 = vpack.c.b16 %v477, %v476
    %v571 = vpack.c.b16 %v479, %v478
    %v572 = vpack.c.b16 %v481, %v480
    %v573 = vpack.c.b16 %v483, %v482
    %v574 = vpack.c.b16 %v485, %v484
    %v575 = vpack.c.b16 %v487, %v486
    %v576 = vpack.c.b16 %v489, %v488
    %v577 = vpack.c.b16 %v491, %v490
    %v578 = vpack.c.b16 %v493, %v492
    %v579 = vpack.c.b16 %v495, %v494
    %v580 = vpack.c.b16 %v497, %v496
    %v581 = vpack.c.b16 %v499, %v498
    %v582 = vpack.c.b16 %v501, %v500
    %v583 = vpack.c.b16 %v503, %v502
    %v584 = vpack.c.b16 %v505, %v504
    %v585 = vpack.c.b16 %v507, %v506
    %v586 = vpack.c.b16 %v509, %v508
    %v587 = vpack.c.b16 %v511, %v510
    %v588 = vpack.c.b16 %v513, %v512
    %v589 = vpack.c.b16 %v515, %v514
    %v590 = vpack.c.b16 %v517, %v516
    %v591 = vpack.c.b16 %v519, %v518
    %v592 = vpack.c.b16 %v521, %v520
    %v593 = vpack.c.b16 %v523, %v522
    %v594 = vpack.c.b16 %v525, %v524
    %v595 = vpack.c.b16 %v527, %v526
    %v596 = vpack.c.b16 %v529, %v528
    %v597 = vpack.c.b16 %v531, %v530
    %v598 = vpack.c.b16 %v533, %v532
    %v599 = vpack.c.b16 %v535, %v534
    %664 = vmatprep.subr.bf16.mxu0 0
    %665 = vmatpush1.bf16.msra.mxu0 %v536
    %666 = vmatprep.subr.bf16.mxu0 0
    %667 = vmatpush1.bf16.msra.mxu0 %v537
    %668 = vmatprep.subr.bf16.mxu0 0
    %669 = vmatpush1.bf16.msra.mxu0 %v538
    %670 = vmatprep.subr.bf16.mxu0 0
    %671 = vmatpush1.bf16.msra.mxu0 %v539
    %672 = vmatprep.subr.bf16.mxu0 0
    %673 = vmatpush1.bf16.msra.mxu0 %v540
    %674 = vmatprep.subr.bf16.mxu0 0
    %675 = vmatpush1.bf16.msra.mxu0 %v541
    %676 = vmatprep.subr.bf16.mxu0 0
    %677 = vmatpush1.bf16.msra.mxu0 %v542
    %678 = vmatprep.subr.bf16.mxu0 0
    %679 = vmatpush1.bf16.msra.mxu0 %v543
    %680 = vmatprep.subr.bf16.mxu0 0
    %681 = vmatpush1.bf16.msra.mxu0 %v544
    %682 = vmatprep.subr.bf16.mxu0 0
    %683 = vmatpush1.bf16.msra.mxu0 %v545
    %684 = vmatprep.subr.bf16.mxu0 0
    %685 = vmatpush1.bf16.msra.mxu0 %v546
    %686 = vmatprep.subr.bf16.mxu0 0
    %687 = vmatpush1.bf16.msra.mxu0 %v547
    %688 = vmatprep.subr.bf16.mxu0 0
    %689 = vmatpush1.bf16.msra.mxu0 %v548
    %690 = vmatprep.subr.bf16.mxu0 0
    %691 = vmatpush1.bf16.msra.mxu0 %v549
    %692 = vmatprep.subr.bf16.mxu0 0
    %693 = vmatpush1.bf16.msra.mxu0 %v550
    %694 = vmatprep.subr.bf16.mxu0 0
    %695 = vmatpush1.bf16.msra.mxu0 %v551
    %696 = vmatprep.mubr.bf16.mxu0 %v249
    %697 = vmatmul.mubr.bf16.gmra.mrb[0].mxu0 %v248
    %v698 = vpop.f32.mrb[0].mxu0
    %v699 = vadd.f32 0.0, %v698
    %v700 = vpop.f32.mrb[0].mxu0
    %v701 = vpop.f32.mrb[0].mxu0
    %v702 = vadd.f32 0.0, %v701
    %v703 = vpop.f32.mrb[0].mxu0
    %704 = vmatprep.mubr.bf16.mxu0 %v257
    %705 = vmatmul.mubr.bf16.gmra.mrb[0].mxu0 %v256
    %v706 = vpop.f32.mrb[0].mxu0
    %v707 = vadd.f32 0.0, %v706
    %v708 = vpop.f32.mrb[0].mxu0
    %v709 = vpop.f32.mrb[0].mxu0
    %v710 = vadd.f32 0.0, %v709
    %v711 = vpop.f32.mrb[0].mxu0
    %712 = vdwg.mxu0
    %713 = vmatprep.subr.bf16.mxu0 0
    %714 = vmatpush1.bf16.msra.mxu0 %v552
    %715 = vmatprep.subr.bf16.mxu0 0
    %716 = vmatpush1.bf16.msra.mxu0 %v553
    %717 = vmatprep.subr.bf16.mxu0 0
    %718 = vmatpush1.bf16.msra.mxu0 %v554
    %719 = vmatprep.subr.bf16.mxu0 0
    %720 = vmatpush1.bf16.msra.mxu0 %v555
    %721 = vmatprep.subr.bf16.mxu0 0
    %722 = vmatpush1.bf16.msra.mxu0 %v556
    %723 = vmatprep.subr.bf16.mxu0 0
    %724 = vmatpush1.bf16.msra.mxu0 %v557
    %725 = vmatprep.subr.bf16.mxu0 0
    %726 = vmatpush1.bf16.msra.mxu0 %v558
    %727 = vmatprep.subr.bf16.mxu0 0
    %728 = vmatpush1.bf16.msra.mxu0 %v559
    %729 = vmatprep.subr.bf16.mxu0 0
    %730 = vmatpush1.bf16.msra.mxu0 %v560
    %731 = vmatprep.subr.bf16.mxu0 0
    %732 = vmatpush1.bf16.msra.mxu0 %v561
    %733 = vmatprep.subr.bf16.mxu0 0
    %734 = vmatpush1.bf16.msra.mxu0 %v562
    %735 = vmatprep.subr.bf16.mxu0 0
    %736 = vmatpush1.bf16.msra.mxu0 %v563
    %737 = vmatprep.subr.bf16.mxu0 0
    %738 = vmatpush1.bf16.msra.mxu0 %v564
    %739 = vmatprep.subr.bf16.mxu0 0
    %740 = vmatpush1.bf16.msra.mxu0 %v565
    %741 = vmatprep.subr.bf16.mxu0 0
    %742 = vmatpush1.bf16.msra.mxu0 %v566
    %743 = vmatprep.subr.bf16.mxu0 0
    %744 = vmatpush1.bf16.msra.mxu0 %v567
    %745 = vmatprep.mubr.bf16.mxu0 %v251
    %746 = vmatmul.mubr.bf16.gmra.mrb[0].mxu0 %v250
    %v747 = vpop.f32.mrb[0].mxu0
    %v748 = vadd.f32 %v699, %v747
    %v749 = vpop.f32.mrb[0].mxu0
    %v750 = vpop.f32.mrb[0].mxu0
    %v751 = vadd.f32 %v702, %v750
    %v752 = vpop.f32.mrb[0].mxu0
    %753 = vmatprep.mubr.bf16.mxu0 %v259
    %754 = vmatmul.mubr.bf16.gmra.mrb[0].mxu0 %v258
    %v755 = vpop.f32.mrb[0].mxu0
    %v756 = vadd.f32 %v707, %v755
    %v757 = vpop.f32.mrb[0].mxu0
    %v758 = vpop.f32.mrb[0].mxu0
    %v759 = vadd.f32 %v710, %v758
    %v760 = vpop.f32.mrb[0].mxu0
    %761 = vdwg.mxu0
    %762 = vmatprep.subr.bf16.mxu0 0
    %763 = vmatpush1.bf16.msra.mxu0 %v568
    %764 = vmatprep.subr.bf16.mxu0 0
    %765 = vmatpush1.bf16.msra.mxu0 %v569
    %766 = vmatprep.subr.bf16.mxu0 0
    %767 = vmatpush1.bf16.msra.mxu0 %v570
    %768 = vmatprep.subr.bf16.mxu0 0
    %769 = vmatpush1.bf16.msra.mxu0 %v571
    %770 = vmatprep.subr.bf16.mxu0 0
    %771 = vmatpush1.bf16.msra.mxu0 %v572
    %772 = vmatprep.subr.bf16.mxu0 0
    %773 = vmatpush1.bf16.msra.mxu0 %v573
    %774 = vmatprep.subr.bf16.mxu0 0
    %775 = vmatpush1.bf16.msra.mxu0 %v574
    %776 = vmatprep.subr.bf16.mxu0 0
    %777 = vmatpush1.bf16.msra.mxu0 %v575
    %778 = vmatprep.subr.bf16.mxu0 0
    %779 = vmatpush1.bf16.msra.mxu0 %v576
    %780 = vmatprep.subr.bf16.mxu0 0
    %781 = vmatpush1.bf16.msra.mxu0 %v577
    %782 = vmatprep.subr.bf16.mxu0 0
    %783 = vmatpush1.bf16.msra.mxu0 %v578
    %784 = vmatprep.subr.bf16.mxu0 0
    %785 = vmatpush1.bf16.msra.mxu0 %v579
    %786 = vmatprep.subr.bf16.mxu0 0
    %787 = vmatpush1.bf16.msra.mxu0 %v580
    %788 = vmatprep.subr.bf16.mxu0 0
    %789 = vmatpush1.bf16.msra.mxu0 %v581
    %790 = vmatprep.subr.bf16.mxu0 0
    %791 = vmatpush1.bf16.msra.mxu0 %v582
    %792 = vmatprep.subr.bf16.mxu0 0
    %793 = vmatpush1.bf16.msra.mxu0 %v583
    %794 = vmatprep.mubr.bf16.mxu0 %v253
    %795 = vmatmul.mubr.bf16.gmra.mrb[0].mxu0 %v252
    %v796 = vpop.f32.mrb[0].mxu0
    %v797 = vadd.f32 %v748, %v796
    %v798 = vpop.f32.mrb[0].mxu0
    %v799 = vpop.f32.mrb[0].mxu0
    %v800 = vadd.f32 %v751, %v799
    %v801 = vpop.f32.mrb[0].mxu0
    %802 = vmatprep.mubr.bf16.mxu0 %v261
    %803 = vmatmul.mubr.bf16.gmra.mrb[0].mxu0 %v260
    %v804 = vpop.f32.mrb[0].mxu0
    %v805 = vadd.f32 %v756, %v804
    %v806 = vpop.f32.mrb[0].mxu0
    %v807 = vpop.f32.mrb[0].mxu0
    %v808 = vadd.f32 %v759, %v807
    %v809 = vpop.f32.mrb[0].mxu0
    %810 = vdwg.mxu0
    %811 = vmatprep.subr.bf16.mxu0 0
    %812 = vmatpush1.bf16.msra.mxu0 %v584
    %813 = vmatprep.subr.bf16.mxu0 0
    %814 = vmatpush1.bf16.msra.mxu0 %v585
    %815 = vmatprep.subr.bf16.mxu0 0
    %816 = vmatpush1.bf16.msra.mxu0 %v586
    %817 = vmatprep.subr.bf16.mxu0 0
    %818 = vmatpush1.bf16.msra.mxu0 %v587
    %819 = vmatprep.subr.bf16.mxu0 0
    %820 = vmatpush1.bf16.msra.mxu0 %v588
    %821 = vmatprep.subr.bf16.mxu0 0
    %822 = vmatpush1.bf16.msra.mxu0 %v589
    %823 = vmatprep.subr.bf16.mxu0 0
    %824 = vmatpush1.bf16.msra.mxu0 %v590
    %825 = vmatprep.subr.bf16.mxu0 0
    %826 = vmatpush1.bf16.msra.mxu0 %v591
    %827 = vmatprep.subr.bf16.mxu0 0
    %828 = vmatpush1.bf16.msra.mxu0 %v592
    %829 = vmatprep.subr.bf16.mxu0 0
    %830 = vmatpush1.bf16.msra.mxu0 %v593
    %831 = vmatprep.subr.bf16.mxu0 0
    %832 = vmatpush1.bf16.msra.mxu0 %v594
    %833 = vmatprep.subr.bf16.mxu0 0
    %834 = vmatpush1.bf16.msra.mxu0 %v595
    %835 = vmatprep.subr.bf16.mxu0 0
    %836 = vmatpush1.bf16.msra.mxu0 %v596
    %837 = vmatprep.subr.bf16.mxu0 0
    %838 = vmatpush1.bf16.msra.mxu0 %v597
    %839 = vmatprep.subr.bf16.mxu0 0
    %840 = vmatpush1.bf16.msra.mxu0 %v598
    %841 = vmatprep.subr.bf16.mxu0 0
    %842 = vmatpush1.bf16.msra.mxu0 %v599
    %843 = vmatprep.mubr.bf16.mxu0 %v255
    %844 = vmatmul.mubr.bf16.gmra.mrb[0].mxu0 %v254
    %v845 = vpop.f32.mrb[0].mxu0
    %v846 = vadd.f32 %v797, %v845
    %v847 = vpop.f32.mrb[0].mxu0
    %v848 = vpop.f32.mrb[0].mxu0
    %v849 = vadd.f32 %v800, %v848
    %v850 = vpop.f32.mrb[0].mxu0
    %851 = vmatprep.mubr.bf16.mxu0 %v263
    %852 = vmatmul.mubr.bf16.gmra.mrb[0].mxu0 %v262
    %v853 = vpop.f32.mrb[0].mxu0
    %v854 = vadd.f32 %v805, %v853
    %v855 = vpop.f32.mrb[0].mxu0
    %v856 = vpop.f32.mrb[0].mxu0
    %v857 = vadd.f32 %v808, %v856
    %v858 = vpop.f32.mrb[0].mxu0
    %859 = vdwg.mxu0
    %v860 = vadd.f32 %v52, %v846
    %v861 = vadd.f32 %v53, %v849
    %v862 = vadd.f32 %v54, %v854
    %v863 = vadd.f32 %v55, %v857
    %864 = vst [vmem:[#allocation2] sm:$0xff] %v860
    %865 = vst [vmem:[#allocation2 + $0x8] sm:$0xff] %v861
    %866 = vst [vmem:[#allocation2 + $0x10] sm:$0xff] %v862
    %867 = vst [vmem:[#allocation2 + $0x18] sm:$0xff] %v863
    // Predicated region
    $region22: #{nlayer_discriminator_forward.13} parent=1 // pred_check
      %p868 = pneg %p44
    $region23: #{nlayer_discriminator_forward.13} parent=1 // pred_check_branch
      %870 = sbr.rel (%p868) target = $region25
    $region24: #{nlayer_discriminator_forward.13} parent=1 // pred_region
      %v871 = vld [vmem:[#allocation2] sm:$0xff]
      %v872 = vld [vmem:[#allocation2 + $0x8] sm:$0xff]
      %v873 = vld [vmem:[#allocation2 + $0x10] sm:$0xff]
      %v874 = vld [vmem:[#allocation2 + $0x18] sm:$0xff]
      %v875 = vpack.c.bf16 %v872, %v871
      %v876 = vpack.c.bf16 %v874, %v873
      %v879 = vunpack.c.l.b16 %v875
      %v880 = vunpack.c.h.b16 %v875
      %v881 = vunpack.c.l.b16 %v876
      %v882 = vunpack.c.h.b16 %v876
      %v883 = vpack.c.b16 %v879, %v879
      %v884 = vpack.c.b16 %v880, %v880
      %v885 = vpack.c.b16 %v881, %v881
      %v886 = vpack.c.b16 %v882, %v882
      %891 = vst [vmem:[#allocation8] sm:$0xf] %v883
      %892 = vst [vmem:[#allocation8 + $0x4] sm:$0xf] %v884
      %893 = vst [vmem:[#allocation8 + $0x8] sm:$0xf] %v885
      %894 = vst [vmem:[#allocation8 + $0xc] sm:$0xf] %v886
      %v895 = vadd.f32 %v871, %v872
      %v896 = vadd.f32 %v895, %v873
      %v897 = vadd.f32 %v896, %v874
      %v898 = vrot.slane %v897, 4
      %v899 = vadd.f32 %v897, %v898
      %v900 = vrot.slane %v899, 2
      %v901 = vadd.f32 %v899, %v900
      %v902 = vrot.slane %v901, 1
      %v903 = vadd.f32 %v901, %v902
      %v904 = vmul.f32 %v871, %v871
      %v905 = vmul.f32 %v872, %v872
      %v906 = vmul.f32 %v873, %v873
      %v907 = vmul.f32 %v874, %v874
      %v908 = vadd.f32 %v904, %v905
      %v909 = vadd.f32 %v908, %v906
      %v910 = vadd.f32 %v909, %v907
      %v911 = vrot.slane %v910, 4
      %v912 = vadd.f32 %v910, %v911
      %v913 = vrot.slane %v912, 2
      %v914 = vadd.f32 %v912, %v913
      %v915 = vrot.slane %v914, 1
      %v916 = vadd.f32 %v914, %v915
      %v917 = vlaneseq
      %v918 = vshrl.u32 %v917, 7
      %vm919 = vcmp.eq.s32.totalorder %v918, 0
      %vm920 = vcmp.eq.s32.totalorder %v918, 1
      %v921 = vsel %vm920, %v916, 0.0
      %v922 = vsel %vm919, %v903, %v921
      %923 = vst [vmem:[#allocation9] sm:$0xff] %v922
    $region25: #{nlayer_discriminator_forward.13} parent=1 // pred_fallthru
      _
    // Predicated region
    $region26: #{nlayer_discriminator_forward.13} parent=1 // pred_check
      _
    $region27: #{nlayer_discriminator_forward.13} parent=1 // pred_check_branch
      %925 = sbr.rel (0) target = $region29
    $region28: #{nlayer_discriminator_forward.13} parent=1 // pred_region
      %s927 = ssub.s32 256, 256
      %928 = vsyncadd [#allocation5], %s927
      %s929 = sshll.u32 [#allocation8], 4
      %s930 = int_to_ptr.vmem [resolvable:$true] %s929
      %935 = dma.vmem_to_hbm [thread:$0]  %s930, 256, %s2, [#allocation5], 64, 64, 4
    $region29: #{nlayer_discriminator_forward.13} parent=1 // pred_fallthru
      _
    // Predicated region
    $region30: #{nlayer_discriminator_forward.13} parent=1 // pred_check
      _
    $region31: #{nlayer_discriminator_forward.13} parent=1 // pred_check_branch
      %937 = sbr.rel (0) target = $region33
    $region32: #{nlayer_discriminator_forward.13} parent=1 // pred_region
      %s939 = ssub.s32 128, 128
      %940 = vsyncadd [#allocation10], %s939
      %s942 = sshll.u32 [#allocation9], 4
      %s943 = int_to_ptr.vmem [resolvable:$true] %s942
      %945 = dma.vmem_to_hbm [thread:$0]  %s943, 128, %s3, [#allocation10]
    $region33: #{nlayer_discriminator_forward.13} parent=1 // pred_fallthru
      _
    // Predicated region
    $region34: #{nlayer_discriminator_forward.13} parent=1 // pred_check
      _
    $region35: #{nlayer_discriminator_forward.13} parent=1 // pred_check_branch
      %947 = sbr.rel (0) target = $region37
    $region36: #{nlayer_discriminator_forward.13} parent=1 // pred_region
      %948 = dma.done [#allocation5], 256
    $region37: #{nlayer_discriminator_forward.13} parent=1 // pred_fallthru
      _
    // Predicated region
    $region38: #{nlayer_discriminator_forward.13} parent=1 // pred_check
      _
    $region39: #{nlayer_discriminator_forward.13} parent=1 // pred_check_branch
      %950 = sbr.rel (0) target = $region41
    $region40: #{nlayer_discriminator_forward.13} parent=1 // pred_region
      %951 = dma.done [#allocation10], 128
    $region41: #{nlayer_discriminator_forward.13} parent=1 // pred_fallthru
      _
    %952 = vsyncpa [#allocation4], 1
    %953 = vsyncpa [#allocation7], 1
    %954 = vsyncpa [#allocation5], 1
    %955 = vsyncpa [#allocation10], 1

// kernel: nlayer_discriminator_forward.15
$region0: #{nlayer_discriminator_forward.15}
  #allocation0 [shape = 'u32[]', space=smem, size = 0x4, offset = 0x4, fixed_abs, tag = 'smem constant byte address 0x4 - core index']
  #allocation1 [shape = 'u32[144,128]{1,0:T(1,128)}', space=vmem, size = 0x12000, scoped, tag = 'internal scratch']
  #allocation2 [shape = 'f32[56,128]{1,0:T(8,128)}', space=vmem, size = 0x7000, scoped, tag = 'scratch operand']
  %s0 = inlined_call_operand.hbm [shape: bf16[56,2048], index: 0, kind: input, shape index: {}]
  %s1 = inlined_call_operand.hbm [shape: bf16[2048,128], index: 1, kind: input, shape index: {}]
  %s2 = inlined_call_operand.hbm [shape: f32[56,128], index: 2, kind: output, shape index: {}]
  %s3 = sld [smem:[#allocation0]]
  $region34: #{nlayer_discriminator_forward.15} parent=0
    _
  %s5 = ssub.s32 1, %s3
  %s6 = scalar_select 0, %s5, %s3
  $region1: #{nlayer_discriminator_forward.15} parent=0
    #allocation3 [shape = 'u8[229376]{0}', space=vmem, size = 0x38000, scoped, tag = 'input window, operand 0, single buffered']
    #allocation4 [shape = 's32[1]{0}', space=sflag, size = 0x4, scoped, tag = 'scoped memory for nlayer_discriminator_forward.15']
    #allocation5 [shape = 's32[1]{0}', space=sflag, size = 0x4, scoped, tag = 'scoped memory for nlayer_discriminator_forward.15']
    #allocation6 [shape = 'u8[524288]{0}', space=vmem, size = 0x80000, scoped, tag = 'input window, operand 1, single buffered']
    #allocation7 [shape = 's32[1]{0}', space=sflag, size = 0x4, scoped, tag = 'scoped memory for nlayer_discriminator_forward.15']
    #allocation8 [shape = 'u8[28672]{0}', space=vmem, size = 0x7000, scoped, tag = 'output window, operand 0, single buffered']
    %7 = vsyncpa [#allocation4], 0
    %8 = vsyncpa [#allocation7], 0
    %9 = vsyncpa [#allocation5], 0
    // Predicated region
    $region2: #{nlayer_discriminator_forward.15} parent=1 // pred_check
      _
    $region3: #{nlayer_discriminator_forward.15} parent=1 // pred_check_branch
      %11 = sbr.rel (0) target = $region5
    $region4: #{nlayer_discriminator_forward.15} parent=1 // pred_region
      %s13 = ssub.s32 7168, 7168
      %14 = vsyncadd [#allocation4], %s13
      %s15 = sshll.u32 [#allocation3], 4
      %s16 = int_to_ptr.vmem [resolvable:$true] %s15
      %21 = dma.hbm_to_vmem [thread:$0]  %s0, 7168, %s16, [#allocation4], 1024, 1024, 64
    $region5: #{nlayer_discriminator_forward.15} parent=1 // pred_fallthru
      _
    // Predicated region
    $region6: #{nlayer_discriminator_forward.15} parent=1 // pred_check
      _
    $region7: #{nlayer_discriminator_forward.15} parent=1 // pred_check_branch
      %23 = sbr.rel (0) target = $region9
    $region8: #{nlayer_discriminator_forward.15} parent=1 // pred_region
      %s25 = ssub.s32 16384, 16384
      %26 = vsyncadd [#allocation7], %s25
      %s27 = sshll.u32 [#allocation6], 4
      %s28 = int_to_ptr.vmem [resolvable:$true] %s27
      %33 = dma.hbm_to_vmem [thread:$0]  %s1, 16384, %s28, [#allocation7], 64, 64, 4
    $region9: #{nlayer_discriminator_forward.15} parent=1 // pred_fallthru
      _
    // Predicated region
    $region10: #{nlayer_discriminator_forward.15} parent=1 // pred_check
      _
    $region11: #{nlayer_discriminator_forward.15} parent=1 // pred_check_branch
      %35 = sbr.rel (0) target = $region13
    $region12: #{nlayer_discriminator_forward.15} parent=1 // pred_region
      %36 = dma.done [#allocation4], 7168
    $region13: #{nlayer_discriminator_forward.15} parent=1 // pred_fallthru
      _
    // Predicated region
    $region14: #{nlayer_discriminator_forward.15} parent=1 // pred_check
      _
    $region15: #{nlayer_discriminator_forward.15} parent=1 // pred_check_branch
      %38 = sbr.rel (0) target = $region17
    $region16: #{nlayer_discriminator_forward.15} parent=1 // pred_region
      %39 = dma.done [#allocation7], 16384
    $region17: #{nlayer_discriminator_forward.15} parent=1 // pred_fallthru
      _
    %p41 = scmp.eq.s32.totalorder 0, 0
    // Predicated region
    $region18: #{nlayer_discriminator_forward.15} parent=1 // pred_check
      %p42 = pneg %p41
    $region19: #{nlayer_discriminator_forward.15} parent=1 // pred_check_branch
      %44 = sbr.rel (%p42) target = $region21
    $region20: #{nlayer_discriminator_forward.15} parent=1 // pred_region
      %45 = vst [vmem:[#allocation2] sm:$0xff] 0.0
      %46 = vst [vmem:[#allocation2 + $0x8] sm:$0xff] 0.0
      %47 = vst [vmem:[#allocation2 + $0x10] sm:$0xff] 0.0
      %48 = vst [vmem:[#allocation2 + $0x18] sm:$0xff] 0.0
      %49 = vst [vmem:[#allocation2 + $0x20] sm:$0xff] 0.0
      %50 = vst [vmem:[#allocation2 + $0x28] sm:$0xff] 0.0
      %51 = vst [vmem:[#allocation2 + $0x30] sm:$0xff] 0.0
    $region21: #{nlayer_discriminator_forward.15} parent=1 // pred_fallthru
      _
    %v52 = vld [vmem:[#allocation2] sm:$0xff]
    %v53 = vld [vmem:[#allocation2 + $0x8] sm:$0xff]
    %v54 = vld [vmem:[#allocation2 + $0x10] sm:$0xff]
    %v55 = vld [vmem:[#allocation2 + $0x18] sm:$0xff]
    %v56 = vld [vmem:[#allocation2 + $0x20] sm:$0xff]
    %v57 = vld [vmem:[#allocation2 + $0x28] sm:$0xff]
    %v58 = vld [vmem:[#allocation2 + $0x30] sm:$0xff]
    %v59 = vld [vmem:[#allocation3] sm:$0xff]
    %v60 = vld [vmem:[#allocation3 + $0x8] sm:$0xff]
    %v61 = vld [vmem:[#allocation3 + $0x10] sm:$0xff]
    %v62 = vld [vmem:[#allocation3 + $0x18] sm:$0xff]
    %v63 = vld [vmem:[#allocation3 + $0x20] sm:$0xff]
    %v64 = vld [vmem:[#allocation3 + $0x28] sm:$0xff]
    %v65 = vld [vmem:[#allocation3 + $0x30] sm:$0xff]
    %v66 = vld [vmem:[#allocation3 + $0x38] sm:$0xff]
    %v67 = vld [vmem:[#allocation3 + $0x40] sm:$0xff]
    %v68 = vld [vmem:[#allocation3 + $0x48] sm:$0xff]
    %v69 = vld [vmem:[#allocation3 + $0x50] sm:$0xff]
    %v70 = vld [vmem:[#allocation3 + $0x58] sm:$0xff]
    %v71 = vld [vmem:[#allocation3 + $0x60] sm:$0xff]
    %v72 = vld [vmem:[#allocation3 + $0x68] sm:$0xff]
    %v73 = vld [vmem:[#allocation3 + $0x70] sm:$0xff]
    %v74 = vld [vmem:[#allocation3 + $0x78] sm:$0xff]
    %v75 = vld [vmem:[#allocation3 + $0x80] sm:$0xff]
    %v76 = vld [vmem:[#allocation3 + $0x88] sm:$0xff]
    %v77 = vld [vmem:[#allocation3 + $0x90] sm:$0xff]
    %v78 = vld [vmem:[#allocation3 + $0x98] sm:$0xff]
    %v79 = vld [vmem:[#allocation3 + $0xa0] sm:$0xff]
    %v80 = vld [vmem:[#allocation3 + $0xa8] sm:$0xff]
    %v81 = vld [vmem:[#allocation3 + $0xb0] sm:$0xff]
    %v82 = vld [vmem:[#allocation3 + $0xb8] sm:$0xff]
    %v83 = vld [vmem:[#allocation3 + $0xc0] sm:$0xff]
    %v84 = vld [vmem:[#allocation3 + $0xc8] sm:$0xff]
    %v85 = vld [vmem:[#allocation3 + $0xd0] sm:$0xff]
    %v86 = vld [vmem:[#allocation3 + $0xd8] sm:$0xff]
    %v87 = vld [vmem:[#allocation3 + $0xe0] sm:$0xff]
    %v88 = vld [vmem:[#allocation3 + $0xe8] sm:$0xff]
    %v89 = vld [vmem:[#allocation3 + $0xf0] sm:$0xff]
    %v90 = vld [vmem:[#allocation3 + $0xf8] sm:$0xff]
    %v91 = vld [vmem:[#allocation3 + $0x100] sm:$0xff]
    %v92 = vld [vmem:[#allocation3 + $0x108] sm:$0xff]
    %v93 = vld [vmem:[#allocation3 + $0x110] sm:$0xff]
    %v94 = vld [vmem:[#allocation3 + $0x118] sm:$0xff]
    %v95 = vld [vmem:[#allocation3 + $0x120] sm:$0xff]
    %v96 = vld [vmem:[#allocation3 + $0x128] sm:$0xff]
    %v97 = vld [vmem:[#allocation3 + $0x130] sm:$0xff]
    %v98 = vld [vmem:[#allocation3 + $0x138] sm:$0xff]
    %v99 = vld [vmem:[#allocation3 + $0x140] sm:$0xff]
    %v100 = vld [vmem:[#allocation3 + $0x148] sm:$0xff]
    %v101 = vld [vmem:[#allocation3 + $0x150] sm:$0xff]
    %v102 = vld [vmem:[#allocation3 + $0x158] sm:$0xff]
    %v103 = vld [vmem:[#allocation3 + $0x160] sm:$0xff]
    %v104 = vld [vmem:[#allocation3 + $0x168] sm:$0xff]
    %v105 = vld [vmem:[#allocation3 + $0x170] sm:$0xff]
    %v106 = vld [vmem:[#allocation3 + $0x178] sm:$0xff]
    %v107 = vld [vmem:[#allocation3 + $0x180] sm:$0xff]
    %v108 = vld [vmem:[#allocation3 + $0x188] sm:$0xff]
    %v109 = vld [vmem:[#allocation3 + $0x190] sm:$0xff]
    %v110 = vld [vmem:[#allocation3 + $0x198] sm:$0xff]
    %v111 = vld [vmem:[#allocation3 + $0x1a0] sm:$0xff]
    %v112 = vld [vmem:[#allocation3 + $0x1a8] sm:$0xff]
    %v113 = vld [vmem:[#allocation3 + $0x1b0] sm:$0xff]
    %v114 = vld [vmem:[#allocation3 + $0x1b8] sm:$0xff]
    %v115 = vld [vmem:[#allocation6] sm:$0xf]
    %v116 = vld [vmem:[#allocation6 + $0x4] sm:$0xf]
    %v117 = vld [vmem:[#allocation6 + $0x8] sm:$0xf]
    %v118 = vld [vmem:[#allocation6 + $0xc] sm:$0xf]
    %v119 = vld [vmem:[#allocation6 + $0x10] sm:$0xf]
    %v120 = vld [vmem:[#allocation6 + $0x14] sm:$0xf]
    %v121 = vld [vmem:[#allocation6 + $0x18] sm:$0xf]
    %v122 = vld [vmem:[#allocation6 + $0x1c] sm:$0xf]
    %v123 = vld [vmem:[#allocation6 + $0x20] sm:$0xf]
    %v124 = vld [vmem:[#allocation6 + $0x24] sm:$0xf]
    %v125 = vld [vmem:[#allocation6 + $0x28] sm:$0xf]
    %v126 = vld [vmem:[#allocation6 + $0x2c] sm:$0xf]
    %v127 = vld [vmem:[#allocation6 + $0x30] sm:$0xf]
    %v128 = vld [vmem:[#allocation6 + $0x34] sm:$0xf]
    %v129 = vld [vmem:[#allocation6 + $0x38] sm:$0xf]
    %v130 = vld [vmem:[#allocation6 + $0x3c] sm:$0xf]
    %v131 = vld [vmem:[#allocation6 + $0x40] sm:$0xf]
    %v132 = vld [vmem:[#allocation6 + $0x44] sm:$0xf]
    %v133 = vld [vmem:[#allocation6 + $0x48] sm:$0xf]
    %v134 = vld [vmem:[#allocation6 + $0x4c] sm:$0xf]
    %v135 = vld [vmem:[#allocation6 + $0x50] sm:$0xf]
    %v136 = vld [vmem:[#allocation6 + $0x54] sm:$0xf]
    %v137 = vld [vmem:[#allocation6 + $0x58] sm:$0xf]
    %v138 = vld [vmem:[#allocation6 + $0x5c] sm:$0xf]
    %v139 = vld [vmem:[#allocation6 + $0x60] sm:$0xf]
    %v140 = vld [vmem:[#allocation6 + $0x64] sm:$0xf]
    %v141 = vld [vmem:[#allocation6 + $0x68] sm:$0xf]
    %v142 = vld [vmem:[#allocation6 + $0x6c] sm:$0xf]
    %v143 = vld [vmem:[#allocation6 + $0x70] sm:$0xf]
    %v144 = vld [vmem:[#allocation6 + $0x74] sm:$0xf]
    %v145 = vld [vmem:[#allocation6 + $0x78] sm:$0xf]
    %v146 = vld [vmem:[#allocation6 + $0x7c] sm:$0xf]
    %v147 = vld [vmem:[#allocation6 + $0x80] sm:$0xf]
    %v148 = vld [vmem:[#allocation6 + $0x84] sm:$0xf]
    %v149 = vld [vmem:[#allocation6 + $0x88] sm:$0xf]
    %v150 = vld [vmem:[#allocation6 + $0x8c] sm:$0xf]
    %v151 = vld [vmem:[#allocation6 + $0x90] sm:$0xf]
    %v152 = vld [vmem:[#allocation6 + $0x94] sm:$0xf]
    %v153 = vld [vmem:[#allocation6 + $0x98] sm:$0xf]
    %v154 = vld [vmem:[#allocation6 + $0x9c] sm:$0xf]
    %v155 = vld [vmem:[#allocation6 + $0xa0] sm:$0xf]
    %v156 = vld [vmem:[#allocation6 + $0xa4] sm:$0xf]
    %v157 = vld [vmem:[#allocation6 + $0xa8] sm:$0xf]
    %v158 = vld [vmem:[#allocation6 + $0xac] sm:$0xf]
    %v159 = vld [vmem:[#allocation6 + $0xb0] sm:$0xf]
    %v160 = vld [vmem:[#allocation6 + $0xb4] sm:$0xf]
    %v161 = vld [vmem:[#allocation6 + $0xb8] sm:$0xf]
    %v162 = vld [vmem:[#allocation6 + $0xbc] sm:$0xf]
    %v163 = vld [vmem:[#allocation6 + $0xc0] sm:$0xf]
    %v164 = vld [vmem:[#allocation6 + $0xc4] sm:$0xf]
    %v165 = vld [vmem:[#allocation6 + $0xc8] sm:$0xf]
    %v166 = vld [vmem:[#allocation6 + $0xcc] sm:$0xf]
    %v167 = vld [vmem:[#allocation6 + $0xd0] sm:$0xf]
    %v168 = vld [vmem:[#allocation6 + $0xd4] sm:$0xf]
    %v169 = vld [vmem:[#allocation6 + $0xd8] sm:$0xf]
    %v170 = vld [vmem:[#allocation6 + $0xdc] sm:$0xf]
    %v171 = vld [vmem:[#allocation6 + $0xe0] sm:$0xf]
    %v172 = vld [vmem:[#allocation6 + $0xe4] sm:$0xf]
    %v173 = vld [vmem:[#allocation6 + $0xe8] sm:$0xf]
    %v174 = vld [vmem:[#allocation6 + $0xec] sm:$0xf]
    %v175 = vld [vmem:[#allocation6 + $0xf0] sm:$0xf]
    %v176 = vld [vmem:[#allocation6 + $0xf4] sm:$0xf]
    %v177 = vld [vmem:[#allocation6 + $0xf8] sm:$0xf]
    %v178 = vld [vmem:[#allocation6 + $0xfc] sm:$0xf]
    %v179 = vld [vmem:[#allocation6 + $0x100] sm:$0xf]
    %v180 = vld [vmem:[#allocation6 + $0x104] sm:$0xf]
    %v181 = vld [vmem:[#allocation6 + $0x108] sm:$0xf]
    %v182 = vld [vmem:[#allocation6 + $0x10c] sm:$0xf]
    %v183 = vld [vmem:[#allocation6 + $0x110] sm:$0xf]
    %v184 = vld [vmem:[#allocation6 + $0x114] sm:$0xf]
    %v185 = vld [vmem:[#allocation6 + $0x118] sm:$0xf]
    %v186 = vld [vmem:[#allocation6 + $0x11c] sm:$0xf]
    %v187 = vld [vmem:[#allocation6 + $0x120] sm:$0xf]
    %v188 = vld [vmem:[#allocation6 + $0x124] sm:$0xf]
    %v189 = vld [vmem:[#allocation6 + $0x128] sm:$0xf]
    %v190 = vld [vmem:[#allocation6 + $0x12c] sm:$0xf]
    %v191 = vld [vmem:[#allocation6 + $0x130] sm:$0xf]
    %v192 = vld [vmem:[#allocation6 + $0x134] sm:$0xf]
    %v193 = vld [vmem:[#allocation6 + $0x138] sm:$0xf]
    %v194 = vld [vmem:[#allocation6 + $0x13c] sm:$0xf]
    %v195 = vld [vmem:[#allocation6 + $0x140] sm:$0xf]
    %v196 = vld [vmem:[#allocation6 + $0x144] sm:$0xf]
    %v197 = vld [vmem:[#allocation6 + $0x148] sm:$0xf]
    %v198 = vld [vmem:[#allocation6 + $0x14c] sm:$0xf]
    %v199 = vld [vmem:[#allocation6 + $0x150] sm:$0xf]
    %v200 = vld [vmem:[#allocation6 + $0x154] sm:$0xf]
    %v201 = vld [vmem:[#allocation6 + $0x158] sm:$0xf]
    %v202 = vld [vmem:[#allocation6 + $0x15c] sm:$0xf]
    %v203 = vld [vmem:[#allocation6 + $0x160] sm:$0xf]
    %v204 = vld [vmem:[#allocation6 + $0x164] sm:$0xf]
    %v205 = vld [vmem:[#allocation6 + $0x168] sm:$0xf]
    %v206 = vld [vmem:[#allocation6 + $0x16c] sm:$0xf]
    %v207 = vld [vmem:[#allocation6 + $0x170] sm:$0xf]
    %v208 = vld [vmem:[#allocation6 + $0x174] sm:$0xf]
    %v209 = vld [vmem:[#allocation6 + $0x178] sm:$0xf]
    %v210 = vld [vmem:[#allocation6 + $0x17c] sm:$0xf]
    %v211 = vld [vmem:[#allocation6 + $0x180] sm:$0xf]
    %v212 = vld [vmem:[#allocation6 + $0x184] sm:$0xf]
    %v213 = vld [vmem:[#allocation6 + $0x188] sm:$0xf]
    %v214 = vld [vmem:[#allocation6 + $0x18c] sm:$0xf]
    %v215 = vld [vmem:[#allocation6 + $0x190] sm:$0xf]
    %v216 = vld [vmem:[#allocation6 + $0x194] sm:$0xf]
    %v217 = vld [vmem:[#allocation6 + $0x198] sm:$0xf]
    %v218 = vld [vmem:[#allocation6 + $0x19c] sm:$0xf]
    %v219 = vld [vmem:[#allocation6 + $0x1a0] sm:$0xf]
    %v220 = vld [vmem:[#allocation6 + $0x1a4] sm:$0xf]
    %v221 = vld [vmem:[#allocation6 + $0x1a8] sm:$0xf]
    %v222 = vld [vmem:[#allocation6 + $0x1ac] sm:$0xf]
    %v223 = vld [vmem:[#allocation6 + $0x1b0] sm:$0xf]
    %v224 = vld [vmem:[#allocation6 + $0x1b4] sm:$0xf]
    %v225 = vld [vmem:[#allocation6 + $0x1b8] sm:$0xf]
    %v226 = vld [vmem:[#allocation6 + $0x1bc] sm:$0xf]
    %v227 = vld [vmem:[#allocation6 + $0x1c0] sm:$0xf]
    %v228 = vld [vmem:[#allocation6 + $0x1c4] sm:$0xf]
    %v229 = vld [vmem:[#allocation6 + $0x1c8] sm:$0xf]
    %v230 = vld [vmem:[#allocation6 + $0x1cc] sm:$0xf]
    %v231 = vld [vmem:[#allocation6 + $0x1d0] sm:$0xf]
    %v232 = vld [vmem:[#allocation6 + $0x1d4] sm:$0xf]
    %v233 = vld [vmem:[#allocation6 + $0x1d8] sm:$0xf]
    %v234 = vld [vmem:[#allocation6 + $0x1dc] sm:$0xf]
    %v235 = vld [vmem:[#allocation6 + $0x1e0] sm:$0xf]
    %v236 = vld [vmem:[#allocation6 + $0x1e4] sm:$0xf]
    %v237 = vld [vmem:[#allocation6 + $0x1e8] sm:$0xf]
    %v238 = vld [vmem:[#allocation6 + $0x1ec] sm:$0xf]
    %v239 = vld [vmem:[#allocation6 + $0x1f0] sm:$0xf]
    %v240 = vld [vmem:[#allocation6 + $0x1f4] sm:$0xf]
    %v241 = vld [vmem:[#allocation6 + $0x1f8] sm:$0xf]
    %v242 = vld [vmem:[#allocation6 + $0x1fc] sm:$0xf]
    %v243 = vld [vmem:[#allocation6 + $0x200] sm:$0xf]
    %v244 = vld [vmem:[#allocation6 + $0x204] sm:$0xf]
    %v245 = vld [vmem:[#allocation6 + $0x208] sm:$0xf]
    %v246 = vld [vmem:[#allocation6 + $0x20c] sm:$0xf]
    %v247 = vld [vmem:[#allocation6 + $0x210] sm:$0xf]
    %v248 = vld [vmem:[#allocation6 + $0x214] sm:$0xf]
    %v249 = vld [vmem:[#allocation6 + $0x218] sm:$0xf]
    %v250 = vld [vmem:[#allocation6 + $0x21c] sm:$0xf]
    %v251 = vld [vmem:[#allocation6 + $0x220] sm:$0xf]
    %v252 = vld [vmem:[#allocation6 + $0x224] sm:$0xf]
    %v253 = vld [vmem:[#allocation6 + $0x228] sm:$0xf]
    %v254 = vld [vmem:[#allocation6 + $0x22c] sm:$0xf]
    %v255 = vld [vmem:[#allocation6 + $0x230] sm:$0xf]
    %v256 = vld [vmem:[#allocation6 + $0x234] sm:$0xf]
    %v257 = vld [vmem:[#allocation6 + $0x238] sm:$0xf]
    %v258 = vld [vmem:[#allocation6 + $0x23c] sm:$0xf]
    %v259 = vld [vmem:[#allocation6 + $0x240] sm:$0xf]
    %v260 = vld [vmem:[#allocation6 + $0x244] sm:$0xf]
    %v261 = vld [vmem:[#allocation6 + $0x248] sm:$0xf]
    %v262 = vld [vmem:[#allocation6 + $0x24c] sm:$0xf]
    %v263 = vld [vmem:[#allocation6 + $0x250] sm:$0xf]
    %v264 = vld [vmem:[#allocation6 + $0x254] sm:$0xf]
    %v265 = vld [vmem:[#allocation6 + $0x258] sm:$0xf]
    %v266 = vld [vmem:[#allocation6 + $0x25c] sm:$0xf]
    %v267 = vld [vmem:[#allocation6 + $0x260] sm:$0xf]
    %v268 = vld [vmem:[#allocation6 + $0x264] sm:$0xf]
    %v269 = vld [vmem:[#allocation6 + $0x268] sm:$0xf]
    %v270 = vld [vmem:[#allocation6 + $0x26c] sm:$0xf]
    %v271 = vld [vmem:[#allocation6 + $0x270] sm:$0xf]
    %v272 = vld [vmem:[#allocation6 + $0x274] sm:$0xf]
    %v273 = vld [vmem:[#allocation6 + $0x278] sm:$0xf]
    %v274 = vld [vmem:[#allocation6 + $0x27c] sm:$0xf]
    %v275 = vld [vmem:[#allocation6 + $0x280] sm:$0xf]
    %v276 = vld [vmem:[#allocation6 + $0x284] sm:$0xf]
    %v277 = vld [vmem:[#allocation6 + $0x288] sm:$0xf]
    %v278 = vld [vmem:[#allocation6 + $0x28c] sm:$0xf]
    %v279 = vld [vmem:[#allocation6 + $0x290] sm:$0xf]
    %v280 = vld [vmem:[#allocation6 + $0x294] sm:$0xf]
    %v281 = vld [vmem:[#allocation6 + $0x298] sm:$0xf]
    %v282 = vld [vmem:[#allocation6 + $0x29c] sm:$0xf]
    %v283 = vld [vmem:[#allocation6 + $0x2a0] sm:$0xf]
    %v284 = vld [vmem:[#allocation6 + $0x2a4] sm:$0xf]
    %v285 = vld [vmem:[#allocation6 + $0x2a8] sm:$0xf]
    %v286 = vld [vmem:[#allocation6 + $0x2ac] sm:$0xf]
    %v287 = vld [vmem:[#allocation6 + $0x2b0] sm:$0xf]
    %v288 = vld [vmem:[#allocation6 + $0x2b4] sm:$0xf]
    %v289 = vld [vmem:[#allocation6 + $0x2b8] sm:$0xf]
    %v290 = vld [vmem:[#allocation6 + $0x2bc] sm:$0xf]
    %v291 = vld [vmem:[#allocation6 + $0x2c0] sm:$0xf]
    %v292 = vld [vmem:[#allocation6 + $0x2c4] sm:$0xf]
    %v293 = vld [vmem:[#allocation6 + $0x2c8] sm:$0xf]
    %v294 = vld [vmem:[#allocation6 + $0x2cc] sm:$0xf]
    %v295 = vld [vmem:[#allocation6 + $0x2d0] sm:$0xf]
    %v296 = vld [vmem:[#allocation6 + $0x2d4] sm:$0xf]
    %v297 = vld [vmem:[#allocation6 + $0x2d8] sm:$0xf]
    %v298 = vld [vmem:[#allocation6 + $0x2dc] sm:$0xf]
    %v299 = vld [vmem:[#allocation6 + $0x2e0] sm:$0xf]
    %v300 = vld [vmem:[#allocation6 + $0x2e4] sm:$0xf]
    %v301 = vld [vmem:[#allocation6 + $0x2e8] sm:$0xf]
    %v302 = vld [vmem:[#allocation6 + $0x2ec] sm:$0xf]
    %v303 = vld [vmem:[#allocation6 + $0x2f0] sm:$0xf]
    %v304 = vld [vmem:[#allocation6 + $0x2f4] sm:$0xf]
    %v305 = vld [vmem:[#allocation6 + $0x2f8] sm:$0xf]
    %v306 = vld [vmem:[#allocation6 + $0x2fc] sm:$0xf]
    %v307 = vld [vmem:[#allocation6 + $0x300] sm:$0xf]
    %v308 = vld [vmem:[#allocation6 + $0x304] sm:$0xf]
    %v309 = vld [vmem:[#allocation6 + $0x308] sm:$0xf]
    %v310 = vld [vmem:[#allocation6 + $0x30c] sm:$0xf]
    %v311 = vld [vmem:[#allocation6 + $0x310] sm:$0xf]
    %v312 = vld [vmem:[#allocation6 + $0x314] sm:$0xf]
    %v313 = vld [vmem:[#allocation6 + $0x318] sm:$0xf]
    %v314 = vld [vmem:[#allocation6 + $0x31c] sm:$0xf]
    %v315 = vld [vmem:[#allocation6 + $0x320] sm:$0xf]
    %v316 = vld [vmem:[#allocation6 + $0x324] sm:$0xf]
    %v317 = vld [vmem:[#allocation6 + $0x328] sm:$0xf]
    %v318 = vld [vmem:[#allocation6 + $0x32c] sm:$0xf]
    %v319 = vld [vmem:[#allocation6 + $0x330] sm:$0xf]
    %v320 = vld [vmem:[#allocation6 + $0x334] sm:$0xf]
    %v321 = vld [vmem:[#allocation6 + $0x338] sm:$0xf]
    %v322 = vld [vmem:[#allocation6 + $0x33c] sm:$0xf]
    %v323 = vld [vmem:[#allocation6 + $0x340] sm:$0xf]
    %v324 = vld [vmem:[#allocation6 + $0x344] sm:$0xf]
    %v325 = vld [vmem:[#allocation6 + $0x348] sm:$0xf]
    %v326 = vld [vmem:[#allocation6 + $0x34c] sm:$0xf]
    %v327 = vld [vmem:[#allocation6 + $0x350] sm:$0xf]
    %v328 = vld [vmem:[#allocation6 + $0x354] sm:$0xf]
    %v329 = vld [vmem:[#allocation6 + $0x358] sm:$0xf]
    %v330 = vld [vmem:[#allocation6 + $0x35c] sm:$0xf]
    %v331 = vld [vmem:[#allocation6 + $0x360] sm:$0xf]
    %v332 = vld [vmem:[#allocation6 + $0x364] sm:$0xf]
    %v333 = vld [vmem:[#allocation6 + $0x368] sm:$0xf]
    %v334 = vld [vmem:[#allocation6 + $0x36c] sm:$0xf]
    %v335 = vld [vmem:[#allocation6 + $0x370] sm:$0xf]
    %v336 = vld [vmem:[#allocation6 + $0x374] sm:$0xf]
    %v337 = vld [vmem:[#allocation6 + $0x378] sm:$0xf]
    %v338 = vld [vmem:[#allocation6 + $0x37c] sm:$0xf]
    %v339 = vld [vmem:[#allocation6 + $0x380] sm:$0xf]
    %v340 = vld [vmem:[#allocation6 + $0x384] sm:$0xf]
    %v341 = vld [vmem:[#allocation6 + $0x388] sm:$0xf]
    %v342 = vld [vmem:[#allocation6 + $0x38c] sm:$0xf]
    %v343 = vld [vmem:[#allocation6 + $0x390] sm:$0xf]
    %v344 = vld [vmem:[#allocation6 + $0x394] sm:$0xf]
    %v345 = vld [vmem:[#allocation6 + $0x398] sm:$0xf]
    %v346 = vld [vmem:[#allocation6 + $0x39c] sm:$0xf]
    %v347 = vld [vmem:[#allocation6 + $0x3a0] sm:$0xf]
    %v348 = vld [vmem:[#allocation6 + $0x3a4] sm:$0xf]
    %v349 = vld [vmem:[#allocation6 + $0x3a8] sm:$0xf]
    %v350 = vld [vmem:[#allocation6 + $0x3ac] sm:$0xf]
    %v351 = vld [vmem:[#allocation6 + $0x3b0] sm:$0xf]
    %v352 = vld [vmem:[#allocation6 + $0x3b4] sm:$0xf]
    %v353 = vld [vmem:[#allocation6 + $0x3b8] sm:$0xf]
    %v354 = vld [vmem:[#allocation6 + $0x3bc] sm:$0xf]
    %v355 = vld [vmem:[#allocation6 + $0x3c0] sm:$0xf]
    %v356 = vld [vmem:[#allocation6 + $0x3c4] sm:$0xf]
    %v357 = vld [vmem:[#allocation6 + $0x3c8] sm:$0xf]
    %v358 = vld [vmem:[#allocation6 + $0x3cc] sm:$0xf]
    %v359 = vld [vmem:[#allocation6 + $0x3d0] sm:$0xf]
    %v360 = vld [vmem:[#allocation6 + $0x3d4] sm:$0xf]
    %v361 = vld [vmem:[#allocation6 + $0x3d8] sm:$0xf]
    %v362 = vld [vmem:[#allocation6 + $0x3dc] sm:$0xf]
    %v363 = vld [vmem:[#allocation6 + $0x3e0] sm:$0xf]
    %v364 = vld [vmem:[#allocation6 + $0x3e4] sm:$0xf]
    %v365 = vld [vmem:[#allocation6 + $0x3e8] sm:$0xf]
    %v366 = vld [vmem:[#allocation6 + $0x3ec] sm:$0xf]
    %v367 = vld [vmem:[#allocation6 + $0x3f0] sm:$0xf]
    %v368 = vld [vmem:[#allocation6 + $0x3f4] sm:$0xf]
    %v369 = vld [vmem:[#allocation6 + $0x3f8] sm:$0xf]
    %v370 = vld [vmem:[#allocation6 + $0x3fc] sm:$0xf]
    %v427 = vunpack.c.l.b16 %v59
    %v428 = vunpack.c.h.b16 %v59
    %v429 = vunpack.c.l.b16 %v60
    %v430 = vunpack.c.h.b16 %v60
    %v431 = vunpack.c.l.b16 %v61
    %v432 = vunpack.c.h.b16 %v61
    %v433 = vunpack.c.l.b16 %v62
    %v434 = vunpack.c.h.b16 %v62
    %v435 = vunpack.c.l.b16 %v63
    %v436 = vunpack.c.h.b16 %v63
    %v437 = vunpack.c.l.b16 %v64
    %v438 = vunpack.c.h.b16 %v64
    %v439 = vunpack.c.l.b16 %v65
    %v440 = vunpack.c.h.b16 %v65
    %v441 = vunpack.c.l.b16 %v66
    %v442 = vunpack.c.h.b16 %v66
    %v443 = vunpack.c.l.b16 %v67
    %v444 = vunpack.c.h.b16 %v67
    %v445 = vunpack.c.l.b16 %v68
    %v446 = vunpack.c.h.b16 %v68
    %v447 = vunpack.c.l.b16 %v69
    %v448 = vunpack.c.h.b16 %v69
    %v449 = vunpack.c.l.b16 %v70
    %v450 = vunpack.c.h.b16 %v70
    %v451 = vunpack.c.l.b16 %v71
    %v452 = vunpack.c.h.b16 %v71
    %v453 = vunpack.c.l.b16 %v72
    %v454 = vunpack.c.h.b16 %v72
    %v455 = vunpack.c.l.b16 %v73
    %v456 = vunpack.c.h.b16 %v73
    %v457 = vunpack.c.l.b16 %v74
    %v458 = vunpack.c.h.b16 %v74
    %v459 = vunpack.c.l.b16 %v75
    %v460 = vunpack.c.h.b16 %v75
    %v461 = vunpack.c.l.b16 %v76
    %v462 = vunpack.c.h.b16 %v76
    %v463 = vunpack.c.l.b16 %v77
    %v464 = vunpack.c.h.b16 %v77
    %v465 = vunpack.c.l.b16 %v78
    %v466 = vunpack.c.h.b16 %v78
    %v467 = vunpack.c.l.b16 %v79
    %v468 = vunpack.c.h.b16 %v79
    %v469 = vunpack.c.l.b16 %v80
    %v470 = vunpack.c.h.b16 %v80
    %v471 = vunpack.c.l.b16 %v81
    %v472 = vunpack.c.h.b16 %v81
    %v473 = vunpack.c.l.b16 %v82
    %v474 = vunpack.c.h.b16 %v82
    %v475 = vunpack.c.l.b16 %v83
    %v476 = vunpack.c.h.b16 %v83
    %v477 = vunpack.c.l.b16 %v84
    %v478 = vunpack.c.h.b16 %v84
    %v479 = vunpack.c.l.b16 %v85
    %v480 = vunpack.c.h.b16 %v85
    %v481 = vunpack.c.l.b16 %v86
    %v482 = vunpack.c.h.b16 %v86
    %v483 = vunpack.c.l.b16 %v87
    %v484 = vunpack.c.h.b16 %v87
    %v485 = vunpack.c.l.b16 %v88
    %v486 = vunpack.c.h.b16 %v88
    %v487 = vunpack.c.l.b16 %v89
    %v488 = vunpack.c.h.b16 %v89
    %v489 = vunpack.c.l.b16 %v90
    %v490 = vunpack.c.h.b16 %v90
    %v491 = vunpack.c.l.b16 %v91
    %v492 = vunpack.c.h.b16 %v91
    %v493 = vunpack.c.l.b16 %v92
    %v494 = vunpack.c.h.b16 %v92
    %v495 = vunpack.c.l.b16 %v93
    %v496 = vunpack.c.h.b16 %v93
    %v497 = vunpack.c.l.b16 %v94
    %v498 = vunpack.c.h.b16 %v94
    %v499 = vunpack.c.l.b16 %v95
    %v500 = vunpack.c.h.b16 %v95
    %v501 = vunpack.c.l.b16 %v96
    %v502 = vunpack.c.h.b16 %v96
    %v503 = vunpack.c.l.b16 %v97
    %v504 = vunpack.c.h.b16 %v97
    %v505 = vunpack.c.l.b16 %v98
    %v506 = vunpack.c.h.b16 %v98
    %v507 = vunpack.c.l.b16 %v99
    %v508 = vunpack.c.h.b16 %v99
    %v509 = vunpack.c.l.b16 %v100
    %v510 = vunpack.c.h.b16 %v100
    %v511 = vunpack.c.l.b16 %v101
    %v512 = vunpack.c.h.b16 %v101
    %v513 = vunpack.c.l.b16 %v102
    %v514 = vunpack.c.h.b16 %v102
    %v515 = vunpack.c.l.b16 %v103
    %v516 = vunpack.c.h.b16 %v103
    %v517 = vunpack.c.l.b16 %v104
    %v518 = vunpack.c.h.b16 %v104
    %v519 = vunpack.c.l.b16 %v105
    %v520 = vunpack.c.h.b16 %v105
    %v521 = vunpack.c.l.b16 %v106
    %v522 = vunpack.c.h.b16 %v106
    %v523 = vunpack.c.l.b16 %v107
    %v524 = vunpack.c.h.b16 %v107
    %v525 = vunpack.c.l.b16 %v108
    %v526 = vunpack.c.h.b16 %v108
    %v527 = vunpack.c.l.b16 %v109
    %v528 = vunpack.c.h.b16 %v109
    %v529 = vunpack.c.l.b16 %v110
    %v530 = vunpack.c.h.b16 %v110
    %v531 = vunpack.c.l.b16 %v111
    %v532 = vunpack.c.h.b16 %v111
    %v533 = vunpack.c.l.b16 %v112
    %v534 = vunpack.c.h.b16 %v112
    %v535 = vunpack.c.l.b16 %v113
    %v536 = vunpack.c.h.b16 %v113
    %v537 = vunpack.c.l.b16 %v114
    %v538 = vunpack.c.h.b16 %v114
    %v539 = vpack.c.b16 %v443, %v427
    %v540 = vpack.c.b16 %v444, %v428
    %v541 = vpack.c.b16 %v445, %v429
    %v542 = vpack.c.b16 %v446, %v430
    %v543 = vpack.c.b16 %v447, %v431
    %v544 = vpack.c.b16 %v448, %v432
    %v545 = vpack.c.b16 %v449, %v433
    %v546 = vpack.c.b16 %v450, %v434
    %v547 = vpack.c.b16 %v451, %v435
    %v548 = vpack.c.b16 %v452, %v436
    %v549 = vpack.c.b16 %v453, %v437
    %v550 = vpack.c.b16 %v454, %v438
    %v551 = vpack.c.b16 %v455, %v439
    %v552 = vpack.c.b16 %v456, %v440
    %v553 = vpack.c.b16 %v457, %v441
    %v554 = vpack.c.b16 %v458, %v442
    %v555 = vpack.c.b16 %v475, %v459
    %v556 = vpack.c.b16 %v476, %v460
    %v557 = vpack.c.b16 %v477, %v461
    %v558 = vpack.c.b16 %v478, %v462
    %v559 = vpack.c.b16 %v479, %v463
    %v560 = vpack.c.b16 %v480, %v464
    %v561 = vpack.c.b16 %v481, %v465
    %v562 = vpack.c.b16 %v482, %v466
    %v563 = vpack.c.b16 %v483, %v467
    %v564 = vpack.c.b16 %v484, %v468
    %v565 = vpack.c.b16 %v485, %v469
    %v566 = vpack.c.b16 %v486, %v470
    %v567 = vpack.c.b16 %v487, %v471
    %v568 = vpack.c.b16 %v488, %v472
    %v569 = vpack.c.b16 %v489, %v473
    %v570 = vpack.c.b16 %v490, %v474
    %v571 = vpack.c.b16 %v507, %v491
    %v572 = vpack.c.b16 %v508, %v492
    %v573 = vpack.c.b16 %v509, %v493
    %v574 = vpack.c.b16 %v510, %v494
    %v575 = vpack.c.b16 %v511, %v495
    %v576 = vpack.c.b16 %v512, %v496
    %v577 = vpack.c.b16 %v513, %v497
    %v578 = vpack.c.b16 %v514, %v498
    %v579 = vpack.c.b16 %v515, %v499
    %v580 = vpack.c.b16 %v516, %v500
    %v581 = vpack.c.b16 %v517, %v501
    %v582 = vpack.c.b16 %v518, %v502
    %v583 = vpack.c.b16 %v519, %v503
    %v584 = vpack.c.b16 %v520, %v504
    %v585 = vpack.c.b16 %v521, %v505
    %v586 = vpack.c.b16 %v522, %v506
    %v587 = vpack.c.b16 %v523, %v523
    %v588 = vpack.c.b16 %v524, %v524
    %v589 = vpack.c.b16 %v525, %v525
    %v590 = vpack.c.b16 %v526, %v526
    %v591 = vpack.c.b16 %v527, %v527
    %v592 = vpack.c.b16 %v528, %v528
    %v593 = vpack.c.b16 %v529, %v529
    %v594 = vpack.c.b16 %v530, %v530
    %v595 = vpack.c.b16 %v531, %v531
    %v596 = vpack.c.b16 %v532, %v532
    %v597 = vpack.c.b16 %v533, %v533
    %v598 = vpack.c.b16 %v534, %v534
    %v599 = vpack.c.b16 %v535, %v535
    %v600 = vpack.c.b16 %v536, %v536
    %v601 = vpack.c.b16 %v537, %v537
    %v602 = vpack.c.b16 %v538, %v538
    %v923 = vunpack.c.l.b16 %v115
    %v924 = vunpack.c.l.b16 %v116
    %v925 = vunpack.c.l.b16 %v117
    %v926 = vunpack.c.l.b16 %v118
    %v927 = vunpack.c.l.b16 %v119
    %v928 = vunpack.c.l.b16 %v120
    %v929 = vunpack.c.l.b16 %v121
    %v930 = vunpack.c.l.b16 %v122
    %v931 = vunpack.c.l.b16 %v123
    %v932 = vunpack.c.l.b16 %v124
    %v933 = vunpack.c.l.b16 %v125
    %v934 = vunpack.c.l.b16 %v126
    %v935 = vunpack.c.l.b16 %v127
    %v936 = vunpack.c.l.b16 %v128
    %v937 = vunpack.c.l.b16 %v129
    %v938 = vunpack.c.l.b16 %v130
    %v939 = vunpack.c.l.b16 %v131
    %v940 = vunpack.c.l.b16 %v132
    %v941 = vunpack.c.l.b16 %v133
    %v942 = vunpack.c.l.b16 %v134
    %v943 = vunpack.c.l.b16 %v135
    %v944 = vunpack.c.l.b16 %v136
    %v945 = vunpack.c.l.b16 %v137
    %v946 = vunpack.c.l.b16 %v138
    %v947 = vunpack.c.l.b16 %v139
    %v948 = vunpack.c.l.b16 %v140
    %v949 = vunpack.c.l.b16 %v141
    %v950 = vunpack.c.l.b16 %v142
    %v951 = vunpack.c.l.b16 %v143
    %v952 = vunpack.c.l.b16 %v144
    %v953 = vunpack.c.l.b16 %v145
    %v954 = vunpack.c.l.b16 %v146
    %v955 = vunpack.c.l.b16 %v147
    %v956 = vunpack.c.l.b16 %v148
    %v957 = vunpack.c.l.b16 %v149
    %v958 = vunpack.c.l.b16 %v150
    %v959 = vunpack.c.l.b16 %v151
    %v960 = vunpack.c.l.b16 %v152
    %v961 = vunpack.c.l.b16 %v153
    %v962 = vunpack.c.l.b16 %v154
    %v963 = vunpack.c.l.b16 %v155
    %v964 = vunpack.c.l.b16 %v156
    %v965 = vunpack.c.l.b16 %v157
    %v966 = vunpack.c.l.b16 %v158
    %v967 = vunpack.c.l.b16 %v159
    %v968 = vunpack.c.l.b16 %v160
    %v969 = vunpack.c.l.b16 %v161
    %v970 = vunpack.c.l.b16 %v162
    %v971 = vunpack.c.l.b16 %v163
    %v972 = vunpack.c.l.b16 %v164
    %v973 = vunpack.c.l.b16 %v165
    %v974 = vunpack.c.l.b16 %v166
    %v975 = vunpack.c.l.b16 %v167
    %v976 = vunpack.c.l.b16 %v168
    %v977 = vunpack.c.l.b16 %v169
    %v978 = vunpack.c.l.b16 %v170
    %v979 = vunpack.c.l.b16 %v171
    %v980 = vunpack.c.l.b16 %v172
    %v981 = vunpack.c.l.b16 %v173
    %v982 = vunpack.c.l.b16 %v174
    %v983 = vunpack.c.l.b16 %v175
    %v984 = vunpack.c.l.b16 %v176
    %v985 = vunpack.c.l.b16 %v177
    %v986 = vunpack.c.l.b16 %v178
    %v987 = vunpack.c.l.b16 %v179
    %v988 = vunpack.c.l.b16 %v180
    %v989 = vunpack.c.l.b16 %v181
    %v990 = vunpack.c.l.b16 %v182
    %v991 = vunpack.c.l.b16 %v183
    %v992 = vunpack.c.l.b16 %v184
    %v993 = vunpack.c.l.b16 %v185
    %v994 = vunpack.c.l.b16 %v186
    %v995 = vunpack.c.l.b16 %v187
    %v996 = vunpack.c.l.b16 %v188
    %v997 = vunpack.c.l.b16 %v189
    %v998 = vunpack.c.l.b16 %v190
    %v999 = vunpack.c.l.b16 %v191
    %v1000 = vunpack.c.l.b16 %v192
    %v1001 = vunpack.c.l.b16 %v193
    %v1002 = vunpack.c.l.b16 %v194
    %v1003 = vunpack.c.l.b16 %v195
    %v1004 = vunpack.c.l.b16 %v196
    %v1005 = vunpack.c.l.b16 %v197
    %v1006 = vunpack.c.l.b16 %v198
    %v1007 = vunpack.c.l.b16 %v199
    %v1008 = vunpack.c.l.b16 %v200
    %v1009 = vunpack.c.l.b16 %v201
    %v1010 = vunpack.c.l.b16 %v202
    %v1011 = vunpack.c.l.b16 %v203
    %v1012 = vunpack.c.l.b16 %v204
    %v1013 = vunpack.c.l.b16 %v205
    %v1014 = vunpack.c.l.b16 %v206
    %v1015 = vunpack.c.l.b16 %v207
    %v1016 = vunpack.c.l.b16 %v208
    %v1017 = vunpack.c.l.b16 %v209
    %v1018 = vunpack.c.l.b16 %v210
    %v1019 = vunpack.c.l.b16 %v211
    %v1020 = vunpack.c.l.b16 %v212
    %v1021 = vunpack.c.l.b16 %v213
    %v1022 = vunpack.c.l.b16 %v214
    %v1023 = vunpack.c.l.b16 %v215
    %v1024 = vunpack.c.l.b16 %v216
    %v1025 = vunpack.c.l.b16 %v217
    %v1026 = vunpack.c.l.b16 %v218
    %v1027 = vunpack.c.l.b16 %v219
    %v1028 = vunpack.c.l.b16 %v220
    %v1029 = vunpack.c.l.b16 %v221
    %v1030 = vunpack.c.l.b16 %v222
    %v1031 = vunpack.c.l.b16 %v223
    %v1032 = vunpack.c.l.b16 %v224
    %v1033 = vunpack.c.l.b16 %v225
    %v1034 = vunpack.c.l.b16 %v226
    %v1035 = vunpack.c.l.b16 %v227
    %v1036 = vunpack.c.l.b16 %v228
    %v1037 = vunpack.c.l.b16 %v229
    %v1038 = vunpack.c.l.b16 %v230
    %v1039 = vunpack.c.l.b16 %v231
    %v1040 = vunpack.c.l.b16 %v232
    %v1041 = vunpack.c.l.b16 %v233
    %v1042 = vunpack.c.l.b16 %v234
    %v1043 = vunpack.c.l.b16 %v235
    %v1044 = vunpack.c.l.b16 %v236
    %v1045 = vunpack.c.l.b16 %v237
    %v1046 = vunpack.c.l.b16 %v238
    %v1047 = vunpack.c.l.b16 %v239
    %v1048 = vunpack.c.l.b16 %v240
    %v1049 = vunpack.c.l.b16 %v241
    %v1050 = vunpack.c.l.b16 %v242
    %v1051 = vunpack.c.l.b16 %v243
    %v1052 = vunpack.c.l.b16 %v244
    %v1053 = vunpack.c.l.b16 %v245
    %v1054 = vunpack.c.l.b16 %v246
    %v1055 = vunpack.c.l.b16 %v247
    %v1056 = vunpack.c.l.b16 %v248
    %v1057 = vunpack.c.l.b16 %v249
    %v1058 = vunpack.c.l.b16 %v250
    %v1059 = vunpack.c.l.b16 %v251
    %v1060 = vunpack.c.l.b16 %v252
    %v1061 = vunpack.c.l.b16 %v253
    %v1062 = vunpack.c.l.b16 %v254
    %v1063 = vunpack.c.l.b16 %v255
    %v1064 = vunpack.c.l.b16 %v256
    %v1065 = vunpack.c.l.b16 %v257
    %v1066 = vunpack.c.l.b16 %v258
    %v1067 = vunpack.c.l.b16 %v259
    %v1068 = vunpack.c.l.b16 %v260
    %v1069 = vunpack.c.l.b16 %v261
    %v1070 = vunpack.c.l.b16 %v262
    %v1071 = vunpack.c.l.b16 %v263
    %v1072 = vunpack.c.l.b16 %v264
    %v1073 = vunpack.c.l.b16 %v265
    %v1074 = vunpack.c.l.b16 %v266
    %v1075 = vunpack.c.l.b16 %v267
    %v1076 = vunpack.c.l.b16 %v268
    %v1077 = vunpack.c.l.b16 %v269
    %v1078 = vunpack.c.l.b16 %v270
    %v1079 = vunpack.c.l.b16 %v271
    %v1080 = vunpack.c.l.b16 %v272
    %v1081 = vunpack.c.l.b16 %v273
    %v1082 = vunpack.c.l.b16 %v274
    %v1083 = vunpack.c.l.b16 %v275
    %v1084 = vunpack.c.l.b16 %v276
    %v1085 = vunpack.c.l.b16 %v277
    %v1086 = vunpack.c.l.b16 %v278
    %v1087 = vunpack.c.l.b16 %v279
    %v1088 = vunpack.c.l.b16 %v280
    %v1089 = vunpack.c.l.b16 %v281
    %v1090 = vunpack.c.l.b16 %v282
    %v1091 = vunpack.c.l.b16 %v283
    %v1092 = vunpack.c.l.b16 %v284
    %v1093 = vunpack.c.l.b16 %v285
    %v1094 = vunpack.c.l.b16 %v286
    %v1095 = vunpack.c.l.b16 %v287
    %v1096 = vunpack.c.l.b16 %v288
    %v1097 = vunpack.c.l.b16 %v289
    %v1098 = vunpack.c.l.b16 %v290
    %v1099 = vunpack.c.l.b16 %v291
    %v1100 = vunpack.c.l.b16 %v292
    %v1101 = vunpack.c.l.b16 %v293
    %v1102 = vunpack.c.l.b16 %v294
    %v1103 = vunpack.c.l.b16 %v295
    %v1104 = vunpack.c.l.b16 %v296
    %v1105 = vunpack.c.l.b16 %v297
    %v1106 = vunpack.c.l.b16 %v298
    %v1107 = vunpack.c.l.b16 %v299
    %v1108 = vunpack.c.l.b16 %v300
    %v1109 = vunpack.c.l.b16 %v301
    %v1110 = vunpack.c.l.b16 %v302
    %v1111 = vunpack.c.l.b16 %v303
    %v1112 = vunpack.c.l.b16 %v304
    %v1113 = vunpack.c.l.b16 %v305
    %v1114 = vunpack.c.l.b16 %v306
    %v1115 = vunpack.c.l.b16 %v307
    %v1116 = vunpack.c.l.b16 %v308
    %v1117 = vunpack.c.l.b16 %v309
    %v1118 = vunpack.c.l.b16 %v310
    %v1119 = vunpack.c.l.b16 %v311
    %v1120 = vunpack.c.l.b16 %v312
    %v1121 = vunpack.c.l.b16 %v313
    %v1122 = vunpack.c.l.b16 %v314
    %v1123 = vunpack.c.l.b16 %v315
    %v1124 = vunpack.c.l.b16 %v316
    %v1125 = vunpack.c.l.b16 %v317
    %v1126 = vunpack.c.l.b16 %v318
    %v1127 = vunpack.c.l.b16 %v319
    %v1128 = vunpack.c.l.b16 %v320
    %v1129 = vunpack.c.l.b16 %v321
    %v1130 = vunpack.c.l.b16 %v322
    %v1131 = vunpack.c.l.b16 %v323
    %v1132 = vunpack.c.l.b16 %v324
    %v1133 = vunpack.c.l.b16 %v325
    %v1134 = vunpack.c.l.b16 %v326
    %v1135 = vunpack.c.l.b16 %v327
    %v1136 = vunpack.c.l.b16 %v328
    %v1137 = vunpack.c.l.b16 %v329
    %v1138 = vunpack.c.l.b16 %v330
    %v1139 = vunpack.c.l.b16 %v331
    %v1140 = vunpack.c.l.b16 %v332
    %v1141 = vunpack.c.l.b16 %v333
    %v1142 = vunpack.c.l.b16 %v334
    %v1143 = vunpack.c.l.b16 %v335
    %v1144 = vunpack.c.l.b16 %v336
    %v1145 = vunpack.c.l.b16 %v337
    %v1146 = vunpack.c.l.b16 %v338
    %v1147 = vunpack.c.l.b16 %v339
    %v1148 = vunpack.c.l.b16 %v340
    %v1149 = vunpack.c.l.b16 %v341
    %v1150 = vunpack.c.l.b16 %v342
    %v1151 = vunpack.c.l.b16 %v343
    %v1152 = vunpack.c.l.b16 %v344
    %v1153 = vunpack.c.l.b16 %v345
    %v1154 = vunpack.c.l.b16 %v346
    %v1155 = vunpack.c.l.b16 %v347
    %v1156 = vunpack.c.l.b16 %v348
    %v1157 = vunpack.c.l.b16 %v349
    %v1158 = vunpack.c.l.b16 %v350
    %v1159 = vunpack.c.l.b16 %v351
    %v1160 = vunpack.c.l.b16 %v352
    %v1161 = vunpack.c.l.b16 %v353
    %v1162 = vunpack.c.l.b16 %v354
    %v1163 = vunpack.c.l.b16 %v355
    %v1164 = vunpack.c.l.b16 %v356
    %v1165 = vunpack.c.l.b16 %v357
    %v1166 = vunpack.c.l.b16 %v358
    %v1167 = vunpack.c.l.b16 %v359
    %v1168 = vunpack.c.l.b16 %v360
    %v1169 = vunpack.c.l.b16 %v361
    %v1170 = vunpack.c.l.b16 %v362
    %v1171 = vunpack.c.l.b16 %v363
    %v1172 = vunpack.c.l.b16 %v364
    %v1173 = vunpack.c.l.b16 %v365
    %v1174 = vunpack.c.l.b16 %v366
    %v1175 = vunpack.c.l.b16 %v367
    %v1176 = vunpack.c.l.b16 %v368
    %v1177 = vunpack.c.l.b16 %v369
    %v1178 = vunpack.c.l.b16 %v370
    %v1179 = vpack.c.b16 %v924, %v923
    %v1180 = vpack.c.b16 %v926, %v925
    %v1181 = vpack.c.b16 %v928, %v927
    %v1182 = vpack.c.b16 %v930, %v929
    %v1183 = vpack.c.b16 %v932, %v931
    %v1184 = vpack.c.b16 %v934, %v933
    %v1185 = vpack.c.b16 %v936, %v935
    %v1186 = vpack.c.b16 %v938, %v937
    %v1187 = vpack.c.b16 %v940, %v939
    %v1188 = vpack.c.b16 %v942, %v941
    %v1189 = vpack.c.b16 %v944, %v943
    %v1190 = vpack.c.b16 %v946, %v945
    %v1191 = vpack.c.b16 %v948, %v947
    %v1192 = vpack.c.b16 %v950, %v949
    %v1193 = vpack.c.b16 %v952, %v951
    %v1194 = vpack.c.b16 %v954, %v953
    %v1195 = vpack.c.b16 %v956, %v955
    %v1196 = vpack.c.b16 %v958, %v957
    %v1197 = vpack.c.b16 %v960, %v959
    %v1198 = vpack.c.b16 %v962, %v961
    %v1199 = vpack.c.b16 %v964, %v963
    %v1200 = vpack.c.b16 %v966, %v965
    %v1201 = vpack.c.b16 %v968, %v967
    %v1202 = vpack.c.b16 %v970, %v969
    %v1203 = vpack.c.b16 %v972, %v971
    %v1204 = vpack.c.b16 %v974, %v973
    %v1205 = vpack.c.b16 %v976, %v975
    %v1206 = vpack.c.b16 %v978, %v977
    %v1207 = vpack.c.b16 %v980, %v979
    %v1208 = vpack.c.b16 %v982, %v981
    %v1209 = vpack.c.b16 %v984, %v983
    %v1210 = vpack.c.b16 %v986, %v985
    %v1211 = vpack.c.b16 %v988, %v987
    %v1212 = vpack.c.b16 %v990, %v989
    %v1213 = vpack.c.b16 %v992, %v991
    %v1214 = vpack.c.b16 %v994, %v993
    %v1215 = vpack.c.b16 %v996, %v995
    %v1216 = vpack.c.b16 %v998, %v997
    %v1217 = vpack.c.b16 %v1000, %v999
    %v1218 = vpack.c.b16 %v1002, %v1001
    %v1219 = vpack.c.b16 %v1004, %v1003
    %v1220 = vpack.c.b16 %v1006, %v1005
    %v1221 = vpack.c.b16 %v1008, %v1007
    %v1222 = vpack.c.b16 %v1010, %v1009
    %v1223 = vpack.c.b16 %v1012, %v1011
    %v1224 = vpack.c.b16 %v1014, %v1013
    %v1225 = vpack.c.b16 %v1016, %v1015
    %v1226 = vpack.c.b16 %v1018, %v1017
    %v1227 = vpack.c.b16 %v1020, %v1019
    %v1228 = vpack.c.b16 %v1022, %v1021
    %v1229 = vpack.c.b16 %v1024, %v1023
    %v1230 = vpack.c.b16 %v1026, %v1025
    %v1231 = vpack.c.b16 %v1028, %v1027
    %v1232 = vpack.c.b16 %v1030, %v1029
    %v1233 = vpack.c.b16 %v1032, %v1031
    %v1234 = vpack.c.b16 %v1034, %v1033
    %v1235 = vpack.c.b16 %v1036, %v1035
    %v1236 = vpack.c.b16 %v1038, %v1037
    %v1237 = vpack.c.b16 %v1040, %v1039
    %v1238 = vpack.c.b16 %v1042, %v1041
    %v1239 = vpack.c.b16 %v1044, %v1043
    %v1240 = vpack.c.b16 %v1046, %v1045
    %v1241 = vpack.c.b16 %v1048, %v1047
    %v1242 = vpack.c.b16 %v1050, %v1049
    %v1243 = vpack.c.b16 %v1052, %v1051
    %v1244 = vpack.c.b16 %v1054, %v1053
    %v1245 = vpack.c.b16 %v1056, %v1055
    %v1246 = vpack.c.b16 %v1058, %v1057
    %v1247 = vpack.c.b16 %v1060, %v1059
    %v1248 = vpack.c.b16 %v1062, %v1061
    %v1249 = vpack.c.b16 %v1064, %v1063
    %v1250 = vpack.c.b16 %v1066, %v1065
    %v1251 = vpack.c.b16 %v1068, %v1067
    %v1252 = vpack.c.b16 %v1070, %v1069
    %v1253 = vpack.c.b16 %v1072, %v1071
    %v1254 = vpack.c.b16 %v1074, %v1073
    %v1255 = vpack.c.b16 %v1076, %v1075
    %v1256 = vpack.c.b16 %v1078, %v1077
    %v1257 = vpack.c.b16 %v1080, %v1079
    %v1258 = vpack.c.b16 %v1082, %v1081
    %v1259 = vpack.c.b16 %v1084, %v1083
    %v1260 = vpack.c.b16 %v1086, %v1085
    %v1261 = vpack.c.b16 %v1088, %v1087
    %v1262 = vpack.c.b16 %v1090, %v1089
    %v1263 = vpack.c.b16 %v1092, %v1091
    %v1264 = vpack.c.b16 %v1094, %v1093
    %v1265 = vpack.c.b16 %v1096, %v1095
    %v1266 = vpack.c.b16 %v1098, %v1097
    %v1267 = vpack.c.b16 %v1100, %v1099
    %v1268 = vpack.c.b16 %v1102, %v1101
    %v1269 = vpack.c.b16 %v1104, %v1103
    %v1270 = vpack.c.b16 %v1106, %v1105
    %v1271 = vpack.c.b16 %v1108, %v1107
    %v1272 = vpack.c.b16 %v1110, %v1109
    %v1273 = vpack.c.b16 %v1112, %v1111
    %v1274 = vpack.c.b16 %v1114, %v1113
    %v1275 = vpack.c.b16 %v1116, %v1115
    %v1276 = vpack.c.b16 %v1118, %v1117
    %v1277 = vpack.c.b16 %v1120, %v1119
    %v1278 = vpack.c.b16 %v1122, %v1121
    %v1279 = vpack.c.b16 %v1124, %v1123
    %v1280 = vpack.c.b16 %v1126, %v1125
    %v1281 = vpack.c.b16 %v1128, %v1127
    %v1282 = vpack.c.b16 %v1130, %v1129
    %v1283 = vpack.c.b16 %v1132, %v1131
    %v1284 = vpack.c.b16 %v1134, %v1133
    %v1285 = vpack.c.b16 %v1136, %v1135
    %v1286 = vpack.c.b16 %v1138, %v1137
    %v1287 = vpack.c.b16 %v1140, %v1139
    %v1288 = vpack.c.b16 %v1142, %v1141
    %v1289 = vpack.c.b16 %v1144, %v1143
    %v1290 = vpack.c.b16 %v1146, %v1145
    %v1291 = vpack.c.b16 %v1148, %v1147
    %v1292 = vpack.c.b16 %v1150, %v1149
    %v1293 = vpack.c.b16 %v1152, %v1151
    %v1294 = vpack.c.b16 %v1154, %v1153
    %v1295 = vpack.c.b16 %v1156, %v1155
    %v1296 = vpack.c.b16 %v1158, %v1157
    %v1297 = vpack.c.b16 %v1160, %v1159
    %v1298 = vpack.c.b16 %v1162, %v1161
    %v1299 = vpack.c.b16 %v1164, %v1163
    %v1300 = vpack.c.b16 %v1166, %v1165
    %v1301 = vpack.c.b16 %v1168, %v1167
    %v1302 = vpack.c.b16 %v1170, %v1169
    %v1303 = vpack.c.b16 %v1172, %v1171
    %v1304 = vpack.c.b16 %v1174, %v1173
    %v1305 = vpack.c.b16 %v1176, %v1175
    %v1306 = vpack.c.b16 %v1178, %v1177
    %1435 = vmatprep.subr.bf16.mxu0 0
    %1436 = vmatpush1.bf16.msra.mxu0 %v1179
    %1437 = vmatprep.subr.bf16.mxu0 0
    %1438 = vmatpush1.bf16.msra.mxu0 %v1180
    %1439 = vmatprep.subr.bf16.mxu0 0
    %1440 = vmatpush1.bf16.msra.mxu0 %v1181
    %1441 = vmatprep.subr.bf16.mxu0 0
    %1442 = vmatpush1.bf16.msra.mxu0 %v1182
    %1443 = vmatprep.subr.bf16.mxu0 0
    %1444 = vmatpush1.bf16.msra.mxu0 %v1183
    %1445 = vmatprep.subr.bf16.mxu0 0
    %1446 = vmatpush1.bf16.msra.mxu0 %v1184
    %1447 = vmatprep.subr.bf16.mxu0 0
    %1448 = vmatpush1.bf16.msra.mxu0 %v1185
    %1449 = vmatprep.subr.bf16.mxu0 0
    %1450 = vmatpush1.bf16.msra.mxu0 %v1186
    %1451 = vmatprep.subr.bf16.mxu0 0
    %1452 = vmatpush1.bf16.msra.mxu0 %v1187
    %1453 = vmatprep.subr.bf16.mxu0 0
    %1454 = vmatpush1.bf16.msra.mxu0 %v1188
    %1455 = vmatprep.subr.bf16.mxu0 0
    %1456 = vmatpush1.bf16.msra.mxu0 %v1189
    %1457 = vmatprep.subr.bf16.mxu0 0
    %1458 = vmatpush1.bf16.msra.mxu0 %v1190
    %1459 = vmatprep.subr.bf16.mxu0 0
    %1460 = vmatpush1.bf16.msra.mxu0 %v1191
    %1461 = vmatprep.subr.bf16.mxu0 0
    %1462 = vmatpush1.bf16.msra.mxu0 %v1192
    %1463 = vmatprep.subr.bf16.mxu0 0
    %1464 = vmatpush1.bf16.msra.mxu0 %v1193
    %1465 = vmatprep.subr.bf16.mxu0 0
    %1466 = vmatpush1.bf16.msra.mxu0 %v1194
    %1467 = vmatprep.mubr.bf16.mxu0 %v540
    %1468 = vmatmul.mubr.bf16.gmra.mrb[0].mxu0 %v539
    %v1469 = vpop.f32.mrb[0].mxu0
    %v1470 = vadd.f32 0.0, %v1469
    %v1471 = vpop.f32.mrb[0].mxu0
    %v1472 = vpop.f32.mrb[0].mxu0
    %v1473 = vadd.f32 0.0, %v1472
    %v1474 = vpop.f32.mrb[0].mxu0
    %1475 = vmatprep.mubr.bf16.mxu0 %v556
    %1476 = vmatmul.mubr.bf16.gmra.mrb[0].mxu0 %v555
    %v1477 = vpop.f32.mrb[0].mxu0
    %v1478 = vadd.f32 0.0, %v1477
    %v1479 = vpop.f32.mrb[0].mxu0
    %v1480 = vpop.f32.mrb[0].mxu0
    %v1481 = vadd.f32 0.0, %v1480
    %v1482 = vpop.f32.mrb[0].mxu0
    %1483 = vmatprep.mubr.bf16.mxu0 %v572
    %1484 = vmatmul.mubr.bf16.gmra.mrb[0].mxu0 %v571
    %v1485 = vpop.f32.mrb[0].mxu0
    %v1486 = vadd.f32 0.0, %v1485
    %v1487 = vpop.f32.mrb[0].mxu0
    %v1488 = vpop.f32.mrb[0].mxu0
    %v1489 = vadd.f32 0.0, %v1488
    %v1490 = vpop.f32.mrb[0].mxu0
    %1491 = vmatprep.mubr.bf16.mxu0 %v588
    %1492 = vmatmul.mubr.bf16.gmra.mrb[0].mxu0 %v587
    %v1493 = vpop.f32.mrb[0].mxu0
    %v1494 = vadd.f32 0.0, %v1493
    %v1495 = vpop.f32.mrb[0].mxu0
    %v1496 = vpop.f32.mrb[0].mxu0
    %v1497 = vpop.f32.mrb[0].mxu0
    %1498 = vdwg.mxu0
    %1499 = vmatprep.subr.bf16.mxu0 0
    %1500 = vmatpush1.bf16.msra.mxu0 %v1195
    %1501 = vmatprep.subr.bf16.mxu0 0
    %1502 = vmatpush1.bf16.msra.mxu0 %v1196
    %1503 = vmatprep.subr.bf16.mxu0 0
    %1504 = vmatpush1.bf16.msra.mxu0 %v1197
    %1505 = vmatprep.subr.bf16.mxu0 0
    %1506 = vmatpush1.bf16.msra.mxu0 %v1198
    %1507 = vmatprep.subr.bf16.mxu0 0
    %1508 = vmatpush1.bf16.msra.mxu0 %v1199
    %1509 = vmatprep.subr.bf16.mxu0 0
    %1510 = vmatpush1.bf16.msra.mxu0 %v1200
    %1511 = vmatprep.subr.bf16.mxu0 0
    %1512 = vmatpush1.bf16.msra.mxu0 %v1201
    %1513 = vmatprep.subr.bf16.mxu0 0
    %1514 = vmatpush1.bf16.msra.mxu0 %v1202
    %1515 = vmatprep.subr.bf16.mxu0 0
    %1516 = vmatpush1.bf16.msra.mxu0 %v1203
    %1517 = vmatprep.subr.bf16.mxu0 0
    %1518 = vmatpush1.bf16.msra.mxu0 %v1204
    %1519 = vmatprep.subr.bf16.mxu0 0
    %1520 = vmatpush1.bf16.msra.mxu0 %v1205
    %1521 = vmatprep.subr.bf16.mxu0 0
    %1522 = vmatpush1.bf16.msra.mxu0 %v1206
    %1523 = vmatprep.subr.bf16.mxu0 0
    %1524 = vmatpush1.bf16.msra.mxu0 %v1207
    %1525 = vmatprep.subr.bf16.mxu0 0
    %1526 = vmatpush1.bf16.msra.mxu0 %v1208
    %1527 = vmatprep.subr.bf16.mxu0 0
    %1528 = vmatpush1.bf16.msra.mxu0 %v1209
    %1529 = vmatprep.subr.bf16.mxu0 0
    %1530 = vmatpush1.bf16.msra.mxu0 %v1210
    %1531 = vmatprep.mubr.bf16.mxu0 %v542
    %1532 = vmatmul.mubr.bf16.gmra.mrb[0].mxu0 %v541
    %v1533 = vpop.f32.mrb[0].mxu0
    %v1534 = vadd.f32 %v1470, %v1533
    %v1535 = vpop.f32.mrb[0].mxu0
    %v1536 = vpop.f32.mrb[0].mxu0
    %v1537 = vadd.f32 %v1473, %v1536
    %v1538 = vpop.f32.mrb[0].mxu0
    %1539 = vmatprep.mubr.bf16.mxu0 %v558
    %1540 = vmatmul.mubr.bf16.gmra.mrb[0].mxu0 %v557
    %v1541 = vpop.f32.mrb[0].mxu0
    %v1542 = vadd.f32 %v1478, %v1541
    %v1543 = vpop.f32.mrb[0].mxu0
    %v1544 = vpop.f32.mrb[0].mxu0
    %v1545 = vadd.f32 %v1481, %v1544
    %v1546 = vpop.f32.mrb[0].mxu0
    %1547 = vmatprep.mubr.bf16.mxu0 %v574
    %1548 = vmatmul.mubr.bf16.gmra.mrb[0].mxu0 %v573
    %v1549 = vpop.f32.mrb[0].mxu0
    %v1550 = vadd.f32 %v1486, %v1549
    %v1551 = vpop.f32.mrb[0].mxu0
    %v1552 = vpop.f32.mrb[0].mxu0
    %v1553 = vadd.f32 %v1489, %v1552
    %v1554 = vpop.f32.mrb[0].mxu0
    %1555 = vmatprep.mubr.bf16.mxu0 %v590
    %1556 = vmatmul.mubr.bf16.gmra.mrb[0].mxu0 %v589
    %v1557 = vpop.f32.mrb[0].mxu0
    %v1558 = vadd.f32 %v1494, %v1557
    %v1559 = vpop.f32.mrb[0].mxu0
    %v1560 = vpop.f32.mrb[0].mxu0
    %v1561 = vpop.f32.mrb[0].mxu0
    %1562 = vdwg.mxu0
    %1563 = vmatprep.subr.bf16.mxu0 0
    %1564 = vmatpush1.bf16.msra.mxu0 %v1211
    %1565 = vmatprep.subr.bf16.mxu0 0
    %1566 = vmatpush1.bf16.msra.mxu0 %v1212
    %1567 = vmatprep.subr.bf16.mxu0 0
    %1568 = vmatpush1.bf16.msra.mxu0 %v1213
    %1569 = vmatprep.subr.bf16.mxu0 0
    %1570 = vmatpush1.bf16.msra.mxu0 %v1214
    %1571 = vmatprep.subr.bf16.mxu0 0
    %1572 = vmatpush1.bf16.msra.mxu0 %v1215
    %1573 = vmatprep.subr.bf16.mxu0 0
    %1574 = vmatpush1.bf16.msra.mxu0 %v1216
    %1575 = vmatprep.subr.bf16.mxu0 0
    %1576 = vmatpush1.bf16.msra.mxu0 %v1217
    %1577 = vmatprep.subr.bf16.mxu0 0
    %1578 = vmatpush1.bf16.msra.mxu0 %v1218
    %1579 = vmatprep.subr.bf16.mxu0 0
    %1580 = vmatpush1.bf16.msra.mxu0 %v1219
    %1581 = vmatprep.subr.bf16.mxu0 0
    %1582 = vmatpush1.bf16.msra.mxu0 %v1220
    %1583 = vmatprep.subr.bf16.mxu0 0
    %1584 = vmatpush1.bf16.msra.mxu0 %v1221
    %1585 = vmatprep.subr.bf16.mxu0 0
    %1586 = vmatpush1.bf16.msra.mxu0 %v1222
    %1587 = vmatprep.subr.bf16.mxu0 0
    %1588 = vmatpush1.bf16.msra.mxu0 %v1223
    %1589 = vmatprep.subr.bf16.mxu0 0
    %1590 = vmatpush1.bf16.msra.mxu0 %v1224
    %1591 = vmatprep.subr.bf16.mxu0 0
    %1592 = vmatpush1.bf16.msra.mxu0 %v1225
    %1593 = vmatprep.subr.bf16.mxu0 0
    %1594 = vmatpush1.bf16.msra.mxu0 %v1226
    %1595 = vmatprep.mubr.bf16.mxu0 %v544
    %1596 = vmatmul.mubr.bf16.gmra.mrb[0].mxu0 %v543
    %v1597 = vpop.f32.mrb[0].mxu0
    %v1598 = vadd.f32 %v1534, %v1597
    %v1599 = vpop.f32.mrb[0].mxu0
    %v1600 = vpop.f32.mrb[0].mxu0
    %v1601 = vadd.f32 %v1537, %v1600
    %v1602 = vpop.f32.mrb[0].mxu0
    %1603 = vmatprep.mubr.bf16.mxu0 %v560
    %1604 = vmatmul.mubr.bf16.gmra.mrb[0].mxu0 %v559
    %v1605 = vpop.f32.mrb[0].mxu0
    %v1606 = vadd.f32 %v1542, %v1605
    %v1607 = vpop.f32.mrb[0].mxu0
    %v1608 = vpop.f32.mrb[0].mxu0
    %v1609 = vadd.f32 %v1545, %v1608
    %v1610 = vpop.f32.mrb[0].mxu0
    %1611 = vmatprep.mubr.bf16.mxu0 %v576
    %1612 = vmatmul.mubr.bf16.gmra.mrb[0].mxu0 %v575
    %v1613 = vpop.f32.mrb[0].mxu0
    %v1614 = vadd.f32 %v1550, %v1613
    %v1615 = vpop.f32.mrb[0].mxu0
    %v1616 = vpop.f32.mrb[0].mxu0
    %v1617 = vadd.f32 %v1553, %v1616
    %v1618 = vpop.f32.mrb[0].mxu0
    %1619 = vmatprep.mubr.bf16.mxu0 %v592
    %1620 = vmatmul.mubr.bf16.gmra.mrb[0].mxu0 %v591
    %v1621 = vpop.f32.mrb[0].mxu0
    %v1622 = vadd.f32 %v1558, %v1621
    %v1623 = vpop.f32.mrb[0].mxu0
    %v1624 = vpop.f32.mrb[0].mxu0
    %v1625 = vpop.f32.mrb[0].mxu0
    %1626 = vdwg.mxu0
    %1627 = vmatprep.subr.bf16.mxu0 0
    %1628 = vmatpush1.bf16.msra.mxu0 %v1227
    %1629 = vmatprep.subr.bf16.mxu0 0
    %1630 = vmatpush1.bf16.msra.mxu0 %v1228
    %1631 = vmatprep.subr.bf16.mxu0 0
    %1632 = vmatpush1.bf16.msra.mxu0 %v1229
    %1633 = vmatprep.subr.bf16.mxu0 0
    %1634 = vmatpush1.bf16.msra.mxu0 %v1230
    %1635 = vmatprep.subr.bf16.mxu0 0
    %1636 = vmatpush1.bf16.msra.mxu0 %v1231
    %1637 = vmatprep.subr.bf16.mxu0 0
    %1638 = vmatpush1.bf16.msra.mxu0 %v1232
    %1639 = vmatprep.subr.bf16.mxu0 0
    %1640 = vmatpush1.bf16.msra.mxu0 %v1233
    %1641 = vmatprep.subr.bf16.mxu0 0
    %1642 = vmatpush1.bf16.msra.mxu0 %v1234
    %1643 = vmatprep.subr.bf16.mxu0 0
    %1644 = vmatpush1.bf16.msra.mxu0 %v1235
    %1645 = vmatprep.subr.bf16.mxu0 0
    %1646 = vmatpush1.bf16.msra.mxu0 %v1236
    %1647 = vmatprep.subr.bf16.mxu0 0
    %1648 = vmatpush1.bf16.msra.mxu0 %v1237
    %1649 = vmatprep.subr.bf16.mxu0 0
    %1650 = vmatpush1.bf16.msra.mxu0 %v1238
    %1651 = vmatprep.subr.bf16.mxu0 0
    %1652 = vmatpush1.bf16.msra.mxu0 %v1239
    %1653 = vmatprep.subr.bf16.mxu0 0
    %1654 = vmatpush1.bf16.msra.mxu0 %v1240
    %1655 = vmatprep.subr.bf16.mxu0 0
    %1656 = vmatpush1.bf16.msra.mxu0 %v1241
    %1657 = vmatprep.subr.bf16.mxu0 0
    %1658 = vmatpush1.bf16.msra.mxu0 %v1242
    %1659 = vmatprep.mubr.bf16.mxu0 %v546
    %1660 = vmatmul.mubr.bf16.gmra.mrb[0].mxu0 %v545
    %v1661 = vpop.f32.mrb[0].mxu0
    %v1662 = vadd.f32 %v1598, %v1661
    %v1663 = vpop.f32.mrb[0].mxu0
    %v1664 = vpop.f32.mrb[0].mxu0
    %v1665 = vadd.f32 %v1601, %v1664
    %v1666 = vpop.f32.mrb[0].mxu0
    %1667 = vmatprep.mubr.bf16.mxu0 %v562
    %1668 = vmatmul.mubr.bf16.gmra.mrb[0].mxu0 %v561
    %v1669 = vpop.f32.mrb[0].mxu0
    %v1670 = vadd.f32 %v1606, %v1669
    %v1671 = vpop.f32.mrb[0].mxu0
    %v1672 = vpop.f32.mrb[0].mxu0
    %v1673 = vadd.f32 %v1609, %v1672
    %v1674 = vpop.f32.mrb[0].mxu0
    %1675 = vmatprep.mubr.bf16.mxu0 %v578
    %1676 = vmatmul.mubr.bf16.gmra.mrb[0].mxu0 %v577
    %v1677 = vpop.f32.mrb[0].mxu0
    %v1678 = vadd.f32 %v1614, %v1677
    %v1679 = vpop.f32.mrb[0].mxu0
    %v1680 = vpop.f32.mrb[0].mxu0
    %v1681 = vadd.f32 %v1617, %v1680
    %v1682 = vpop.f32.mrb[0].mxu0
    %1683 = vmatprep.mubr.bf16.mxu0 %v594
    %1684 = vmatmul.mubr.bf16.gmra.mrb[0].mxu0 %v593
    %v1685 = vpop.f32.mrb[0].mxu0
    %v1686 = vadd.f32 %v1622, %v1685
    %v1687 = vpop.f32.mrb[0].mxu0
    %v1688 = vpop.f32.mrb[0].mxu0
    %v1689 = vpop.f32.mrb[0].mxu0
    %1690 = vdwg.mxu0
    %1691 = vmatprep.subr.bf16.mxu0 0
    %1692 = vmatpush1.bf16.msra.mxu0 %v1243
    %1693 = vmatprep.subr.bf16.mxu0 0
    %1694 = vmatpush1.bf16.msra.mxu0 %v1244
    %1695 = vmatprep.subr.bf16.mxu0 0
    %1696 = vmatpush1.bf16.msra.mxu0 %v1245
    %1697 = vmatprep.subr.bf16.mxu0 0
    %1698 = vmatpush1.bf16.msra.mxu0 %v1246
    %1699 = vmatprep.subr.bf16.mxu0 0
    %1700 = vmatpush1.bf16.msra.mxu0 %v1247
    %1701 = vmatprep.subr.bf16.mxu0 0
    %1702 = vmatpush1.bf16.msra.mxu0 %v1248
    %1703 = vmatprep.subr.bf16.mxu0 0
    %1704 = vmatpush1.bf16.msra.mxu0 %v1249
    %1705 = vmatprep.subr.bf16.mxu0 0
    %1706 = vmatpush1.bf16.msra.mxu0 %v1250
    %1707 = vmatprep.subr.bf16.mxu0 0
    %1708 = vmatpush1.bf16.msra.mxu0 %v1251
    %1709 = vmatprep.subr.bf16.mxu0 0
    %1710 = vmatpush1.bf16.msra.mxu0 %v1252
    %1711 = vmatprep.subr.bf16.mxu0 0
    %1712 = vmatpush1.bf16.msra.mxu0 %v1253
    %1713 = vmatprep.subr.bf16.mxu0 0
    %1714 = vmatpush1.bf16.msra.mxu0 %v1254
    %1715 = vmatprep.subr.bf16.mxu0 0
    %1716 = vmatpush1.bf16.msra.mxu0 %v1255
    %1717 = vmatprep.subr.bf16.mxu0 0
    %1718 = vmatpush1.bf16.msra.mxu0 %v1256
    %1719 = vmatprep.subr.bf16.mxu0 0
    %1720 = vmatpush1.bf16.msra.mxu0 %v1257
    %1721 = vmatprep.subr.bf16.mxu0 0
    %1722 = vmatpush1.bf16.msra.mxu0 %v1258
    %1723 = vmatprep.mubr.bf16.mxu0 %v548
    %1724 = vmatmul.mubr.bf16.gmra.mrb[0].mxu0 %v547
    %v1725 = vpop.f32.mrb[0].mxu0
    %v1726 = vadd.f32 %v1662, %v1725
    %v1727 = vpop.f32.mrb[0].mxu0
    %v1728 = vpop.f32.mrb[0].mxu0
    %v1729 = vadd.f32 %v1665, %v1728
    %v1730 = vpop.f32.mrb[0].mxu0
    %1731 = vmatprep.mubr.bf16.mxu0 %v564
    %1732 = vmatmul.mubr.bf16.gmra.mrb[0].mxu0 %v563
    %v1733 = vpop.f32.mrb[0].mxu0
    %v1734 = vadd.f32 %v1670, %v1733
    %v1735 = vpop.f32.mrb[0].mxu0
    %v1736 = vpop.f32.mrb[0].mxu0
    %v1737 = vadd.f32 %v1673, %v1736
    %v1738 = vpop.f32.mrb[0].mxu0
    %1739 = vmatprep.mubr.bf16.mxu0 %v580
    %1740 = vmatmul.mubr.bf16.gmra.mrb[0].mxu0 %v579
    %v1741 = vpop.f32.mrb[0].mxu0
    %v1742 = vadd.f32 %v1678, %v1741
    %v1743 = vpop.f32.mrb[0].mxu0
    %v1744 = vpop.f32.mrb[0].mxu0
    %v1745 = vadd.f32 %v1681, %v1744
    %v1746 = vpop.f32.mrb[0].mxu0
    %1747 = vmatprep.mubr.bf16.mxu0 %v596
    %1748 = vmatmul.mubr.bf16.gmra.mrb[0].mxu0 %v595
    %v1749 = vpop.f32.mrb[0].mxu0
    %v1750 = vadd.f32 %v1686, %v1749
    %v1751 = vpop.f32.mrb[0].mxu0
    %v1752 = vpop.f32.mrb[0].mxu0
    %v1753 = vpop.f32.mrb[0].mxu0
    %1754 = vdwg.mxu0
    %1755 = vmatprep.subr.bf16.mxu0 0
    %1756 = vmatpush1.bf16.msra.mxu0 %v1259
    %1757 = vmatprep.subr.bf16.mxu0 0
    %1758 = vmatpush1.bf16.msra.mxu0 %v1260
    %1759 = vmatprep.subr.bf16.mxu0 0
    %1760 = vmatpush1.bf16.msra.mxu0 %v1261
    %1761 = vmatprep.subr.bf16.mxu0 0
    %1762 = vmatpush1.bf16.msra.mxu0 %v1262
    %1763 = vmatprep.subr.bf16.mxu0 0
    %1764 = vmatpush1.bf16.msra.mxu0 %v1263
    %1765 = vmatprep.subr.bf16.mxu0 0
    %1766 = vmatpush1.bf16.msra.mxu0 %v1264
    %1767 = vmatprep.subr.bf16.mxu0 0
    %1768 = vmatpush1.bf16.msra.mxu0 %v1265
    %1769 = vmatprep.subr.bf16.mxu0 0
    %1770 = vmatpush1.bf16.msra.mxu0 %v1266
    %1771 = vmatprep.subr.bf16.mxu0 0
    %1772 = vmatpush1.bf16.msra.mxu0 %v1267
    %1773 = vmatprep.subr.bf16.mxu0 0
    %1774 = vmatpush1.bf16.msra.mxu0 %v1268
    %1775 = vmatprep.subr.bf16.mxu0 0
    %1776 = vmatpush1.bf16.msra.mxu0 %v1269
    %1777 = vmatprep.subr.bf16.mxu0 0
    %1778 = vmatpush1.bf16.msra.mxu0 %v1270
    %1779 = vmatprep.subr.bf16.mxu0 0
    %1780 = vmatpush1.bf16.msra.mxu0 %v1271
    %1781 = vmatprep.subr.bf16.mxu0 0
    %1782 = vmatpush1.bf16.msra.mxu0 %v1272
    %1783 = vmatprep.subr.bf16.mxu0 0
    %1784 = vmatpush1.bf16.msra.mxu0 %v1273
    %1785 = vmatprep.subr.bf16.mxu0 0
    %1786 = vmatpush1.bf16.msra.mxu0 %v1274
    %1787 = vmatprep.mubr.bf16.mxu0 %v550
    %1788 = vmatmul.mubr.bf16.gmra.mrb[0].mxu0 %v549
    %v1789 = vpop.f32.mrb[0].mxu0
    %v1790 = vadd.f32 %v1726, %v1789
    %v1791 = vpop.f32.mrb[0].mxu0
    %v1792 = vpop.f32.mrb[0].mxu0
    %v1793 = vadd.f32 %v1729, %v1792
    %v1794 = vpop.f32.mrb[0].mxu0
    %1795 = vmatprep.mubr.bf16.mxu0 %v566
    %1796 = vmatmul.mubr.bf16.gmra.mrb[0].mxu0 %v565
    %v1797 = vpop.f32.mrb[0].mxu0
    %v1798 = vadd.f32 %v1734, %v1797
    %v1799 = vpop.f32.mrb[0].mxu0
    %v1800 = vpop.f32.mrb[0].mxu0
    %v1801 = vadd.f32 %v1737, %v1800
    %v1802 = vpop.f32.mrb[0].mxu0
    %1803 = vmatprep.mubr.bf16.mxu0 %v582
    %1804 = vmatmul.mubr.bf16.gmra.mrb[0].mxu0 %v581
    %v1805 = vpop.f32.mrb[0].mxu0
    %v1806 = vadd.f32 %v1742, %v1805
    %v1807 = vpop.f32.mrb[0].mxu0
    %v1808 = vpop.f32.mrb[0].mxu0
    %v1809 = vadd.f32 %v1745, %v1808
    %v1810 = vpop.f32.mrb[0].mxu0
    %1811 = vmatprep.mubr.bf16.mxu0 %v598
    %1812 = vmatmul.mubr.bf16.gmra.mrb[0].mxu0 %v597
    %v1813 = vpop.f32.mrb[0].mxu0
    %v1814 = vadd.f32 %v1750, %v1813
    %v1815 = vpop.f32.mrb[0].mxu0
    %v1816 = vpop.f32.mrb[0].mxu0
    %v1817 = vpop.f32.mrb[0].mxu0
    %1818 = vdwg.mxu0
    %1819 = vmatprep.subr.bf16.mxu0 0
    %1820 = vmatpush1.bf16.msra.mxu0 %v1275
    %1821 = vmatprep.subr.bf16.mxu0 0
    %1822 = vmatpush1.bf16.msra.mxu0 %v1276
    %1823 = vmatprep.subr.bf16.mxu0 0
    %1824 = vmatpush1.bf16.msra.mxu0 %v1277
    %1825 = vmatprep.subr.bf16.mxu0 0
    %1826 = vmatpush1.bf16.msra.mxu0 %v1278
    %1827 = vmatprep.subr.bf16.mxu0 0
    %1828 = vmatpush1.bf16.msra.mxu0 %v1279
    %1829 = vmatprep.subr.bf16.mxu0 0
    %1830 = vmatpush1.bf16.msra.mxu0 %v1280
    %1831 = vmatprep.subr.bf16.mxu0 0
    %1832 = vmatpush1.bf16.msra.mxu0 %v1281
    %1833 = vmatprep.subr.bf16.mxu0 0
    %1834 = vmatpush1.bf16.msra.mxu0 %v1282
    %1835 = vmatprep.subr.bf16.mxu0 0
    %1836 = vmatpush1.bf16.msra.mxu0 %v1283
    %1837 = vmatprep.subr.bf16.mxu0 0
    %1838 = vmatpush1.bf16.msra.mxu0 %v1284
    %1839 = vmatprep.subr.bf16.mxu0 0
    %1840 = vmatpush1.bf16.msra.mxu0 %v1285
    %1841 = vmatprep.subr.bf16.mxu0 0
    %1842 = vmatpush1.bf16.msra.mxu0 %v1286
    %1843 = vmatprep.subr.bf16.mxu0 0
    %1844 = vmatpush1.bf16.msra.mxu0 %v1287
    %1845 = vmatprep.subr.bf16.mxu0 0
    %1846 = vmatpush1.bf16.msra.mxu0 %v1288
    %1847 = vmatprep.subr.bf16.mxu0 0
    %1848 = vmatpush1.bf16.msra.mxu0 %v1289
    %1849 = vmatprep.subr.bf16.mxu0 0
    %1850 = vmatpush1.bf16.msra.mxu0 %v1290
    %1851 = vmatprep.mubr.bf16.mxu0 %v552
    %1852 = vmatmul.mubr.bf16.gmra.mrb[0].mxu0 %v551
    %v1853 = vpop.f32.mrb[0].mxu0
    %v1854 = vadd.f32 %v1790, %v1853
    %v1855 = vpop.f32.mrb[0].mxu0
    %v1856 = vpop.f32.mrb[0].mxu0
    %v1857 = vadd.f32 %v1793, %v1856
    %v1858 = vpop.f32.mrb[0].mxu0
    %1859 = vmatprep.mubr.bf16.mxu0 %v568
    %1860 = vmatmul.mubr.bf16.gmra.mrb[0].mxu0 %v567
    %v1861 = vpop.f32.mrb[0].mxu0
    %v1862 = vadd.f32 %v1798, %v1861
    %v1863 = vpop.f32.mrb[0].mxu0
    %v1864 = vpop.f32.mrb[0].mxu0
    %v1865 = vadd.f32 %v1801, %v1864
    %v1866 = vpop.f32.mrb[0].mxu0
    %1867 = vmatprep.mubr.bf16.mxu0 %v584
    %1868 = vmatmul.mubr.bf16.gmra.mrb[0].mxu0 %v583
    %v1869 = vpop.f32.mrb[0].mxu0
    %v1870 = vadd.f32 %v1806, %v1869
    %v1871 = vpop.f32.mrb[0].mxu0
    %v1872 = vpop.f32.mrb[0].mxu0
    %v1873 = vadd.f32 %v1809, %v1872
    %v1874 = vpop.f32.mrb[0].mxu0
    %1875 = vmatprep.mubr.bf16.mxu0 %v600
    %1876 = vmatmul.mubr.bf16.gmra.mrb[0].mxu0 %v599
    %v1877 = vpop.f32.mrb[0].mxu0
    %v1878 = vadd.f32 %v1814, %v1877
    %v1879 = vpop.f32.mrb[0].mxu0
    %v1880 = vpop.f32.mrb[0].mxu0
    %v1881 = vpop.f32.mrb[0].mxu0
    %1882 = vdwg.mxu0
    %1883 = vmatprep.subr.bf16.mxu0 0
    %1884 = vmatpush1.bf16.msra.mxu0 %v1291
    %1885 = vmatprep.subr.bf16.mxu0 0
    %1886 = vmatpush1.bf16.msra.mxu0 %v1292
    %1887 = vmatprep.subr.bf16.mxu0 0
    %1888 = vmatpush1.bf16.msra.mxu0 %v1293
    %1889 = vmatprep.subr.bf16.mxu0 0
    %1890 = vmatpush1.bf16.msra.mxu0 %v1294
    %1891 = vmatprep.subr.bf16.mxu0 0
    %1892 = vmatpush1.bf16.msra.mxu0 %v1295
    %1893 = vmatprep.subr.bf16.mxu0 0
    %1894 = vmatpush1.bf16.msra.mxu0 %v1296
    %1895 = vmatprep.subr.bf16.mxu0 0
    %1896 = vmatpush1.bf16.msra.mxu0 %v1297
    %1897 = vmatprep.subr.bf16.mxu0 0
    %1898 = vmatpush1.bf16.msra.mxu0 %v1298
    %1899 = vmatprep.subr.bf16.mxu0 0
    %1900 = vmatpush1.bf16.msra.mxu0 %v1299
    %1901 = vmatprep.subr.bf16.mxu0 0
    %1902 = vmatpush1.bf16.msra.mxu0 %v1300
    %1903 = vmatprep.subr.bf16.mxu0 0
    %1904 = vmatpush1.bf16.msra.mxu0 %v1301
    %1905 = vmatprep.subr.bf16.mxu0 0
    %1906 = vmatpush1.bf16.msra.mxu0 %v1302
    %1907 = vmatprep.subr.bf16.mxu0 0
    %1908 = vmatpush1.bf16.msra.mxu0 %v1303
    %1909 = vmatprep.subr.bf16.mxu0 0
    %1910 = vmatpush1.bf16.msra.mxu0 %v1304
    %1911 = vmatprep.subr.bf16.mxu0 0
    %1912 = vmatpush1.bf16.msra.mxu0 %v1305
    %1913 = vmatprep.subr.bf16.mxu0 0
    %1914 = vmatpush1.bf16.msra.mxu0 %v1306
    %1915 = vmatprep.mubr.bf16.mxu0 %v554
    %1916 = vmatmul.mubr.bf16.gmra.mrb[0].mxu0 %v553
    %v1917 = vpop.f32.mrb[0].mxu0
    %v1918 = vadd.f32 %v1854, %v1917
    %v1919 = vpop.f32.mrb[0].mxu0
    %v1920 = vpop.f32.mrb[0].mxu0
    %v1921 = vadd.f32 %v1857, %v1920
    %v1922 = vpop.f32.mrb[0].mxu0
    %1923 = vmatprep.mubr.bf16.mxu0 %v570
    %1924 = vmatmul.mubr.bf16.gmra.mrb[0].mxu0 %v569
    %v1925 = vpop.f32.mrb[0].mxu0
    %v1926 = vadd.f32 %v1862, %v1925
    %v1927 = vpop.f32.mrb[0].mxu0
    %v1928 = vpop.f32.mrb[0].mxu0
    %v1929 = vadd.f32 %v1865, %v1928
    %v1930 = vpop.f32.mrb[0].mxu0
    %1931 = vmatprep.mubr.bf16.mxu0 %v586
    %1932 = vmatmul.mubr.bf16.gmra.mrb[0].mxu0 %v585
    %v1933 = vpop.f32.mrb[0].mxu0
    %v1934 = vadd.f32 %v1870, %v1933
    %v1935 = vpop.f32.mrb[0].mxu0
    %v1936 = vpop.f32.mrb[0].mxu0
    %v1937 = vadd.f32 %v1873, %v1936
    %v1938 = vpop.f32.mrb[0].mxu0
    %1939 = vmatprep.mubr.bf16.mxu0 %v602
    %1940 = vmatmul.mubr.bf16.gmra.mrb[0].mxu0 %v601
    %v1941 = vpop.f32.mrb[0].mxu0
    %v1942 = vadd.f32 %v1878, %v1941
    %v1943 = vpop.f32.mrb[0].mxu0
    %v1944 = vpop.f32.mrb[0].mxu0
    %v1945 = vpop.f32.mrb[0].mxu0
    %1946 = vdwg.mxu0
    %v1947 = vadd.f32 %v52, %v1918
    %v1948 = vadd.f32 %v53, %v1921
    %v1949 = vadd.f32 %v54, %v1926
    %v1950 = vadd.f32 %v55, %v1929
    %v1951 = vadd.f32 %v56, %v1934
    %v1952 = vadd.f32 %v57, %v1937
    %v1953 = vadd.f32 %v58, %v1942
    %1954 = vst [vmem:[#allocation2] sm:$0xff] %v1947
    %1955 = vst [vmem:[#allocation2 + $0x8] sm:$0xff] %v1948
    %1956 = vst [vmem:[#allocation2 + $0x10] sm:$0xff] %v1949
    %1957 = vst [vmem:[#allocation2 + $0x18] sm:$0xff] %v1950
    %1958 = vst [vmem:[#allocation2 + $0x20] sm:$0xff] %v1951
    %1959 = vst [vmem:[#allocation2 + $0x28] sm:$0xff] %v1952
    %1960 = vst [vmem:[#allocation2 + $0x30] sm:$0xff] %v1953
    // Predicated region
    $region22: #{nlayer_discriminator_forward.15} parent=1 // pred_check
      %p1961 = pneg %p41
    $region23: #{nlayer_discriminator_forward.15} parent=1 // pred_check_branch
      %1963 = sbr.rel (%p1961) target = $region25
    $region24: #{nlayer_discriminator_forward.15} parent=1 // pred_region
      %v1964 = vld [vmem:[#allocation2] sm:$0xff]
      %v1965 = vld [vmem:[#allocation2 + $0x8] sm:$0xff]
      %v1966 = vld [vmem:[#allocation2 + $0x10] sm:$0xff]
      %v1967 = vld [vmem:[#allocation2 + $0x18] sm:$0xff]
      %v1968 = vld [vmem:[#allocation2 + $0x20] sm:$0xff]
      %v1969 = vld [vmem:[#allocation2 + $0x28] sm:$0xff]
      %v1970 = vld [vmem:[#allocation2 + $0x30] sm:$0xff]
      %1971 = vst [vmem:[#allocation8] sm:$0xff] %v1964
      %1972 = vst [vmem:[#allocation8 + $0x8] sm:$0xff] %v1965
      %1973 = vst [vmem:[#allocation8 + $0x10] sm:$0xff] %v1966
      %1974 = vst [vmem:[#allocation8 + $0x18] sm:$0xff] %v1967
      %1975 = vst [vmem:[#allocation8 + $0x20] sm:$0xff] %v1968
      %1976 = vst [vmem:[#allocation8 + $0x28] sm:$0xff] %v1969
      %1977 = vst [vmem:[#allocation8 + $0x30] sm:$0xff] %v1970
    $region25: #{nlayer_discriminator_forward.15} parent=1 // pred_fallthru
      _
    // Predicated region
    $region26: #{nlayer_discriminator_forward.15} parent=1 // pred_check
      _
    $region27: #{nlayer_discriminator_forward.15} parent=1 // pred_check_branch
      %1979 = sbr.rel (0) target = $region29
    $region28: #{nlayer_discriminator_forward.15} parent=1 // pred_region
      %s1981 = ssub.s32 896, 896
      %1982 = vsyncadd [#allocation5], %s1981
      %s1983 = sshll.u32 [#allocation8], 4
      %s1984 = int_to_ptr.vmem [resolvable:$true] %s1983
      %1989 = dma.vmem_to_hbm [thread:$0]  %s1984, 896, %s2, [#allocation5], 128, 128, 8
    $region29: #{nlayer_discriminator_forward.15} parent=1 // pred_fallthru
      _
    // Predicated region
    $region30: #{nlayer_discriminator_forward.15} parent=1 // pred_check
      _
    $region31: #{nlayer_discriminator_forward.15} parent=1 // pred_check_branch
      %1991 = sbr.rel (0) target = $region33
    $region32: #{nlayer_discriminator_forward.15} parent=1 // pred_region
      %1992 = dma.done [#allocation5], 896
    $region33: #{nlayer_discriminator_forward.15} parent=1 // pred_fallthru
      _
    %1993 = vsyncpa [#allocation4], 1
    %1994 = vsyncpa [#allocation7], 1
    %1995 = vsyncpa [#allocation5], 1

</llo_original>
